<compile_context>
chip_gen: v7x
topology: tpu7x:2x2x1
jax: 0.10.0
libtpu: 0.0.40
codegen_flags: <defaults>
</compile_context>

<pallas_src>
import functools

import numpy as np

import jax
import jax.numpy as jnp
from jax.experimental import pallas as pl
from jax.experimental.pallas import tpu as pltpu

THRESHOLD = 1.0


def _round_up(n, m):
    return ((n + m - 1) // m) * m


def _pick_divisor(n, target):
    """Largest divisor of n that is <= target (>= 1)."""
    d = max(1, min(target, n))
    while n % d != 0:
        d -= 1
    return d


def _pad2(a, rows, cols):
    return jnp.pad(a, ((0, rows - a.shape[0]), (0, cols - a.shape[1])))


def _gsu_kernel(x_ref, wx_hbm, wh_hbm, h0_ref, c0_ref,
                y_ref, h_ref, c_ref,
                wx_vmem, wh_vmem, xp_scr, dma_sems, *, unroll):
    """One grid step == one chunk of `tc` timesteps of the GSU recurrence."""
    t_chunk = pl.program_id(1)

    @pl.when(t_chunk == 0)
    def _():
        # Weights are copied into single-buffered VMEM scratch once per batch
        # tile (amortized over all T//tc time chunks); this replaces the
        # double-buffered constant-index BlockSpec of v1 and halves the
        # resident weight footprint (critical for large H on v7x 64 MiB VMEM).
        cp_x = pltpu.make_async_copy(wx_hbm, wx_vmem, dma_sems.at[0])
        cp_h = pltpu.make_async_copy(wh_hbm, wh_vmem, dma_sems.at[1])
        cp_x.start()
        cp_h.start()
        cp_x.wait()
        cp_h.wait()
        # Initialize the VMEM-resident carry from the provided initial state.
        h_ref[...] = h0_ref[...]
        c_ref[...] = c0_ref[...]

    tc, bt, i_dim = x_ref.shape        # chunk timesteps, batch tile, input size
    hp = h_ref.shape[-1]               # padded hidden size (static)

    # Hoisted per-chunk input projection: a single (tc*bt, I) @ (I, 2*Hp) MXU
    # matmul replaces 2*tc tiny per-step matmuls and removes the HBM xproj
    # tensor of v1 entirely. Result kept in f32 in VMEM scratch.
    x2d = x_ref[...].reshape(tc * bt, i_dim).astype(jnp.bfloat16)
    xp_scr[...] = jnp.dot(x2d, wx_vmem[...], preferred_element_type=jnp.float32)

    w_h = wh_vmem[...]                 # (Hp, 2*Hp) bf16, fused recurrent weights

    def step(t, carry):
        h_prev, c_prev = carry                        # (bt, Hp) bf16 / f32
        row = pl.multiple_of(t * bt, bt)
        # Single fused recurrent matmul on the MXU (bf16 in, f32 accumulate).
        rec = jnp.dot(h_prev, w_h, preferred_element_type=jnp.float32)
        pre = xp_scr[pl.ds(row, bt), :] + rec         # (bt, 2*Hp) f32
        # sigmoid(x) == 0.5*tanh(0.5*x)+0.5: a single EUP op, shorter VPU chain.
        f_gate = 0.5 * jnp.tanh(0.5 * pre[:, :hp])  + 0.5
        i_cur = pre[:, hp:]                           # input current
        # Leaky integration  f*c + (1-f)*i  rewritten with one fewer multiply.
        c_new = i_cur + f_gate * (c_prev - i_cur)
        spike = (c_new > THRESHOLD).astype(jnp.float32)
        y_ref[t] = spike.astype(y_ref.dtype)          # 0/1 is exact in any dtype
        return spike.astype(h_prev.dtype), c_new

    h_last, c_last = jax.lax.fori_loop(
        0, tc, step, (h_ref[...], c_ref[...]), unroll=unroll)
    h_ref[...] = h_last
    c_ref[...] = c_last


@functools.partial(jax.jit,
                   static_argnames=("time_chunk", "batch_tile", "out_dtype"))
def gsu_layer(x, params, state, *, time_chunk=16, batch_tile=64,
              out_dtype=jnp.float32):
    """Pallas GSULayer forward.

    Args:
      x:      f32[T, B, I]   (time-major, like torch input.unbind(0))
      params: dict with pre-transposed weights:
              w_f_x f32[I, H], w_f_h f32[H, H], w_i_x f32[I, H], w_i_h f32[H, H]
      state:  (h0 f32[B, H], c0 f32[B, H])
    Returns:
      (y out_dtype[T, B, H], (h f32[B, H], c f32[B, H]))
    """
    T, B, I = x.shape
    H = params["w_f_x"].shape[1]
    h0, c0 = state

    Hp = _round_up(H, 128)                 # lane-dense hidden
    Bp = _round_up(B, 16)                  # packed (16,128) bf16 vregs
    tc = _pick_divisor(T, time_chunk)      # timesteps per grid step

    # Batch tile: multiple of 16, dividing Bp, as large as requested.
    bt = min(_round_up(batch_tile, 16), Bp)
    while Bp % bt != 0:
        bt -= 16
    # Prefer >= 2 batch tiles so the leading "parallel" axis can occupy both
    # v7x TensorCores (no effect on single-TC v5e/v6e).
    if Bp // bt < 2 and Bp >= 32 and (Bp // 2) % 16 == 0:
        bt = Bp // 2

    # Fused, zero-padded weights (padding is exact: padded rows/cols give 0).
    w_x_cat = jnp.concatenate(
        [_pad2(params["w_f_x"], I, Hp), _pad2(params["w_i_x"], I, Hp)],
        axis=1).astype(jnp.bfloat16)                      # (I, 2*Hp)
    w_h_cat = jnp.concatenate(
        [_pad2(params["w_f_h"], Hp, Hp), _pad2(params["w_i_h"], Hp, Hp)],
        axis=1).astype(jnp.bfloat16)                      # (Hp, 2*Hp)

    # Pad only the (small) raw input batch dim — the projection happens inside
    # the kernel, so no full-sequence xproj tensor is materialized in HBM.
    x_pad = jnp.pad(x, ((0, 0), (0, Bp - B), (0, 0))) if Bp != B else x
    h0p = jnp.pad(h0, ((0, Bp - B), (0, Hp - H))).astype(jnp.bfloat16)
    c0p = jnp.pad(c0, ((0, Bp - B), (0, Hp - H))).astype(jnp.float32)

    grid = (Bp // bt, T // tc)

    # Fully unroll the recurrent step unless the live set risks vreg spills
    # (pre f32[bt,2Hp] + c f32 + spike f32 + h bf16), in which case unroll=2.
    step_live_bytes = bt * Hp * (8 + 4 + 4 + 2)
    unroll = True if step_live_bytes <= (256 << 10) else 2

    # VMEM budget derived from actual block sizes (+50% and 8 MiB headroom),
    # instead of a hard-coded constant (keeps headroom on v7x's 64 MiB part
    # while not artificially capping v5e/v6e).
    out_isz = np.dtype(out_dtype).itemsize
    vmem_need = (
        2 * tc * bt * I * 4                 # x chunk blocks (double buffered)
        + 2 * tc * bt * Hp * out_isz        # y chunk blocks
        + 2 * bt * Hp * (2 + 4)             # h0/c0 input blocks
        + 2 * bt * Hp * (2 + 4)             # h/c output (carry) blocks
        + (I + Hp) * 2 * Hp * 2             # resident fused weights (1 copy)
        + tc * bt * 2 * Hp * 4              # per-chunk projected-input scratch
    )
    vmem_limit = int(min(max(3 * vmem_need // 2 + (8 << 20), 24 << 20),
                         100 << 20))

    grid_spec = pltpu.PrefetchScalarGridSpec(
        num_scalar_prefetch=0,
        grid=grid,
        in_specs=[
            # raw input chunk (projection is done inside the kernel)
            pl.BlockSpec((tc, bt, I), lambda b, t: (t, b, 0)),
            # fused weights stay in HBM; copied once per batch tile to a
            # single-buffered VMEM scratch (see _gsu_kernel).
            pl.BlockSpec(memory_space=pl.ANY),                  # w_x_cat
            pl.BlockSpec(memory_space=pl.ANY),                  # w_h_cat
            pl.BlockSpec((bt, Hp), lambda b, t: (b, 0)),        # h0
            pl.BlockSpec((bt, Hp), lambda b, t: (b, 0)),        # c0
        ],
        out_specs=[
            pl.BlockSpec((tc, bt, Hp), lambda b, t: (t, b, 0)),  # y chunk
            pl.BlockSpec((bt, Hp), lambda b, t: (b, 0)),  # h carry (resident)
            pl.BlockSpec((bt, Hp), lambda b, t: (b, 0)),  # c carry (resident)
        ],
        scratch_shapes=[
            pltpu.VMEM((I, 2 * Hp), jnp.bfloat16),        # resident w_x
            pltpu.VMEM((Hp, 2 * Hp), jnp.bfloat16),       # resident w_h
            pltpu.VMEM((tc * bt, 2 * Hp), jnp.float32),   # projected inputs
            pltpu.SemaphoreType.DMA((2,)),
        ],
    )

    y, h, c = pl.pallas_call(
        functools.partial(_gsu_kernel, unroll=unroll),
        grid_spec=grid_spec,
        out_shape=(
            jax.ShapeDtypeStruct((T, Bp, Hp), out_dtype),   # spikes
            jax.ShapeDtypeStruct((Bp, Hp), jnp.bfloat16),   # final spikes
            jax.ShapeDtypeStruct((Bp, Hp), jnp.float32),    # final membrane
        ),
        compiler_params=pltpu.CompilerParams(
            # batch tiles are independent (v7x 2 TensorCores); time is recurrent.
            dimension_semantics=("parallel", "arbitrary"),
            vmem_limit_bytes=vmem_limit,
        ),
    )(x_pad, w_x_cat, w_h_cat, h0p, c0p)

    if (Bp, Hp) != (B, H):
        y = y[:, :B, :H]
        h = h[:B, :H]
        c = c[:B, :H]
    return y, (h.astype(jnp.float32), c)


def gsu_layer_ref(x, params, state):
    """Pure-JAX reference (per-timestep cell loop, same bf16-matmul numerics)."""
    H = params["w_f_x"].shape[1]
    w_x_cat = jnp.concatenate(
        [params["w_f_x"], params["w_i_x"]], axis=1).astype(jnp.bfloat16)
    w_h_cat = jnp.concatenate(
        [params["w_f_h"], params["w_i_h"]], axis=1).astype(jnp.bfloat16)

    def step(carry, x_t):
        h_prev, c_prev = carry
        xp = jnp.dot(x_t.astype(jnp.bfloat16), w_x_cat,
                     preferred_element_type=jnp.float32)
        rec = jnp.dot(h_prev.astype(jnp.bfloat16), w_h_cat,
                      preferred_element_type=jnp.float32)
        pre = xp + rec
        f = jax.nn.sigmoid(pre[:, :H])
        i_cur = pre[:, H:]
        c = f * c_prev + (1.0 - f) * i_cur
        h = (c > THRESHOLD).astype(jnp.float32)
        return (h, c), h

    (h, c), ys = jax.lax.scan(step, state, x)
    return ys, (h, c)


def init_params(key, input_size, hidden_size):
    k1, k2, k3, k4 = jax.random.split(key, 4)
    s_i = 1.0 / jnp.sqrt(jnp.float32(input_size))
    s_h = 1.0 / jnp.sqrt(jnp.float32(hidden_size))
    # Stored pre-transposed relative to torch's (H, in) Parameter layout,
    # so the kernel computes x @ W directly (== torch.mm(x, weight.t())).
    return {
        "w_f_x": jax.random.normal(k1, (input_size, hidden_size), jnp.float32) * s_i,
        "w_f_h": jax.random.normal(k2, (hidden_size, hidden_size), jnp.float32) * s_h,
        "w_i_x": jax.random.normal(k3, (input_size, hidden_size), jnp.float32) * s_i,
        "w_i_h": jax.random.normal(k4, (hidden_size, hidden_size), jnp.float32) * s_h,
    }


if __name__ == "__main__":
    T, B, I, H = 32, 20, 32, 32  # seq, batch, input, hidden (B pads 20 -> 32)

    key = jax.random.PRNGKey(0)
    kx, kc, kp = jax.random.split(key, 3)
    x = jax.random.normal(kx, (T, B, I), jnp.float32)
    h0 = jnp.zeros((B, H), jnp.float32)
    c0 = jax.random.normal(kc, (B, H), jnp.float32) * 0.1
    params = init_params(kp, I, H)

    y, (h, c) = gsu_layer(x, params, (h0, c0))
    jax.block_until_ready((y, h, c))
    assert y.shape == (T, B, H) and h.shape == (B, H) and c.shape == (B, H)

    y_ref, (h_ref, c_ref) = gsu_layer_ref(x, params, (h0, c0))
    y_np, h_np, c_np = np.asarray(y), np.asarray(h), np.asarray(c)
    y_r, h_r, c_r = np.asarray(y_ref), np.asarray(h_ref), np.asarray(c_ref)

    # Spikes are hard-thresholded: an element whose membrane lands within float
    # rounding of THRESHOLD may legitimately flip between implementations and
    # then diverge, so instead of a brittle global allclose we require (a) most
    # batch rows to match exactly and (b) tight membrane agreement on those rows.
    row_match = np.all(y_np == y_r, axis=(0, 2))            # (B,)
    assert row_match.mean() >= 0.8, f"too many diverging rows: {row_match}"
    assert np.array_equal(h_np[row_match], h_r[row_match]), "final spike mismatch"
    assert np.allclose(c_np[row_match], c_r[row_match], atol=2e-3), \
        "membrane state mismatch"

    print("KERNEL_OK")
</pallas_src>

<mosaic_0001>
module attributes {stable_mosaic.version = 11 : i64} {
  func.func @_gsu_kernel(%arg0: i32, %arg1: i32, %arg2: memref<16x16x32xf32, #tpu.memory_space<vmem>>, %arg3: memref<32x256xbf16, #tpu.memory_space<any>>, %arg4: memref<128x256xbf16, #tpu.memory_space<any>>, %arg5: memref<16x128xbf16, #tpu.memory_space<vmem>>, %arg6: memref<16x128xf32, #tpu.memory_space<vmem>>, %arg7: memref<16x16x128xf32, #tpu.memory_space<vmem>>, %arg8: memref<16x128xbf16, #tpu.memory_space<vmem>>, %arg9: memref<16x128xf32, #tpu.memory_space<vmem>>, %arg10: memref<32x256xbf16, #tpu.memory_space<vmem>>, %arg11: memref<128x256xbf16, #tpu.memory_space<vmem>>, %arg12: memref<256x256xf32, #tpu.memory_space<vmem>>, %arg13: memref<2x!tpu.dma_semaphore, #tpu.memory_space<semaphore_mem>>) attributes {dimension_semantics = [#tpu.dimension_semantics<parallel>, #tpu.dimension_semantics<arbitrary>], iteration_bounds = array<i64: 2, 2>, scalar_prefetch = 0 : i64, scratch_operands = 4 : i64, tpu.core_type = #tpu.core_type<tc>, window_params = [{transform_indices = @transform_0, window_bounds = array<i64: 16, 16, 32>}, {}, {}, {transform_indices = @transform_3, window_bounds = array<i64: 16, 128>}, {transform_indices = @transform_4, window_bounds = array<i64: 16, 128>}, {transform_indices = @transform_5, window_bounds = array<i64: 16, 16, 128>}, {transform_indices = @transform_6, window_bounds = array<i64: 16, 128>}, {transform_indices = @transform_7, window_bounds = array<i64: 16, 128>}]} {
    %c0_i32 = arith.constant 0 : i32
    %0 = arith.cmpi eq, %arg1, %c0_i32 : i32
    %1 = arith.extui %0 : i1 to i32
    %c0_i32_0 = arith.constant 0 : i32
    %2 = arith.cmpi ne, %1, %c0_i32_0 : i32
    scf.if %2 {
      %c0_i32_162 = arith.constant 0 : i32
      %446 = tpu.memref_slice %arg13[%c0_i32_162] : memref<2x!tpu.dma_semaphore, #tpu.memory_space<semaphore_mem>> -> memref<1x!tpu.dma_semaphore, #tpu.memory_space<semaphore_mem>>
      %447 = tpu.memref_squeeze %446 : memref<1x!tpu.dma_semaphore, #tpu.memory_space<semaphore_mem>> -> memref<!tpu.dma_semaphore, #tpu.memory_space<semaphore_mem>>
      tpu.enqueue_dma source(%arg3 : memref<32x256xbf16, #tpu.memory_space<any>>) target(%arg10 : memref<32x256xbf16, #tpu.memory_space<vmem>>) target_semaphore(%447 : memref<!tpu.dma_semaphore, #tpu.memory_space<semaphore_mem>>)
      %c1_i32_163 = arith.constant 1 : i32
      %448 = tpu.memref_slice %arg13[%c1_i32_163] : memref<2x!tpu.dma_semaphore, #tpu.memory_space<semaphore_mem>> -> memref<1x!tpu.dma_semaphore, #tpu.memory_space<semaphore_mem>>
      %449 = tpu.memref_squeeze %448 : memref<1x!tpu.dma_semaphore, #tpu.memory_space<semaphore_mem>> -> memref<!tpu.dma_semaphore, #tpu.memory_space<semaphore_mem>>
      tpu.enqueue_dma source(%arg4 : memref<128x256xbf16, #tpu.memory_space<any>>) target(%arg11 : memref<128x256xbf16, #tpu.memory_space<vmem>>) target_semaphore(%449 : memref<!tpu.dma_semaphore, #tpu.memory_space<semaphore_mem>>)
      %c0_i32_164 = arith.constant 0 : i32
      %450 = tpu.memref_slice %arg13[%c0_i32_164] : memref<2x!tpu.dma_semaphore, #tpu.memory_space<semaphore_mem>> -> memref<1x!tpu.dma_semaphore, #tpu.memory_space<semaphore_mem>>
      %451 = tpu.memref_squeeze %450 : memref<1x!tpu.dma_semaphore, #tpu.memory_space<semaphore_mem>> -> memref<!tpu.dma_semaphore, #tpu.memory_space<semaphore_mem>>
      tpu.wait_dma2 semaphore(%451 : memref<!tpu.dma_semaphore, #tpu.memory_space<semaphore_mem>>) src(%arg3 : memref<32x256xbf16, #tpu.memory_space<any>>) dst(%arg10 : memref<32x256xbf16, #tpu.memory_space<vmem>>)
      %c1_i32_165 = arith.constant 1 : i32
      %452 = tpu.memref_slice %arg13[%c1_i32_165] : memref<2x!tpu.dma_semaphore, #tpu.memory_space<semaphore_mem>> -> memref<1x!tpu.dma_semaphore, #tpu.memory_space<semaphore_mem>>
      %453 = tpu.memref_squeeze %452 : memref<1x!tpu.dma_semaphore, #tpu.memory_space<semaphore_mem>> -> memref<!tpu.dma_semaphore, #tpu.memory_space<semaphore_mem>>
      tpu.wait_dma2 semaphore(%453 : memref<!tpu.dma_semaphore, #tpu.memory_space<semaphore_mem>>) src(%arg4 : memref<128x256xbf16, #tpu.memory_space<any>>) dst(%arg11 : memref<128x256xbf16, #tpu.memory_space<vmem>>)
      %c0_166 = arith.constant 0 : index
      %c0_167 = arith.constant 0 : index
      %454 = vector.load %arg5[%c0_166, %c0_167] : memref<16x128xbf16, #tpu.memory_space<vmem>>, vector<16x128xbf16>
      %c0_168 = arith.constant 0 : index
      %c0_169 = arith.constant 0 : index
      %455 = vector.load %arg8[%c0_168, %c0_169] : memref<16x128xbf16, #tpu.memory_space<vmem>>, vector<16x128xbf16>
      tpu.vector_store %arg8[%c0_168, %c0_169], %454 {strides = array<i32>} : memref<16x128xbf16, #tpu.memory_space<vmem>>, vector<16x128xbf16>,
      %c0_170 = arith.constant 0 : index
      %c0_171 = arith.constant 0 : index
      %456 = vector.load %arg6[%c0_170, %c0_171] : memref<16x128xf32, #tpu.memory_space<vmem>>, vector<16x128xf32>
      %c0_172 = arith.constant 0 : index
      %c0_173 = arith.constant 0 : index
      %457 = vector.load %arg9[%c0_172, %c0_173] : memref<16x128xf32, #tpu.memory_space<vmem>>, vector<16x128xf32>
      tpu.vector_store %arg9[%c0_172, %c0_173], %456 {strides = array<i32>} : memref<16x128xf32, #tpu.memory_space<vmem>>, vector<16x128xf32>,
    } else {
    }
    %c0 = arith.constant 0 : index
    %c0_1 = arith.constant 0 : index
    %c0_2 = arith.constant 0 : index
    %3 = vector.load %arg2[%c0, %c0_1, %c0_2] : memref<16x16x32xf32, #tpu.memory_space<vmem>>, vector<16x16x32xf32>
    %4 = vector.shape_cast %3 : vector<16x16x32xf32> to vector<256x32xf32>
    %5 = arith.truncf %4 : vector<256x32xf32> to vector<256x32xbf16>
    %c0_3 = arith.constant 0 : index
    %c0_4 = arith.constant 0 : index
    %6 = vector.load %arg10[%c0_3, %c0_4] : memref<32x256xbf16, #tpu.memory_space<vmem>>, vector<32x256xbf16>
    %cst = arith.constant dense<0.000000e+00> : vector<256x256xf32>
    %7 = tpu.matmul %5, %6, %cst {dimension_numbers = #tpu.dot_dimension_numbers<[1], [0], [0], [1], [0, 0, 1, 1], [], []>} : vector<256x32xbf16>, vector<32x256xbf16>, vector<256x256xf32> -> vector<256x256xf32>
    %c0_5 = arith.constant 0 : index
    %c0_6 = arith.constant 0 : index
    %8 = vector.load %arg12[%c0_5, %c0_6] : memref<256x256xf32, #tpu.memory_space<vmem>>, vector<256x256xf32>
    tpu.vector_store %arg12[%c0_5, %c0_6], %7 {strides = array<i32>} : memref<256x256xf32, #tpu.memory_space<vmem>>, vector<256x256xf32>,
    %c0_7 = arith.constant 0 : index
    %c0_8 = arith.constant 0 : index
    %9 = vector.load %arg11[%c0_7, %c0_8] : memref<128x256xbf16, #tpu.memory_space<vmem>>, vector<128x256xbf16>
    %c0_9 = arith.constant 0 : index
    %c0_10 = arith.constant 0 : index
    %10 = vector.load %arg8[%c0_9, %c0_10] : memref<16x128xbf16, #tpu.memory_space<vmem>>, vector<16x128xbf16>
    %c0_11 = arith.constant 0 : index
    %c0_12 = arith.constant 0 : index
    %11 = vector.load %arg9[%c0_11, %c0_12] : memref<16x128xf32, #tpu.memory_space<vmem>>, vector<16x128xf32>
    %c0_i32_13 = arith.constant 0 : i32
    %c16_i32 = arith.constant 16 : i32
    %12 = arith.muli %c0_i32_13, %c16_i32 : i32
    %13 = tpu.assume_multiple %12, 16 : i32
    %cst_14 = arith.constant dense<0.000000e+00> : vector<16x256xf32>
    %14 = tpu.matmul %10, %9, %cst_14 {dimension_numbers = #tpu.dot_dimension_numbers<[1], [0], [0], [1], [0, 0, 1, 1], [], []>} : vector<16x128xbf16>, vector<128x256xbf16>, vector<16x256xf32> -> vector<16x256xf32>
    %15 = arith.index_cast %13 : i32 to index
    %c0_15 = arith.constant 0 : index
    %16 = vector.load %arg12[%15, %c0_15] : memref<256x256xf32, #tpu.memory_space<vmem>>, vector<16x256xf32>
    %17 = arith.addf %16, %14 : vector<16x256xf32>
    %18 = vector.extract_strided_slice %17 {offsets = [0, 0], sizes = [16, 128], strides = [1, 1]} : vector<16x256xf32> to vector<16x128xf32>
    %cst_16 = arith.constant 5.000000e-01 : f32
    %19 = vector.broadcast %cst_16 : f32 to vector<16x128xf32>
    %20 = arith.mulf %19, %18 : vector<16x128xf32>
    %21 = math.tanh %20 : vector<16x128xf32>
    %cst_17 = arith.constant 5.000000e-01 : f32
    %22 = vector.broadcast %cst_17 : f32 to vector<16x128xf32>
    %23 = arith.mulf %22, %21 : vector<16x128xf32>
    %cst_18 = arith.constant 5.000000e-01 : f32
    %24 = vector.broadcast %cst_18 : f32 to vector<16x128xf32>
    %25 = arith.addf %23, %24 : vector<16x128xf32>
    %26 = vector.extract_strided_slice %17 {offsets = [0, 128], sizes = [16, 128], strides = [1, 1]} : vector<16x256xf32> to vector<16x128xf32>
    %27 = arith.subf %11, %26 : vector<16x128xf32>
    %28 = arith.mulf %25, %27 : vector<16x128xf32>
    %29 = arith.addf %26, %28 : vector<16x128xf32>
    %cst_19 = arith.constant 1.000000e+00 : f32
    %30 = vector.broadcast %cst_19 : f32 to vector<16x128xf32>
    %31 = arith.cmpf ogt, %29, %30 : vector<16x128xf32>
    %32 = arith.extui %31 : vector<16x128xi1> to vector<16x128xi32>
    %33 = arith.sitofp %32 : vector<16x128xi32> to vector<16x128xf32>
    %34 = arith.index_cast %c0_i32_13 : i32 to index
    %c0_20 = arith.constant 0 : index
    %c0_21 = arith.constant 0 : index
    %35 = vector.load %arg7[%34, %c0_20, %c0_21] : memref<16x16x128xf32, #tpu.memory_space<vmem>>, vector<1x16x128xf32>
    %36 = vector.shape_cast %35 : vector<1x16x128xf32> to vector<16x128xf32>
    %37 = vector.shape_cast %33 : vector<16x128xf32> to vector<1x16x128xf32>
    tpu.vector_store %arg7[%34, %c0_20, %c0_21], %37 {strides = array<i32>} : memref<16x16x128xf32, #tpu.memory_space<vmem>>, vector<1x16x128xf32>,
    %38 = arith.truncf %33 : vector<16x128xf32> to vector<16x128xbf16>
    %c1_i32 = arith.constant 1 : i32
    %c16_i32_22 = arith.constant 16 : i32
    %39 = arith.muli %c1_i32, %c16_i32_22 : i32
    %40 = tpu.assume_multiple %39, 16 : i32
    %cst_23 = arith.constant dense<0.000000e+00> : vector<16x256xf32>
    %41 = tpu.matmul %38, %9, %cst_23 {dimension_numbers = #tpu.dot_dimension_numbers<[1], [0], [0], [1], [0, 0, 1, 1], [], []>} : vector<16x128xbf16>, vector<128x256xbf16>, vector<16x256xf32> -> vector<16x256xf32>
    %42 = arith.index_cast %40 : i32 to index
    %c0_24 = arith.constant 0 : index
    %43 = vector.load %arg12[%42, %c0_24] : memref<256x256xf32, #tpu.memory_space<vmem>>, vector<16x256xf32>
    %44 = arith.addf %43, %41 : vector<16x256xf32>
    %45 = vector.extract_strided_slice %44 {offsets = [0, 0], sizes = [16, 128], strides = [1, 1]} : vector<16x256xf32> to vector<16x128xf32>
    %cst_25 = arith.constant 5.000000e-01 : f32
    %46 = vector.broadcast %cst_25 : f32 to vector<16x128xf32>
    %47 = arith.mulf %46, %45 : vector<16x128xf32>
    %48 = math.tanh %47 : vector<16x128xf32>
    %cst_26 = arith.constant 5.000000e-01 : f32
    %49 = vector.broadcast %cst_26 : f32 to vector<16x128xf32>
    %50 = arith.mulf %49, %48 : vector<16x128xf32>
    %cst_27 = arith.constant 5.000000e-01 : f32
    %51 = vector.broadcast %cst_27 : f32 to vector<16x128xf32>
    %52 = arith.addf %50, %51 : vector<16x128xf32>
    %53 = vector.extract_strided_slice %44 {offsets = [0, 128], sizes = [16, 128], strides = [1, 1]} : vector<16x256xf32> to vector<16x128xf32>
    %54 = arith.subf %29, %53 : vector<16x128xf32>
    %55 = arith.mulf %52, %54 : vector<16x128xf32>
    %56 = arith.addf %53, %55 : vector<16x128xf32>
    %cst_28 = arith.constant 1.000000e+00 : f32
    %57 = vector.broadcast %cst_28 : f32 to vector<16x128xf32>
    %58 = arith.cmpf ogt, %56, %57 : vector<16x128xf32>
    %59 = arith.extui %58 : vector<16x128xi1> to vector<16x128xi32>
    %60 = arith.sitofp %59 : vector<16x128xi32> to vector<16x128xf32>
    %61 = arith.index_cast %c1_i32 : i32 to index
    %c0_29 = arith.constant 0 : index
    %c0_30 = arith.constant 0 : index
    %62 = vector.load %arg7[%61, %c0_29, %c0_30] : memref<16x16x128xf32, #tpu.memory_space<vmem>>, vector<1x16x128xf32>
    %63 = vector.shape_cast %62 : vector<1x16x128xf32> to vector<16x128xf32>
    %64 = vector.shape_cast %60 : vector<16x128xf32> to vector<1x16x128xf32>
    tpu.vector_store %arg7[%61, %c0_29, %c0_30], %64 {strides = array<i32>} : memref<16x16x128xf32, #tpu.memory_space<vmem>>, vector<1x16x128xf32>,
    %65 = arith.truncf %60 : vector<16x128xf32> to vector<16x128xbf16>
    %c2_i32 = arith.constant 2 : i32
    %c16_i32_31 = arith.constant 16 : i32
    %66 = arith.muli %c2_i32, %c16_i32_31 : i32
    %67 = tpu.assume_multiple %66, 16 : i32
    %cst_32 = arith.constant dense<0.000000e+00> : vector<16x256xf32>
    %68 = tpu.matmul %65, %9, %cst_32 {dimension_numbers = #tpu.dot_dimension_numbers<[1], [0], [0], [1], [0, 0, 1, 1], [], []>} : vector<16x128xbf16>, vector<128x256xbf16>, vector<16x256xf32> -> vector<16x256xf32>
    %69 = arith.index_cast %67 : i32 to index
    %c0_33 = arith.constant 0 : index
    %70 = vector.load %arg12[%69, %c0_33] : memref<256x256xf32, #tpu.memory_space<vmem>>, vector<16x256xf32>
    %71 = arith.addf %70, %68 : vector<16x256xf32>
    %72 = vector.extract_strided_slice %71 {offsets = [0, 0], sizes = [16, 128], strides = [1, 1]} : vector<16x256xf32> to vector<16x128xf32>
    %cst_34 = arith.constant 5.000000e-01 : f32
    %73 = vector.broadcast %cst_34 : f32 to vector<16x128xf32>
    %74 = arith.mulf %73, %72 : vector<16x128xf32>
    %75 = math.tanh %74 : vector<16x128xf32>
    %cst_35 = arith.constant 5.000000e-01 : f32
    %76 = vector.broadcast %cst_35 : f32 to vector<16x128xf32>
    %77 = arith.mulf %76, %75 : vector<16x128xf32>
    %cst_36 = arith.constant 5.000000e-01 : f32
    %78 = vector.broadcast %cst_36 : f32 to vector<16x128xf32>
    %79 = arith.addf %77, %78 : vector<16x128xf32>
    %80 = vector.extract_strided_slice %71 {offsets = [0, 128], sizes = [16, 128], strides = [1, 1]} : vector<16x256xf32> to vector<16x128xf32>
    %81 = arith.subf %56, %80 : vector<16x128xf32>
    %82 = arith.mulf %79, %81 : vector<16x128xf32>
    %83 = arith.addf %80, %82 : vector<16x128xf32>
    %cst_37 = arith.constant 1.000000e+00 : f32
    %84 = vector.broadcast %cst_37 : f32 to vector<16x128xf32>
    %85 = arith.cmpf ogt, %83, %84 : vector<16x128xf32>
    %86 = arith.extui %85 : vector<16x128xi1> to vector<16x128xi32>
    %87 = arith.sitofp %86 : vector<16x128xi32> to vector<16x128xf32>
    %88 = arith.index_cast %c2_i32 : i32 to index
    %c0_38 = arith.constant 0 : index
    %c0_39 = arith.constant 0 : index
    %89 = vector.load %arg7[%88, %c0_38, %c0_39] : memref<16x16x128xf32, #tpu.memory_space<vmem>>, vector<1x16x128xf32>
    %90 = vector.shape_cast %89 : vector<1x16x128xf32> to vector<16x128xf32>
    %91 = vector.shape_cast %87 : vector<16x128xf32> to vector<1x16x128xf32>
    tpu.vector_store %arg7[%88, %c0_38, %c0_39], %91 {strides = array<i32>} : memref<16x16x128xf32, #tpu.memory_space<vmem>>, vector<1x16x128xf32>,
    %92 = arith.truncf %87 : vector<16x128xf32> to vector<16x128xbf16>
    %c3_i32 = arith.constant 3 : i32
    %c16_i32_40 = arith.constant 16 : i32
    %93 = arith.muli %c3_i32, %c16_i32_40 : i32
    %94 = tpu.assume_multiple %93, 16 : i32
    %cst_41 = arith.constant dense<0.000000e+00> : vector<16x256xf32>
    %95 = tpu.matmul %92, %9, %cst_41 {dimension_numbers = #tpu.dot_dimension_numbers<[1], [0], [0], [1], [0, 0, 1, 1], [], []>} : vector<16x128xbf16>, vector<128x256xbf16>, vector<16x256xf32> -> vector<16x256xf32>
    %96 = arith.index_cast %94 : i32 to index
    %c0_42 = arith.constant 0 : index
    %97 = vector.load %arg12[%96, %c0_42] : memref<256x256xf32, #tpu.memory_space<vmem>>, vector<16x256xf32>
    %98 = arith.addf %97, %95 : vector<16x256xf32>
    %99 = vector.extract_strided_slice %98 {offsets = [0, 0], sizes = [16, 128], strides = [1, 1]} : vector<16x256xf32> to vector<16x128xf32>
    %cst_43 = arith.constant 5.000000e-01 : f32
    %100 = vector.broadcast %cst_43 : f32 to vector<16x128xf32>
    %101 = arith.mulf %100, %99 : vector<16x128xf32>
    %102 = math.tanh %101 : vector<16x128xf32>
    %cst_44 = arith.constant 5.000000e-01 : f32
    %103 = vector.broadcast %cst_44 : f32 to vector<16x128xf32>
    %104 = arith.mulf %103, %102 : vector<16x128xf32>
    %cst_45 = arith.constant 5.000000e-01 : f32
    %105 = vector.broadcast %cst_45 : f32 to vector<16x128xf32>
    %106 = arith.addf %104, %105 : vector<16x128xf32>
    %107 = vector.extract_strided_slice %98 {offsets = [0, 128], sizes = [16, 128], strides = [1, 1]} : vector<16x256xf32> to vector<16x128xf32>
    %108 = arith.subf %83, %107 : vector<16x128xf32>
    %109 = arith.mulf %106, %108 : vector<16x128xf32>
    %110 = arith.addf %107, %109 : vector<16x128xf32>
    %cst_46 = arith.constant 1.000000e+00 : f32
    %111 = vector.broadcast %cst_46 : f32 to vector<16x128xf32>
    %112 = arith.cmpf ogt, %110, %111 : vector<16x128xf32>
    %113 = arith.extui %112 : vector<16x128xi1> to vector<16x128xi32>
    %114 = arith.sitofp %113 : vector<16x128xi32> to vector<16x128xf32>
    %115 = arith.index_cast %c3_i32 : i32 to index
    %c0_47 = arith.constant 0 : index
    %c0_48 = arith.constant 0 : index
    %116 = vector.load %arg7[%115, %c0_47, %c0_48] : memref<16x16x128xf32, #tpu.memory_space<vmem>>, vector<1x16x128xf32>
    %117 = vector.shape_cast %116 : vector<1x16x128xf32> to vector<16x128xf32>
    %118 = vector.shape_cast %114 : vector<16x128xf32> to vector<1x16x128xf32>
    tpu.vector_store %arg7[%115, %c0_47, %c0_48], %118 {strides = array<i32>} : memref<16x16x128xf32, #tpu.memory_space<vmem>>, vector<1x16x128xf32>,
    %119 = arith.truncf %114 : vector<16x128xf32> to vector<16x128xbf16>
    %c4_i32 = arith.constant 4 : i32
    %c16_i32_49 = arith.constant 16 : i32
    %120 = arith.muli %c4_i32, %c16_i32_49 : i32
    %121 = tpu.assume_multiple %120, 16 : i32
    %cst_50 = arith.constant dense<0.000000e+00> : vector<16x256xf32>
    %122 = tpu.matmul %119, %9, %cst_50 {dimension_numbers = #tpu.dot_dimension_numbers<[1], [0], [0], [1], [0, 0, 1, 1], [], []>} : vector<16x128xbf16>, vector<128x256xbf16>, vector<16x256xf32> -> vector<16x256xf32>
    %123 = arith.index_cast %121 : i32 to index
    %c0_51 = arith.constant 0 : index
    %124 = vector.load %arg12[%123, %c0_51] : memref<256x256xf32, #tpu.memory_space<vmem>>, vector<16x256xf32>
    %125 = arith.addf %124, %122 : vector<16x256xf32>
    %126 = vector.extract_strided_slice %125 {offsets = [0, 0], sizes = [16, 128], strides = [1, 1]} : vector<16x256xf32> to vector<16x128xf32>
    %cst_52 = arith.constant 5.000000e-01 : f32
    %127 = vector.broadcast %cst_52 : f32 to vector<16x128xf32>
    %128 = arith.mulf %127, %126 : vector<16x128xf32>
    %129 = math.tanh %128 : vector<16x128xf32>
    %cst_53 = arith.constant 5.000000e-01 : f32
    %130 = vector.broadcast %cst_53 : f32 to vector<16x128xf32>
    %131 = arith.mulf %130, %129 : vector<16x128xf32>
    %cst_54 = arith.constant 5.000000e-01 : f32
    %132 = vector.broadcast %cst_54 : f32 to vector<16x128xf32>
    %133 = arith.addf %131, %132 : vector<16x128xf32>
    %134 = vector.extract_strided_slice %125 {offsets = [0, 128], sizes = [16, 128], strides = [1, 1]} : vector<16x256xf32> to vector<16x128xf32>
    %135 = arith.subf %110, %134 : vector<16x128xf32>
    %136 = arith.mulf %133, %135 : vector<16x128xf32>
    %137 = arith.addf %134, %136 : vector<16x128xf32>
    %cst_55 = arith.constant 1.000000e+00 : f32
    %138 = vector.broadcast %cst_55 : f32 to vector<16x128xf32>
    %139 = arith.cmpf ogt, %137, %138 : vector<16x128xf32>
    %140 = arith.extui %139 : vector<16x128xi1> to vector<16x128xi32>
    %141 = arith.sitofp %140 : vector<16x128xi32> to vector<16x128xf32>
    %142 = arith.index_cast %c4_i32 : i32 to index
    %c0_56 = arith.constant 0 : index
    %c0_57 = arith.constant 0 : index
    %143 = vector.load %arg7[%142, %c0_56, %c0_57] : memref<16x16x128xf32, #tpu.memory_space<vmem>>, vector<1x16x128xf32>
    %144 = vector.shape_cast %143 : vector<1x16x128xf32> to vector<16x128xf32>
    %145 = vector.shape_cast %141 : vector<16x128xf32> to vector<1x16x128xf32>
    tpu.vector_store %arg7[%142, %c0_56, %c0_57], %145 {strides = array<i32>} : memref<16x16x128xf32, #tpu.memory_space<vmem>>, vector<1x16x128xf32>,
    %146 = arith.truncf %141 : vector<16x128xf32> to vector<16x128xbf16>
    %c5_i32 = arith.constant 5 : i32
    %c16_i32_58 = arith.constant 16 : i32
    %147 = arith.muli %c5_i32, %c16_i32_58 : i32
    %148 = tpu.assume_multiple %147, 16 : i32
    %cst_59 = arith.constant dense<0.000000e+00> : vector<16x256xf32>
    %149 = tpu.matmul %146, %9, %cst_59 {dimension_numbers = #tpu.dot_dimension_numbers<[1], [0], [0], [1], [0, 0, 1, 1], [], []>} : vector<16x128xbf16>, vector<128x256xbf16>, vector<16x256xf32> -> vector<16x256xf32>
    %150 = arith.index_cast %148 : i32 to index
    %c0_60 = arith.constant 0 : index
    %151 = vector.load %arg12[%150, %c0_60] : memref<256x256xf32, #tpu.memory_space<vmem>>, vector<16x256xf32>
    %152 = arith.addf %151, %149 : vector<16x256xf32>
    %153 = vector.extract_strided_slice %152 {offsets = [0, 0], sizes = [16, 128], strides = [1, 1]} : vector<16x256xf32> to vector<16x128xf32>
    %cst_61 = arith.constant 5.000000e-01 : f32
    %154 = vector.broadcast %cst_61 : f32 to vector<16x128xf32>
    %155 = arith.mulf %154, %153 : vector<16x128xf32>
    %156 = math.tanh %155 : vector<16x128xf32>
    %cst_62 = arith.constant 5.000000e-01 : f32
    %157 = vector.broadcast %cst_62 : f32 to vector<16x128xf32>
    %158 = arith.mulf %157, %156 : vector<16x128xf32>
    %cst_63 = arith.constant 5.000000e-01 : f32
    %159 = vector.broadcast %cst_63 : f32 to vector<16x128xf32>
    %160 = arith.addf %158, %159 : vector<16x128xf32>
    %161 = vector.extract_strided_slice %152 {offsets = [0, 128], sizes = [16, 128], strides = [1, 1]} : vector<16x256xf32> to vector<16x128xf32>
    %162 = arith.subf %137, %161 : vector<16x128xf32>
    %163 = arith.mulf %160, %162 : vector<16x128xf32>
    %164 = arith.addf %161, %163 : vector<16x128xf32>
    %cst_64 = arith.constant 1.000000e+00 : f32
    %165 = vector.broadcast %cst_64 : f32 to vector<16x128xf32>
    %166 = arith.cmpf ogt, %164, %165 : vector<16x128xf32>
    %167 = arith.extui %166 : vector<16x128xi1> to vector<16x128xi32>
    %168 = arith.sitofp %167 : vector<16x128xi32> to vector<16x128xf32>
    %169 = arith.index_cast %c5_i32 : i32 to index
    %c0_65 = arith.constant 0 : index
    %c0_66 = arith.constant 0 : index
    %170 = vector.load %arg7[%169, %c0_65, %c0_66] : memref<16x16x128xf32, #tpu.memory_space<vmem>>, vector<1x16x128xf32>
    %171 = vector.shape_cast %170 : vector<1x16x128xf32> to vector<16x128xf32>
    %172 = vector.shape_cast %168 : vector<16x128xf32> to vector<1x16x128xf32>
    tpu.vector_store %arg7[%169, %c0_65, %c0_66], %172 {strides = array<i32>} : memref<16x16x128xf32, #tpu.memory_space<vmem>>, vector<1x16x128xf32>,
    %173 = arith.truncf %168 : vector<16x128xf32> to vector<16x128xbf16>
    %c6_i32 = arith.constant 6 : i32
    %c16_i32_67 = arith.constant 16 : i32
    %174 = arith.muli %c6_i32, %c16_i32_67 : i32
    %175 = tpu.assume_multiple %174, 16 : i32
    %cst_68 = arith.constant dense<0.000000e+00> : vector<16x256xf32>
    %176 = tpu.matmul %173, %9, %cst_68 {dimension_numbers = #tpu.dot_dimension_numbers<[1], [0], [0], [1], [0, 0, 1, 1], [], []>} : vector<16x128xbf16>, vector<128x256xbf16>, vector<16x256xf32> -> vector<16x256xf32>
    %177 = arith.index_cast %175 : i32 to index
    %c0_69 = arith.constant 0 : index
    %178 = vector.load %arg12[%177, %c0_69] : memref<256x256xf32, #tpu.memory_space<vmem>>, vector<16x256xf32>
    %179 = arith.addf %178, %176 : vector<16x256xf32>
    %180 = vector.extract_strided_slice %179 {offsets = [0, 0], sizes = [16, 128], strides = [1, 1]} : vector<16x256xf32> to vector<16x128xf32>
    %cst_70 = arith.constant 5.000000e-01 : f32
    %181 = vector.broadcast %cst_70 : f32 to vector<16x128xf32>
    %182 = arith.mulf %181, %180 : vector<16x128xf32>
    %183 = math.tanh %182 : vector<16x128xf32>
    %cst_71 = arith.constant 5.000000e-01 : f32
    %184 = vector.broadcast %cst_71 : f32 to vector<16x128xf32>
    %185 = arith.mulf %184, %183 : vector<16x128xf32>
    %cst_72 = arith.constant 5.000000e-01 : f32
    %186 = vector.broadcast %cst_72 : f32 to vector<16x128xf32>
    %187 = arith.addf %185, %186 : vector<16x128xf32>
    %188 = vector.extract_strided_slice %179 {offsets = [0, 128], sizes = [16, 128], strides = [1, 1]} : vector<16x256xf32> to vector<16x128xf32>
    %189 = arith.subf %164, %188 : vector<16x128xf32>
    %190 = arith.mulf %187, %189 : vector<16x128xf32>
    %191 = arith.addf %188, %190 : vector<16x128xf32>
    %cst_73 = arith.constant 1.000000e+00 : f32
    %192 = vector.broadcast %cst_73 : f32 to vector<16x128xf32>
    %193 = arith.cmpf ogt, %191, %192 : vector<16x128xf32>
    %194 = arith.extui %193 : vector<16x128xi1> to vector<16x128xi32>
    %195 = arith.sitofp %194 : vector<16x128xi32> to vector<16x128xf32>
    %196 = arith.index_cast %c6_i32 : i32 to index
    %c0_74 = arith.constant 0 : index
    %c0_75 = arith.constant 0 : index
    %197 = vector.load %arg7[%196, %c0_74, %c0_75] : memref<16x16x128xf32, #tpu.memory_space<vmem>>, vector<1x16x128xf32>
    %198 = vector.shape_cast %197 : vector<1x16x128xf32> to vector<16x128xf32>
    %199 = vector.shape_cast %195 : vector<16x128xf32> to vector<1x16x128xf32>
    tpu.vector_store %arg7[%196, %c0_74, %c0_75], %199 {strides = array<i32>} : memref<16x16x128xf32, #tpu.memory_space<vmem>>, vector<1x16x128xf32>,
    %200 = arith.truncf %195 : vector<16x128xf32> to vector<16x128xbf16>
    %c7_i32 = arith.constant 7 : i32
    %c16_i32_76 = arith.constant 16 : i32
    %201 = arith.muli %c7_i32, %c16_i32_76 : i32
    %202 = tpu.assume_multiple %201, 16 : i32
    %cst_77 = arith.constant dense<0.000000e+00> : vector<16x256xf32>
    %203 = tpu.matmul %200, %9, %cst_77 {dimension_numbers = #tpu.dot_dimension_numbers<[1], [0], [0], [1], [0, 0, 1, 1], [], []>} : vector<16x128xbf16>, vector<128x256xbf16>, vector<16x256xf32> -> vector<16x256xf32>
    %204 = arith.index_cast %202 : i32 to index
    %c0_78 = arith.constant 0 : index
    %205 = vector.load %arg12[%204, %c0_78] : memref<256x256xf32, #tpu.memory_space<vmem>>, vector<16x256xf32>
    %206 = arith.addf %205, %203 : vector<16x256xf32>
    %207 = vector.extract_strided_slice %206 {offsets = [0, 0], sizes = [16, 128], strides = [1, 1]} : vector<16x256xf32> to vector<16x128xf32>
    %cst_79 = arith.constant 5.000000e-01 : f32
    %208 = vector.broadcast %cst_79 : f32 to vector<16x128xf32>
    %209 = arith.mulf %208, %207 : vector<16x128xf32>
    %210 = math.tanh %209 : vector<16x128xf32>
    %cst_80 = arith.constant 5.000000e-01 : f32
    %211 = vector.broadcast %cst_80 : f32 to vector<16x128xf32>
    %212 = arith.mulf %211, %210 : vector<16x128xf32>
    %cst_81 = arith.constant 5.000000e-01 : f32
    %213 = vector.broadcast %cst_81 : f32 to vector<16x128xf32>
    %214 = arith.addf %212, %213 : vector<16x128xf32>
    %215 = vector.extract_strided_slice %206 {offsets = [0, 128], sizes = [16, 128], strides = [1, 1]} : vector<16x256xf32> to vector<16x128xf32>
    %216 = arith.subf %191, %215 : vector<16x128xf32>
    %217 = arith.mulf %214, %216 : vector<16x128xf32>
    %218 = arith.addf %215, %217 : vector<16x128xf32>
    %cst_82 = arith.constant 1.000000e+00 : f32
    %219 = vector.broadcast %cst_82 : f32 to vector<16x128xf32>
    %220 = arith.cmpf ogt, %218, %219 : vector<16x128xf32>
    %221 = arith.extui %220 : vector<16x128xi1> to vector<16x128xi32>
    %222 = arith.sitofp %221 : vector<16x128xi32> to vector<16x128xf32>
    %223 = arith.index_cast %c7_i32 : i32 to index
    %c0_83 = arith.constant 0 : index
    %c0_84 = arith.constant 0 : index
    %224 = vector.load %arg7[%223, %c0_83, %c0_84] : memref<16x16x128xf32, #tpu.memory_space<vmem>>, vector<1x16x128xf32>
    %225 = vector.shape_cast %224 : vector<1x16x128xf32> to vector<16x128xf32>
    %226 = vector.shape_cast %222 : vector<16x128xf32> to vector<1x16x128xf32>
    tpu.vector_store %arg7[%223, %c0_83, %c0_84], %226 {strides = array<i32>} : memref<16x16x128xf32, #tpu.memory_space<vmem>>, vector<1x16x128xf32>,
    %227 = arith.truncf %222 : vector<16x128xf32> to vector<16x128xbf16>
    %c8_i32 = arith.constant 8 : i32
    %c16_i32_85 = arith.constant 16 : i32
    %228 = arith.muli %c8_i32, %c16_i32_85 : i32
    %229 = tpu.assume_multiple %228, 16 : i32
    %cst_86 = arith.constant dense<0.000000e+00> : vector<16x256xf32>
    %230 = tpu.matmul %227, %9, %cst_86 {dimension_numbers = #tpu.dot_dimension_numbers<[1], [0], [0], [1], [0, 0, 1, 1], [], []>} : vector<16x128xbf16>, vector<128x256xbf16>, vector<16x256xf32> -> vector<16x256xf32>
    %231 = arith.index_cast %229 : i32 to index
    %c0_87 = arith.constant 0 : index
    %232 = vector.load %arg12[%231, %c0_87] : memref<256x256xf32, #tpu.memory_space<vmem>>, vector<16x256xf32>
    %233 = arith.addf %232, %230 : vector<16x256xf32>
    %234 = vector.extract_strided_slice %233 {offsets = [0, 0], sizes = [16, 128], strides = [1, 1]} : vector<16x256xf32> to vector<16x128xf32>
    %cst_88 = arith.constant 5.000000e-01 : f32
    %235 = vector.broadcast %cst_88 : f32 to vector<16x128xf32>
    %236 = arith.mulf %235, %234 : vector<16x128xf32>
    %237 = math.tanh %236 : vector<16x128xf32>
    %cst_89 = arith.constant 5.000000e-01 : f32
    %238 = vector.broadcast %cst_89 : f32 to vector<16x128xf32>
    %239 = arith.mulf %238, %237 : vector<16x128xf32>
    %cst_90 = arith.constant 5.000000e-01 : f32
    %240 = vector.broadcast %cst_90 : f32 to vector<16x128xf32>
    %241 = arith.addf %239, %240 : vector<16x128xf32>
    %242 = vector.extract_strided_slice %233 {offsets = [0, 128], sizes = [16, 128], strides = [1, 1]} : vector<16x256xf32> to vector<16x128xf32>
    %243 = arith.subf %218, %242 : vector<16x128xf32>
    %244 = arith.mulf %241, %243 : vector<16x128xf32>
    %245 = arith.addf %242, %244 : vector<16x128xf32>
    %cst_91 = arith.constant 1.000000e+00 : f32
    %246 = vector.broadcast %cst_91 : f32 to vector<16x128xf32>
    %247 = arith.cmpf ogt, %245, %246 : vector<16x128xf32>
    %248 = arith.extui %247 : vector<16x128xi1> to vector<16x128xi32>
    %249 = arith.sitofp %248 : vector<16x128xi32> to vector<16x128xf32>
    %250 = arith.index_cast %c8_i32 : i32 to index
    %c0_92 = arith.constant 0 : index
    %c0_93 = arith.constant 0 : index
    %251 = vector.load %arg7[%250, %c0_92, %c0_93] : memref<16x16x128xf32, #tpu.memory_space<vmem>>, vector<1x16x128xf32>
    %252 = vector.shape_cast %251 : vector<1x16x128xf32> to vector<16x128xf32>
    %253 = vector.shape_cast %249 : vector<16x128xf32> to vector<1x16x128xf32>
    tpu.vector_store %arg7[%250, %c0_92, %c0_93], %253 {strides = array<i32>} : memref<16x16x128xf32, #tpu.memory_space<vmem>>, vector<1x16x128xf32>,
    %254 = arith.truncf %249 : vector<16x128xf32> to vector<16x128xbf16>
    %c9_i32 = arith.constant 9 : i32
    %c16_i32_94 = arith.constant 16 : i32
    %255 = arith.muli %c9_i32, %c16_i32_94 : i32
    %256 = tpu.assume_multiple %255, 16 : i32
    %cst_95 = arith.constant dense<0.000000e+00> : vector<16x256xf32>
    %257 = tpu.matmul %254, %9, %cst_95 {dimension_numbers = #tpu.dot_dimension_numbers<[1], [0], [0], [1], [0, 0, 1, 1], [], []>} : vector<16x128xbf16>, vector<128x256xbf16>, vector<16x256xf32> -> vector<16x256xf32>
    %258 = arith.index_cast %256 : i32 to index
    %c0_96 = arith.constant 0 : index
    %259 = vector.load %arg12[%258, %c0_96] : memref<256x256xf32, #tpu.memory_space<vmem>>, vector<16x256xf32>
    %260 = arith.addf %259, %257 : vector<16x256xf32>
    %261 = vector.extract_strided_slice %260 {offsets = [0, 0], sizes = [16, 128], strides = [1, 1]} : vector<16x256xf32> to vector<16x128xf32>
    %cst_97 = arith.constant 5.000000e-01 : f32
    %262 = vector.broadcast %cst_97 : f32 to vector<16x128xf32>
    %263 = arith.mulf %262, %261 : vector<16x128xf32>
    %264 = math.tanh %263 : vector<16x128xf32>
    %cst_98 = arith.constant 5.000000e-01 : f32
    %265 = vector.broadcast %cst_98 : f32 to vector<16x128xf32>
    %266 = arith.mulf %265, %264 : vector<16x128xf32>
    %cst_99 = arith.constant 5.000000e-01 : f32
    %267 = vector.broadcast %cst_99 : f32 to vector<16x128xf32>
    %268 = arith.addf %266, %267 : vector<16x128xf32>
    %269 = vector.extract_strided_slice %260 {offsets = [0, 128], sizes = [16, 128], strides = [1, 1]} : vector<16x256xf32> to vector<16x128xf32>
    %270 = arith.subf %245, %269 : vector<16x128xf32>
    %271 = arith.mulf %268, %270 : vector<16x128xf32>
    %272 = arith.addf %269, %271 : vector<16x128xf32>
    %cst_100 = arith.constant 1.000000e+00 : f32
    %273 = vector.broadcast %cst_100 : f32 to vector<16x128xf32>
    %274 = arith.cmpf ogt, %272, %273 : vector<16x128xf32>
    %275 = arith.extui %274 : vector<16x128xi1> to vector<16x128xi32>
    %276 = arith.sitofp %275 : vector<16x128xi32> to vector<16x128xf32>
    %277 = arith.index_cast %c9_i32 : i32 to index
    %c0_101 = arith.constant 0 : index
    %c0_102 = arith.constant 0 : index
    %278 = vector.load %arg7[%277, %c0_101, %c0_102] : memref<16x16x128xf32, #tpu.memory_space<vmem>>, vector<1x16x128xf32>
    %279 = vector.shape_cast %278 : vector<1x16x128xf32> to vector<16x128xf32>
    %280 = vector.shape_cast %276 : vector<16x128xf32> to vector<1x16x128xf32>
    tpu.vector_store %arg7[%277, %c0_101, %c0_102], %280 {strides = array<i32>} : memref<16x16x128xf32, #tpu.memory_space<vmem>>, vector<1x16x128xf32>,
    %281 = arith.truncf %276 : vector<16x128xf32> to vector<16x128xbf16>
    %c10_i32 = arith.constant 10 : i32
    %c16_i32_103 = arith.constant 16 : i32
    %282 = arith.muli %c10_i32, %c16_i32_103 : i32
    %283 = tpu.assume_multiple %282, 16 : i32
    %cst_104 = arith.constant dense<0.000000e+00> : vector<16x256xf32>
    %284 = tpu.matmul %281, %9, %cst_104 {dimension_numbers = #tpu.dot_dimension_numbers<[1], [0], [0], [1], [0, 0, 1, 1], [], []>} : vector<16x128xbf16>, vector<128x256xbf16>, vector<16x256xf32> -> vector<16x256xf32>
    %285 = arith.index_cast %283 : i32 to index
    %c0_105 = arith.constant 0 : index
    %286 = vector.load %arg12[%285, %c0_105] : memref<256x256xf32, #tpu.memory_space<vmem>>, vector<16x256xf32>
    %287 = arith.addf %286, %284 : vector<16x256xf32>
    %288 = vector.extract_strided_slice %287 {offsets = [0, 0], sizes = [16, 128], strides = [1, 1]} : vector<16x256xf32> to vector<16x128xf32>
    %cst_106 = arith.constant 5.000000e-01 : f32
    %289 = vector.broadcast %cst_106 : f32 to vector<16x128xf32>
    %290 = arith.mulf %289, %288 : vector<16x128xf32>
    %291 = math.tanh %290 : vector<16x128xf32>
    %cst_107 = arith.constant 5.000000e-01 : f32
    %292 = vector.broadcast %cst_107 : f32 to vector<16x128xf32>
    %293 = arith.mulf %292, %291 : vector<16x128xf32>
    %cst_108 = arith.constant 5.000000e-01 : f32
    %294 = vector.broadcast %cst_108 : f32 to vector<16x128xf32>
    %295 = arith.addf %293, %294 : vector<16x128xf32>
    %296 = vector.extract_strided_slice %287 {offsets = [0, 128], sizes = [16, 128], strides = [1, 1]} : vector<16x256xf32> to vector<16x128xf32>
    %297 = arith.subf %272, %296 : vector<16x128xf32>
    %298 = arith.mulf %295, %297 : vector<16x128xf32>
    %299 = arith.addf %296, %298 : vector<16x128xf32>
    %cst_109 = arith.constant 1.000000e+00 : f32
    %300 = vector.broadcast %cst_109 : f32 to vector<16x128xf32>
    %301 = arith.cmpf ogt, %299, %300 : vector<16x128xf32>
    %302 = arith.extui %301 : vector<16x128xi1> to vector<16x128xi32>
    %303 = arith.sitofp %302 : vector<16x128xi32> to vector<16x128xf32>
    %304 = arith.index_cast %c10_i32 : i32 to index
    %c0_110 = arith.constant 0 : index
    %c0_111 = arith.constant 0 : index
    %305 = vector.load %arg7[%304, %c0_110, %c0_111] : memref<16x16x128xf32, #tpu.memory_space<vmem>>, vector<1x16x128xf32>
    %306 = vector.shape_cast %305 : vector<1x16x128xf32> to vector<16x128xf32>
    %307 = vector.shape_cast %303 : vector<16x128xf32> to vector<1x16x128xf32>
    tpu.vector_store %arg7[%304, %c0_110, %c0_111], %307 {strides = array<i32>} : memref<16x16x128xf32, #tpu.memory_space<vmem>>, vector<1x16x128xf32>,
    %308 = arith.truncf %303 : vector<16x128xf32> to vector<16x128xbf16>
    %c11_i32 = arith.constant 11 : i32
    %c16_i32_112 = arith.constant 16 : i32
    %309 = arith.muli %c11_i32, %c16_i32_112 : i32
    %310 = tpu.assume_multiple %309, 16 : i32
    %cst_113 = arith.constant dense<0.000000e+00> : vector<16x256xf32>
    %311 = tpu.matmul %308, %9, %cst_113 {dimension_numbers = #tpu.dot_dimension_numbers<[1], [0], [0], [1], [0, 0, 1, 1], [], []>} : vector<16x128xbf16>, vector<128x256xbf16>, vector<16x256xf32> -> vector<16x256xf32>
    %312 = arith.index_cast %310 : i32 to index
    %c0_114 = arith.constant 0 : index
    %313 = vector.load %arg12[%312, %c0_114] : memref<256x256xf32, #tpu.memory_space<vmem>>, vector<16x256xf32>
    %314 = arith.addf %313, %311 : vector<16x256xf32>
    %315 = vector.extract_strided_slice %314 {offsets = [0, 0], sizes = [16, 128], strides = [1, 1]} : vector<16x256xf32> to vector<16x128xf32>
    %cst_115 = arith.constant 5.000000e-01 : f32
    %316 = vector.broadcast %cst_115 : f32 to vector<16x128xf32>
    %317 = arith.mulf %316, %315 : vector<16x128xf32>
    %318 = math.tanh %317 : vector<16x128xf32>
    %cst_116 = arith.constant 5.000000e-01 : f32
    %319 = vector.broadcast %cst_116 : f32 to vector<16x128xf32>
    %320 = arith.mulf %319, %318 : vector<16x128xf32>
    %cst_117 = arith.constant 5.000000e-01 : f32
    %321 = vector.broadcast %cst_117 : f32 to vector<16x128xf32>
    %322 = arith.addf %320, %321 : vector<16x128xf32>
    %323 = vector.extract_strided_slice %314 {offsets = [0, 128], sizes = [16, 128], strides = [1, 1]} : vector<16x256xf32> to vector<16x128xf32>
    %324 = arith.subf %299, %323 : vector<16x128xf32>
    %325 = arith.mulf %322, %324 : vector<16x128xf32>
    %326 = arith.addf %323, %325 : vector<16x128xf32>
    %cst_118 = arith.constant 1.000000e+00 : f32
    %327 = vector.broadcast %cst_118 : f32 to vector<16x128xf32>
    %328 = arith.cmpf ogt, %326, %327 : vector<16x128xf32>
    %329 = arith.extui %328 : vector<16x128xi1> to vector<16x128xi32>
    %330 = arith.sitofp %329 : vector<16x128xi32> to vector<16x128xf32>
    %331 = arith.index_cast %c11_i32 : i32 to index
    %c0_119 = arith.constant 0 : index
    %c0_120 = arith.constant 0 : index
    %332 = vector.load %arg7[%331, %c0_119, %c0_120] : memref<16x16x128xf32, #tpu.memory_space<vmem>>, vector<1x16x128xf32>
    %333 = vector.shape_cast %332 : vector<1x16x128xf32> to vector<16x128xf32>
    %334 = vector.shape_cast %330 : vector<16x128xf32> to vector<1x16x128xf32>
    tpu.vector_store %arg7[%331, %c0_119, %c0_120], %334 {strides = array<i32>} : memref<16x16x128xf32, #tpu.memory_space<vmem>>, vector<1x16x128xf32>,
    %335 = arith.truncf %330 : vector<16x128xf32> to vector<16x128xbf16>
    %c12_i32 = arith.constant 12 : i32
    %c16_i32_121 = arith.constant 16 : i32
    %336 = arith.muli %c12_i32, %c16_i32_121 : i32
    %337 = tpu.assume_multiple %336, 16 : i32
    %cst_122 = arith.constant dense<0.000000e+00> : vector<16x256xf32>
    %338 = tpu.matmul %335, %9, %cst_122 {dimension_numbers = #tpu.dot_dimension_numbers<[1], [0], [0], [1], [0, 0, 1, 1], [], []>} : vector<16x128xbf16>, vector<128x256xbf16>, vector<16x256xf32> -> vector<16x256xf32>
    %339 = arith.index_cast %337 : i32 to index
    %c0_123 = arith.constant 0 : index
    %340 = vector.load %arg12[%339, %c0_123] : memref<256x256xf32, #tpu.memory_space<vmem>>, vector<16x256xf32>
    %341 = arith.addf %340, %338 : vector<16x256xf32>
    %342 = vector.extract_strided_slice %341 {offsets = [0, 0], sizes = [16, 128], strides = [1, 1]} : vector<16x256xf32> to vector<16x128xf32>
    %cst_124 = arith.constant 5.000000e-01 : f32
    %343 = vector.broadcast %cst_124 : f32 to vector<16x128xf32>
    %344 = arith.mulf %343, %342 : vector<16x128xf32>
    %345 = math.tanh %344 : vector<16x128xf32>
    %cst_125 = arith.constant 5.000000e-01 : f32
    %346 = vector.broadcast %cst_125 : f32 to vector<16x128xf32>
    %347 = arith.mulf %346, %345 : vector<16x128xf32>
    %cst_126 = arith.constant 5.000000e-01 : f32
    %348 = vector.broadcast %cst_126 : f32 to vector<16x128xf32>
    %349 = arith.addf %347, %348 : vector<16x128xf32>
    %350 = vector.extract_strided_slice %341 {offsets = [0, 128], sizes = [16, 128], strides = [1, 1]} : vector<16x256xf32> to vector<16x128xf32>
    %351 = arith.subf %326, %350 : vector<16x128xf32>
    %352 = arith.mulf %349, %351 : vector<16x128xf32>
    %353 = arith.addf %350, %352 : vector<16x128xf32>
    %cst_127 = arith.constant 1.000000e+00 : f32
    %354 = vector.broadcast %cst_127 : f32 to vector<16x128xf32>
    %355 = arith.cmpf ogt, %353, %354 : vector<16x128xf32>
    %356 = arith.extui %355 : vector<16x128xi1> to vector<16x128xi32>
    %357 = arith.sitofp %356 : vector<16x128xi32> to vector<16x128xf32>
    %358 = arith.index_cast %c12_i32 : i32 to index
    %c0_128 = arith.constant 0 : index
    %c0_129 = arith.constant 0 : index
    %359 = vector.load %arg7[%358, %c0_128, %c0_129] : memref<16x16x128xf32, #tpu.memory_space<vmem>>, vector<1x16x128xf32>
    %360 = vector.shape_cast %359 : vector<1x16x128xf32> to vector<16x128xf32>
    %361 = vector.shape_cast %357 : vector<16x128xf32> to vector<1x16x128xf32>
    tpu.vector_store %arg7[%358, %c0_128, %c0_129], %361 {strides = array<i32>} : memref<16x16x128xf32, #tpu.memory_space<vmem>>, vector<1x16x128xf32>,
    %362 = arith.truncf %357 : vector<16x128xf32> to vector<16x128xbf16>
    %c13_i32 = arith.constant 13 : i32
    %c16_i32_130 = arith.constant 16 : i32
    %363 = arith.muli %c13_i32, %c16_i32_130 : i32
    %364 = tpu.assume_multiple %363, 16 : i32
    %cst_131 = arith.constant dense<0.000000e+00> : vector<16x256xf32>
    %365 = tpu.matmul %362, %9, %cst_131 {dimension_numbers = #tpu.dot_dimension_numbers<[1], [0], [0], [1], [0, 0, 1, 1], [], []>} : vector<16x128xbf16>, vector<128x256xbf16>, vector<16x256xf32> -> vector<16x256xf32>
    %366 = arith.index_cast %364 : i32 to index
    %c0_132 = arith.constant 0 : index
    %367 = vector.load %arg12[%366, %c0_132] : memref<256x256xf32, #tpu.memory_space<vmem>>, vector<16x256xf32>
    %368 = arith.addf %367, %365 : vector<16x256xf32>
    %369 = vector.extract_strided_slice %368 {offsets = [0, 0], sizes = [16, 128], strides = [1, 1]} : vector<16x256xf32> to vector<16x128xf32>
    %cst_133 = arith.constant 5.000000e-01 : f32
    %370 = vector.broadcast %cst_133 : f32 to vector<16x128xf32>
    %371 = arith.mulf %370, %369 : vector<16x128xf32>
    %372 = math.tanh %371 : vector<16x128xf32>
    %cst_134 = arith.constant 5.000000e-01 : f32
    %373 = vector.broadcast %cst_134 : f32 to vector<16x128xf32>
    %374 = arith.mulf %373, %372 : vector<16x128xf32>
    %cst_135 = arith.constant 5.000000e-01 : f32
    %375 = vector.broadcast %cst_135 : f32 to vector<16x128xf32>
    %376 = arith.addf %374, %375 : vector<16x128xf32>
    %377 = vector.extract_strided_slice %368 {offsets = [0, 128], sizes = [16, 128], strides = [1, 1]} : vector<16x256xf32> to vector<16x128xf32>
    %378 = arith.subf %353, %377 : vector<16x128xf32>
    %379 = arith.mulf %376, %378 : vector<16x128xf32>
    %380 = arith.addf %377, %379 : vector<16x128xf32>
    %cst_136 = arith.constant 1.000000e+00 : f32
    %381 = vector.broadcast %cst_136 : f32 to vector<16x128xf32>
    %382 = arith.cmpf ogt, %380, %381 : vector<16x128xf32>
    %383 = arith.extui %382 : vector<16x128xi1> to vector<16x128xi32>
    %384 = arith.sitofp %383 : vector<16x128xi32> to vector<16x128xf32>
    %385 = arith.index_cast %c13_i32 : i32 to index
    %c0_137 = arith.constant 0 : index
    %c0_138 = arith.constant 0 : index
    %386 = vector.load %arg7[%385, %c0_137, %c0_138] : memref<16x16x128xf32, #tpu.memory_space<vmem>>, vector<1x16x128xf32>
    %387 = vector.shape_cast %386 : vector<1x16x128xf32> to vector<16x128xf32>
    %388 = vector.shape_cast %384 : vector<16x128xf32> to vector<1x16x128xf32>
    tpu.vector_store %arg7[%385, %c0_137, %c0_138], %388 {strides = array<i32>} : memref<16x16x128xf32, #tpu.memory_space<vmem>>, vector<1x16x128xf32>,
    %389 = arith.truncf %384 : vector<16x128xf32> to vector<16x128xbf16>
    %c14_i32 = arith.constant 14 : i32
    %c16_i32_139 = arith.constant 16 : i32
    %390 = arith.muli %c14_i32, %c16_i32_139 : i32
    %391 = tpu.assume_multiple %390, 16 : i32
    %cst_140 = arith.constant dense<0.000000e+00> : vector<16x256xf32>
    %392 = tpu.matmul %389, %9, %cst_140 {dimension_numbers = #tpu.dot_dimension_numbers<[1], [0], [0], [1], [0, 0, 1, 1], [], []>} : vector<16x128xbf16>, vector<128x256xbf16>, vector<16x256xf32> -> vector<16x256xf32>
    %393 = arith.index_cast %391 : i32 to index
    %c0_141 = arith.constant 0 : index
    %394 = vector.load %arg12[%393, %c0_141] : memref<256x256xf32, #tpu.memory_space<vmem>>, vector<16x256xf32>
    %395 = arith.addf %394, %392 : vector<16x256xf32>
    %396 = vector.extract_strided_slice %395 {offsets = [0, 0], sizes = [16, 128], strides = [1, 1]} : vector<16x256xf32> to vector<16x128xf32>
    %cst_142 = arith.constant 5.000000e-01 : f32
    %397 = vector.broadcast %cst_142 : f32 to vector<16x128xf32>
    %398 = arith.mulf %397, %396 : vector<16x128xf32>
    %399 = math.tanh %398 : vector<16x128xf32>
    %cst_143 = arith.constant 5.000000e-01 : f32
    %400 = vector.broadcast %cst_143 : f32 to vector<16x128xf32>
    %401 = arith.mulf %400, %399 : vector<16x128xf32>
    %cst_144 = arith.constant 5.000000e-01 : f32
    %402 = vector.broadcast %cst_144 : f32 to vector<16x128xf32>
    %403 = arith.addf %401, %402 : vector<16x128xf32>
    %404 = vector.extract_strided_slice %395 {offsets = [0, 128], sizes = [16, 128], strides = [1, 1]} : vector<16x256xf32> to vector<16x128xf32>
    %405 = arith.subf %380, %404 : vector<16x128xf32>
    %406 = arith.mulf %403, %405 : vector<16x128xf32>
    %407 = arith.addf %404, %406 : vector<16x128xf32>
    %cst_145 = arith.constant 1.000000e+00 : f32
    %408 = vector.broadcast %cst_145 : f32 to vector<16x128xf32>
    %409 = arith.cmpf ogt, %407, %408 : vector<16x128xf32>
    %410 = arith.extui %409 : vector<16x128xi1> to vector<16x128xi32>
    %411 = arith.sitofp %410 : vector<16x128xi32> to vector<16x128xf32>
    %412 = arith.index_cast %c14_i32 : i32 to index
    %c0_146 = arith.constant 0 : index
    %c0_147 = arith.constant 0 : index
    %413 = vector.load %arg7[%412, %c0_146, %c0_147] : memref<16x16x128xf32, #tpu.memory_space<vmem>>, vector<1x16x128xf32>
    %414 = vector.shape_cast %413 : vector<1x16x128xf32> to vector<16x128xf32>
    %415 = vector.shape_cast %411 : vector<16x128xf32> to vector<1x16x128xf32>
    tpu.vector_store %arg7[%412, %c0_146, %c0_147], %415 {strides = array<i32>} : memref<16x16x128xf32, #tpu.memory_space<vmem>>, vector<1x16x128xf32>,
    %416 = arith.truncf %411 : vector<16x128xf32> to vector<16x128xbf16>
    %c15_i32 = arith.constant 15 : i32
    %c16_i32_148 = arith.constant 16 : i32
    %417 = arith.muli %c15_i32, %c16_i32_148 : i32
    %418 = tpu.assume_multiple %417, 16 : i32
    %cst_149 = arith.constant dense<0.000000e+00> : vector<16x256xf32>
    %419 = tpu.matmul %416, %9, %cst_149 {dimension_numbers = #tpu.dot_dimension_numbers<[1], [0], [0], [1], [0, 0, 1, 1], [], []>} : vector<16x128xbf16>, vector<128x256xbf16>, vector<16x256xf32> -> vector<16x256xf32>
    %420 = arith.index_cast %418 : i32 to index
    %c0_150 = arith.constant 0 : index
    %421 = vector.load %arg12[%420, %c0_150] : memref<256x256xf32, #tpu.memory_space<vmem>>, vector<16x256xf32>
    %422 = arith.addf %421, %419 : vector<16x256xf32>
    %423 = vector.extract_strided_slice %422 {offsets = [0, 0], sizes = [16, 128], strides = [1, 1]} : vector<16x256xf32> to vector<16x128xf32>
    %cst_151 = arith.constant 5.000000e-01 : f32
    %424 = vector.broadcast %cst_151 : f32 to vector<16x128xf32>
    %425 = arith.mulf %424, %423 : vector<16x128xf32>
    %426 = math.tanh %425 : vector<16x128xf32>
    %cst_152 = arith.constant 5.000000e-01 : f32
    %427 = vector.broadcast %cst_152 : f32 to vector<16x128xf32>
    %428 = arith.mulf %427, %426 : vector<16x128xf32>
    %cst_153 = arith.constant 5.000000e-01 : f32
    %429 = vector.broadcast %cst_153 : f32 to vector<16x128xf32>
    %430 = arith.addf %428, %429 : vector<16x128xf32>
    %431 = vector.extract_strided_slice %422 {offsets = [0, 128], sizes = [16, 128], strides = [1, 1]} : vector<16x256xf32> to vector<16x128xf32>
    %432 = arith.subf %407, %431 : vector<16x128xf32>
    %433 = arith.mulf %430, %432 : vector<16x128xf32>
    %434 = arith.addf %431, %433 : vector<16x128xf32>
    %cst_154 = arith.constant 1.000000e+00 : f32
    %435 = vector.broadcast %cst_154 : f32 to vector<16x128xf32>
    %436 = arith.cmpf ogt, %434, %435 : vector<16x128xf32>
    %437 = arith.extui %436 : vector<16x128xi1> to vector<16x128xi32>
    %438 = arith.sitofp %437 : vector<16x128xi32> to vector<16x128xf32>
    %439 = arith.index_cast %c15_i32 : i32 to index
    %c0_155 = arith.constant 0 : index
    %c0_156 = arith.constant 0 : index
    %440 = vector.load %arg7[%439, %c0_155, %c0_156] : memref<16x16x128xf32, #tpu.memory_space<vmem>>, vector<1x16x128xf32>
    %441 = vector.shape_cast %440 : vector<1x16x128xf32> to vector<16x128xf32>
    %442 = vector.shape_cast %438 : vector<16x128xf32> to vector<1x16x128xf32>
    tpu.vector_store %arg7[%439, %c0_155, %c0_156], %442 {strides = array<i32>} : memref<16x16x128xf32, #tpu.memory_space<vmem>>, vector<1x16x128xf32>,
    %443 = arith.truncf %438 : vector<16x128xf32> to vector<16x128xbf16>
    %c16_i32_157 = arith.constant 16 : i32
    %c0_158 = arith.constant 0 : index
    %c0_159 = arith.constant 0 : index
    %444 = vector.load %arg8[%c0_158, %c0_159] : memref<16x128xbf16, #tpu.memory_space<vmem>>, vector<16x128xbf16>
    tpu.vector_store %arg8[%c0_158, %c0_159], %443 {strides = array<i32>} : memref<16x128xbf16, #tpu.memory_space<vmem>>, vector<16x128xbf16>,
    %c0_160 = arith.constant 0 : index
    %c0_161 = arith.constant 0 : index
    %445 = vector.load %arg9[%c0_160, %c0_161] : memref<16x128xf32, #tpu.memory_space<vmem>>, vector<16x128xf32>
    tpu.vector_store %arg9[%c0_160, %c0_161], %434 {strides = array<i32>} : memref<16x128xf32, #tpu.memory_space<vmem>>, vector<16x128xf32>,
    return
  }
  func.func @transform_0(%arg0: i32, %arg1: i32) -> (i32, i32, i32) {
    %c0_i32 = arith.constant 0 : i32
    %c0_i32_0 = arith.constant 0 : i32
    return %arg1, %arg0, %c0_i32 : i32, i32, i32
  }
  func.func @transform_3(%arg0: i32, %arg1: i32) -> (i32, i32) {
    %c0_i32 = arith.constant 0 : i32
    %c0_i32_0 = arith.constant 0 : i32
    return %arg0, %c0_i32 : i32, i32
  }
  func.func @transform_4(%arg0: i32, %arg1: i32) -> (i32, i32) {
    %c0_i32 = arith.constant 0 : i32
    %c0_i32_0 = arith.constant 0 : i32
    return %arg0, %c0_i32 : i32, i32
  }
  func.func @transform_5(%arg0: i32, %arg1: i32) -> (i32, i32, i32) {
    %c0_i32 = arith.constant 0 : i32
    %c0_i32_0 = arith.constant 0 : i32
    return %arg1, %arg0, %c0_i32 : i32, i32, i32
  }
  func.func @transform_6(%arg0: i32, %arg1: i32) -> (i32, i32) {
    %c0_i32 = arith.constant 0 : i32
    %c0_i32_0 = arith.constant 0 : i32
    return %arg0, %c0_i32 : i32, i32
  }
  func.func @transform_7(%arg0: i32, %arg1: i32) -> (i32, i32) {
    %c0_i32 = arith.constant 0 : i32
    %c0_i32_0 = arith.constant 0 : i32
    return %arg0, %c0_i32 : i32, i32
  }
}

</mosaic_0001>

<llo_original>
// kernel: gsu_layer.1
$region0: #{gsu_layer.1}
  #allocation0 [shape = 'u32[]', space=smem, size = 0x4, offset = 0x4, fixed_abs, tag = 'smem constant byte address 0x4 - core index']
  #allocation1 [shape = 'u32[144,128]{1,0:T(1,128)}', space=vmem, size = 0x12000, scoped, tag = 'internal scratch']
  #allocation2 [shape = 'bf16[32,256]{1,0:T(16,128)(2,1)}', space=vmem, size = 0x4000, scoped, tag = 'scratch operand']
  #allocation3 [shape = 'bf16[128,256]{1,0:T(16,128)(2,1)}', space=vmem, size = 0x10000, scoped, tag = 'scratch operand']
  #allocation4 [shape = 'f32[256,256]{1,0:T(8,128)}', space=vmem, size = 0x40000, scoped, tag = 'scratch operand']
  #allocation5 [shape = 's32[2]{0}', space=sflag, size = 0x8, scoped, tag = 'scratch operand']
  #allocation8 [shape = 's32[]', space=sflag, size = 0x4, offset = 0, fixed_abs, tag = 'sflag constant byte address 0x0 - dummy sync flag']
  #allocation9 [shape = 's32[]', space=sflag, size = 0x4, offset = 0, fixed_abs, tag = 'sflag constant byte address 0x0 - dummy sync flag']
  %s0 = inlined_call_operand.vmem [shape: f32[32,32,32], index: 0, kind: input, shape index: {}]
  %s1 = inlined_call_operand.vmem [shape: bf16[32,256], index: 1, kind: input, shape index: {}]
  %s2 = inlined_call_operand.vmem [shape: bf16[128,256], index: 2, kind: input, shape index: {}]
  %s3 = inlined_call_operand.vmem [shape: bf16[32,128], index: 3, kind: input, shape index: {}]
  %s4 = inlined_call_operand.vmem [shape: f32[32,128], index: 4, kind: input, shape index: {}]
  %s5 = inlined_call_operand.vmem [shape: f32[32,32,128], index: 5, kind: output, shape index: {0}]
  %s6 = inlined_call_operand.vmem [shape: bf16[32,128], index: 6, kind: output, shape index: {1}]
  %s7 = inlined_call_operand.vmem [shape: f32[32,128], index: 7, kind: output, shape index: {2}]
  %8 = xla_tuple %s5, %s6, %s7
  %s9 = sld [smem:[#allocation0]]
  $region211: #{gsu_layer.1} parent=0
    _
  %s11 = ssub.s32 1, %s9
  %s12 = scalar_select 0, %s11, %s9
  $region1: #{gsu_layer.1} parent=0
    #allocation6 [shape = 'u8[262144]{0}', space=vmem, size = 0x40000, scoped, tag = 'input window, operand 0']
    #allocation7 [shape = 'u8[262144]{0}', space=vmem, size = 0x40000, scoped, tag = 'output window, operand 0']
    loop: start=0, step=1, limit=6
    $region2: #{gsu_layer.1} parent=1 // loop_pre_header
      _
    $region3: #{gsu_layer.1} parent=1 // loop_header
      %s14 = sphi 0, %s18
      %p15 = scmp.ge.s32.totalorder %s14, 6
      %s21 = sphi 0, %s33
      %s22 = sphi 0, %s29
      %s23 = sphi 0, %s21
      %s24 = sphi 0, %s22
      %s25 = sphi 0, %s23
      %s26 = sphi 0, %s24
      %s38 = sphi 0, %s40
      %s41 = sphi 0, %s38
      %s42 = sphi 0, %s41
      %s58 = sphi 0, %s42
      %s64 = sphi 0, %s66
      %s67 = sphi 0, %s64
      %s68 = sphi 0, %s67
      %s84 = sphi 0, %s68
      %s90 = sphi 0, %s92
      %s93 = sphi 0, %s90
      %s94 = sphi 0, %s93
      %s110 = sphi 0, %s94
      %s118 = sphi 0, %s120
      %s121 = sphi 0, %s118
      %s122 = sphi 0, %s121
      %s138 = sphi 0, %s122
      %s144 = sphi 0, %s146
      %s147 = sphi 0, %s144
      %s148 = sphi 0, %s147
      %s164 = sphi 0, %s148
      %s170 = sphi 0, %s172
      %s173 = sphi 0, %s170
      %s174 = sphi 0, %s173
      %s190 = sphi 0, %s174
    $region4: #{gsu_layer.1} parent=1 // loop_header_branch
      %17 = sbr.rel (%p15) target = $region8
    $region5: #{gsu_layer.1} parent=1 // loop_body
      %s19 = ssub.s32 %s14, 1
      %s20 = ssub.s32 %s14, 2
      %s27 = sadd.s32 1, %s22
      %p28 = scmp.ge.s32.totalorder %s27, 2
      %s29 = scalar_select %p28, 0, %s27
      %s30 = sadd.s32 1, %s21
      %s31 = scalar_select %p28, %s30, %s21
      %p32 = scmp.ge.s32.totalorder %s31, 2
      %s33 = scalar_select %p32, 0, %s31
      %s34 = ssub.s32 %s22, %s29
      %s35 = ssub.s32 %s21, %s33
      %s36 = sor.u32 %s34, %s35
      %p37 = scmp.eq.s32.totalorder %s36, 0
      %s39 = sadd.s32 %s38, 1
      %s40 = scalar_select %p37, %s38, %s39
      %p43 = pneg %p37
      %p44 = scmp.eq.s32.totalorder %s14, 3
      %p45 = por %p43, %p44
      %p46 = scmp.ne.s32.totalorder %s38, %s41
      %p47 = scmp.eq.s32.totalorder %s14, 0
      %p48 = por %p46, %p47
      %p49 = scmp.ne.s32.totalorder %s38, %s41
      %p50 = scmp.eq.s32.totalorder %s19, 3
      %p51 = por %p49, %p50
      %p52 = scmp.ne.s32.totalorder %s41, %s42
      %p53 = scmp.eq.s32.totalorder %s19, 0
      %p54 = por %p52, %p53
      %p55 = scmp.ne.s32.totalorder %s41, %s42
      %p56 = scmp.eq.s32.totalorder %s20, 3
      %p57 = por %p55, %p56
      %p59 = scmp.ne.s32.totalorder %s42, %s58
      %p60 = scmp.eq.s32.totalorder %s20, 0
      %p61 = por %p59, %p60
      %s62 = ssub.s32 %s21, %s33
      %p63 = scmp.eq.s32.totalorder %s62, 0
      %s65 = sadd.s32 %s64, 1
      %s66 = scalar_select %p63, %s64, %s65
      %p69 = pneg %p63
      %p70 = scmp.eq.s32.totalorder %s14, 3
      %p71 = por %p69, %p70
      %p72 = scmp.ne.s32.totalorder %s64, %s67
      %p73 = scmp.eq.s32.totalorder %s14, 0
      %p74 = por %p72, %p73
      %p75 = scmp.ne.s32.totalorder %s64, %s67
      %p76 = scmp.eq.s32.totalorder %s19, 3
      %p77 = por %p75, %p76
      %p78 = scmp.ne.s32.totalorder %s67, %s68
      %p79 = scmp.eq.s32.totalorder %s19, 0
      %p80 = por %p78, %p79
      %p81 = scmp.ne.s32.totalorder %s67, %s68
      %p82 = scmp.eq.s32.totalorder %s20, 3
      %p83 = por %p81, %p82
      %p85 = scmp.ne.s32.totalorder %s68, %s84
      %p86 = scmp.eq.s32.totalorder %s20, 0
      %p87 = por %p85, %p86
      %s88 = ssub.s32 %s21, %s33
      %p89 = scmp.eq.s32.totalorder %s88, 0
      %s91 = sadd.s32 %s90, 1
      %s92 = scalar_select %p89, %s90, %s91
      %p95 = pneg %p89
      %p96 = scmp.eq.s32.totalorder %s14, 3
      %p97 = por %p95, %p96
      %p98 = scmp.ne.s32.totalorder %s90, %s93
      %p99 = scmp.eq.s32.totalorder %s14, 0
      %p100 = por %p98, %p99
      %p101 = scmp.ne.s32.totalorder %s90, %s93
      %p102 = scmp.eq.s32.totalorder %s19, 3
      %p103 = por %p101, %p102
      %p104 = scmp.ne.s32.totalorder %s93, %s94
      %p105 = scmp.eq.s32.totalorder %s19, 0
      %p106 = por %p104, %p105
      %p107 = scmp.ne.s32.totalorder %s93, %s94
      %p108 = scmp.eq.s32.totalorder %s20, 3
      %p109 = por %p107, %p108
      %p111 = scmp.ne.s32.totalorder %s94, %s110
      %p112 = scmp.eq.s32.totalorder %s20, 0
      %p113 = por %p111, %p112
      %s114 = ssub.s32 %s22, %s29
      %s115 = ssub.s32 %s21, %s33
      %s116 = sor.u32 %s114, %s115
      %p117 = scmp.eq.s32.totalorder %s116, 0
      %s119 = sadd.s32 %s118, 1
      %s120 = scalar_select %p117, %s118, %s119
      %p123 = pneg %p117
      %p124 = scmp.eq.s32.totalorder %s14, 3
      %p125 = por %p123, %p124
      %p126 = scmp.ne.s32.totalorder %s118, %s121
      %p127 = scmp.eq.s32.totalorder %s14, 0
      %p128 = por %p126, %p127
      %p129 = scmp.ne.s32.totalorder %s118, %s121
      %p130 = scmp.eq.s32.totalorder %s19, 3
      %p131 = por %p129, %p130
      %p132 = scmp.ne.s32.totalorder %s121, %s122
      %p133 = scmp.eq.s32.totalorder %s19, 0
      %p134 = por %p132, %p133
      %p135 = scmp.ne.s32.totalorder %s121, %s122
      %p136 = scmp.eq.s32.totalorder %s20, 3
      %p137 = por %p135, %p136
      %p139 = scmp.ne.s32.totalorder %s122, %s138
      %p140 = scmp.eq.s32.totalorder %s20, 0
      %p141 = por %p139, %p140
      %s142 = ssub.s32 %s21, %s33
      %p143 = scmp.eq.s32.totalorder %s142, 0
      %s145 = sadd.s32 %s144, 1
      %s146 = scalar_select %p143, %s144, %s145
      %p149 = pneg %p143
      %p150 = scmp.eq.s32.totalorder %s14, 3
      %p151 = por %p149, %p150
      %p152 = scmp.ne.s32.totalorder %s144, %s147
      %p153 = scmp.eq.s32.totalorder %s14, 0
      %p154 = por %p152, %p153
      %p155 = scmp.ne.s32.totalorder %s144, %s147
      %p156 = scmp.eq.s32.totalorder %s19, 3
      %p157 = por %p155, %p156
      %p158 = scmp.ne.s32.totalorder %s147, %s148
      %p159 = scmp.eq.s32.totalorder %s19, 0
      %p160 = por %p158, %p159
      %p161 = scmp.ne.s32.totalorder %s147, %s148
      %p162 = scmp.eq.s32.totalorder %s20, 3
      %p163 = por %p161, %p162
      %p165 = scmp.ne.s32.totalorder %s148, %s164
      %p166 = scmp.eq.s32.totalorder %s20, 0
      %p167 = por %p165, %p166
      %s168 = ssub.s32 %s21, %s33
      %p169 = scmp.eq.s32.totalorder %s168, 0
      %s171 = sadd.s32 %s170, 1
      %s172 = scalar_select %p169, %s170, %s171
      %p175 = pneg %p169
      %p176 = scmp.eq.s32.totalorder %s14, 3
      %p177 = por %p175, %p176
      %p178 = scmp.ne.s32.totalorder %s170, %s173
      %p179 = scmp.eq.s32.totalorder %s14, 0
      %p180 = por %p178, %p179
      %p181 = scmp.ne.s32.totalorder %s170, %s173
      %p182 = scmp.eq.s32.totalorder %s19, 3
      %p183 = por %p181, %p182
      %p184 = scmp.ne.s32.totalorder %s173, %s174
      %p185 = scmp.eq.s32.totalorder %s19, 0
      %p186 = por %p184, %p185
      %p187 = scmp.ne.s32.totalorder %s173, %s174
      %p188 = scmp.eq.s32.totalorder %s20, 3
      %p189 = por %p187, %p188
      %p191 = scmp.ne.s32.totalorder %s174, %s190
      %p192 = scmp.eq.s32.totalorder %s20, 0
      %p193 = por %p191, %p192
      %p194 = scmp.le.s32.totalorder 1, %s14
      %p195 = scmp.lt.s32.totalorder %s14, 5
      %p196 = pnand %p194, %p195
      %p197 = pneg %p196
      // Predicated region
      $region9: #{gsu_layer.1} parent=5 // pred_check
        _
      $region10: #{gsu_layer.1} parent=5 // pred_check_branch
        %199 = sbr.rel (%p196) target = $region12
      $region11: #{gsu_layer.1} parent=5 // pred_region
        %s200 = ssub.s32 %s14, 1
      $region12: #{gsu_layer.1} parent=5 // pred_fallthru
        _
      %p201 = scmp.lt.s32.totalorder %s14, 4
      // Predicated region
      $region13: #{gsu_layer.1} parent=5 // pred_check
        %p202 = pneg %p201
      $region14: #{gsu_layer.1} parent=5 // pred_check_branch
        %204 = sbr.rel (%p202) target = $region16
      $region15: #{gsu_layer.1} parent=5 // pred_region
        // Predicated region
        $region17: #{gsu_layer.1} parent=15 // pred_check
          %p205 = pneg %p48
        $region18: #{gsu_layer.1} parent=15 // pred_check_branch
          %207 = sbr.rel (%p205) target = $region20
        $region19: #{gsu_layer.1} parent=15 // pred_region
          %s208 = sand.u32 %s38, 1
          %s209 = sand.u32 %s38, 1
          %s210 = smul.addr %s209, 256
          %s211 = scalar_lea.vmem [#allocation6], %s210
          %s212 = smul.u32 16, %s22
          %s213 = smul.u32 2, %s21
          %s214 = smul.addr %s212, 4
          %s215 = sadd.s32 %s213, %s214
          %s216 = smul.addr %s215, 8
          %s217 = scalar_lea.vmem %s0, %s216
          // Predicated region
          $region21: #{gsu_layer.1} parent=19 // pred_check
            _
          $region22: #{gsu_layer.1} parent=19 // pred_check_branch
            %219 = sbr.rel (0) target = $region24
          $region23: #{gsu_layer.1} parent=19 // pred_region
            // Predicated region
            $region25: #{gsu_layer.1} parent=23 // pred_check
              _
            $region26: #{gsu_layer.1} parent=23 // pred_check_branch
              %221 = sbr.rel (0) target = $region28
            $region27: #{gsu_layer.1} parent=23 // pred_region
              // Predicated region
              $region40: #{gsu_layer.1} parent=27 // pred_check
                _
              $region41: #{gsu_layer.1} parent=27 // pred_check_branch
                %298 = sbr.rel (0) target = $region43
              $region42: #{gsu_layer.1} parent=27 // pred_region
                loop: start=0, step=1, limit=1
                $region44: #{gsu_layer.1} parent=42 // loop_pre_header
                  _
                $region45: #{gsu_layer.1} parent=42 // loop_header
                  %s300 = sphi 0, %s304
                  %p301 = scmp.ge.s32.totalorder %s300, 1
                  %s305 = sphi %s217, %s217
                  %s306 = sphi %s211, %s211
                $region46: #{gsu_layer.1} parent=42 // loop_header_branch
                  %303 = sbr.rel (%p301) target = $region50
                $region47: #{gsu_layer.1} parent=42 // loop_body
                  %v307 = vld [vmem:[%s305] sm:$0xff]
                  %308 = vst [vmem:[%s306] sm:$0xff] %v307
                  %v309 = vld [vmem:[%s305 + $0x8] sm:$0xff]
                  %310 = vst [vmem:[%s306 + $0x8] sm:$0xff] %v309
                  %v311 = vld [vmem:[%s305 + $0x20] sm:$0xff]
                  %312 = vst [vmem:[%s306 + $0x10] sm:$0xff] %v311
                  %v313 = vld [vmem:[%s305 + $0x28] sm:$0xff]
                  %314 = vst [vmem:[%s306 + $0x18] sm:$0xff] %v313
                  %v315 = vld [vmem:[%s305 + $0x40] sm:$0xff]
                  %316 = vst [vmem:[%s306 + $0x20] sm:$0xff] %v315
                  %v317 = vld [vmem:[%s305 + $0x48] sm:$0xff]
                  %318 = vst [vmem:[%s306 + $0x28] sm:$0xff] %v317
                  %v319 = vld [vmem:[%s305 + $0x60] sm:$0xff]
                  %320 = vst [vmem:[%s306 + $0x30] sm:$0xff] %v319
                  %v321 = vld [vmem:[%s305 + $0x68] sm:$0xff]
                  %322 = vst [vmem:[%s306 + $0x38] sm:$0xff] %v321
                  %v323 = vld [vmem:[%s305 + $0x80] sm:$0xff]
                  %324 = vst [vmem:[%s306 + $0x40] sm:$0xff] %v323
                  %v325 = vld [vmem:[%s305 + $0x88] sm:$0xff]
                  %326 = vst [vmem:[%s306 + $0x48] sm:$0xff] %v325
                  %v327 = vld [vmem:[%s305 + $0xa0] sm:$0xff]
                  %328 = vst [vmem:[%s306 + $0x50] sm:$0xff] %v327
                  %v329 = vld [vmem:[%s305 + $0xa8] sm:$0xff]
                  %330 = vst [vmem:[%s306 + $0x58] sm:$0xff] %v329
                  %v331 = vld [vmem:[%s305 + $0xc0] sm:$0xff]
                  %332 = vst [vmem:[%s306 + $0x60] sm:$0xff] %v331
                  %v333 = vld [vmem:[%s305 + $0xc8] sm:$0xff]
                  %334 = vst [vmem:[%s306 + $0x68] sm:$0xff] %v333
                  %v335 = vld [vmem:[%s305 + $0xe0] sm:$0xff]
                  %336 = vst [vmem:[%s306 + $0x70] sm:$0xff] %v335
                  %v337 = vld [vmem:[%s305 + $0xe8] sm:$0xff]
                  %338 = vst [vmem:[%s306 + $0x78] sm:$0xff] %v337
                  %v339 = vld [vmem:[%s305 + $0x100] sm:$0xff]
                  %340 = vst [vmem:[%s306 + $0x80] sm:$0xff] %v339
                  %v341 = vld [vmem:[%s305 + $0x108] sm:$0xff]
                  %342 = vst [vmem:[%s306 + $0x88] sm:$0xff] %v341
                  %v343 = vld [vmem:[%s305 + $0x120] sm:$0xff]
                  %344 = vst [vmem:[%s306 + $0x90] sm:$0xff] %v343
                  %v345 = vld [vmem:[%s305 + $0x128] sm:$0xff]
                  %346 = vst [vmem:[%s306 + $0x98] sm:$0xff] %v345
                  %v347 = vld [vmem:[%s305 + $0x140] sm:$0xff]
                  %348 = vst [vmem:[%s306 + $0xa0] sm:$0xff] %v347
                  %v349 = vld [vmem:[%s305 + $0x148] sm:$0xff]
                  %350 = vst [vmem:[%s306 + $0xa8] sm:$0xff] %v349
                  %v351 = vld [vmem:[%s305 + $0x160] sm:$0xff]
                  %352 = vst [vmem:[%s306 + $0xb0] sm:$0xff] %v351
                  %v353 = vld [vmem:[%s305 + $0x168] sm:$0xff]
                  %354 = vst [vmem:[%s306 + $0xb8] sm:$0xff] %v353
                  %v355 = vld [vmem:[%s305 + $0x180] sm:$0xff]
                  %356 = vst [vmem:[%s306 + $0xc0] sm:$0xff] %v355
                  %v357 = vld [vmem:[%s305 + $0x188] sm:$0xff]
                  %358 = vst [vmem:[%s306 + $0xc8] sm:$0xff] %v357
                  %v359 = vld [vmem:[%s305 + $0x1a0] sm:$0xff]
                  %360 = vst [vmem:[%s306 + $0xd0] sm:$0xff] %v359
                  %v361 = vld [vmem:[%s305 + $0x1a8] sm:$0xff]
                  %362 = vst [vmem:[%s306 + $0xd8] sm:$0xff] %v361
                  %v363 = vld [vmem:[%s305 + $0x1c0] sm:$0xff]
                  %364 = vst [vmem:[%s306 + $0xe0] sm:$0xff] %v363
                  %v365 = vld [vmem:[%s305 + $0x1c8] sm:$0xff]
                  %366 = vst [vmem:[%s306 + $0xe8] sm:$0xff] %v365
                  %v367 = vld [vmem:[%s305 + $0x1e0] sm:$0xff]
                  %368 = vst [vmem:[%s306 + $0xf0] sm:$0xff] %v367
                  %v369 = vld [vmem:[%s305 + $0x1e8] sm:$0xff]
                  %370 = vst [vmem:[%s306 + $0xf8] sm:$0xff] %v369
                $region48: #{gsu_layer.1} parent=42 // loop_footer
                  %s304 = sadd.s32 1, %s300
                $region49: #{gsu_layer.1} parent=42 // loop_footer_branch
                  %299 = sbr.rel target = $region45
                $region50: #{gsu_layer.1} parent=42 // loop_exit
                  _
              $region43: #{gsu_layer.1} parent=27 // pred_fallthru
                _
              // Predicated region
              $region51: #{gsu_layer.1} parent=27 // pred_check
                _
              $region52: #{gsu_layer.1} parent=27 // pred_check_branch
                %372 = sbr.rel target = $region54
              $region53: #{gsu_layer.1} parent=27 // pred_region
                _
              $region54: #{gsu_layer.1} parent=27 // pred_fallthru
                _
            $region28: #{gsu_layer.1} parent=23 // pred_fallthru
              _
            // Predicated region
            $region29: #{gsu_layer.1} parent=23 // pred_check
              _
            $region30: #{gsu_layer.1} parent=23 // pred_check_branch
              %223 = sbr.rel target = $region32
            $region31: #{gsu_layer.1} parent=23 // pred_region
              loop: start=0, step=1, limit=1
              $region33: #{gsu_layer.1} parent=31 // loop_pre_header
                _
              $region34: #{gsu_layer.1} parent=31 // loop_header
                %s226 = sphi 0, %s230
                %p227 = scmp.ge.s32.totalorder %s226, 1
                %s231 = sphi %s217, %s217
                %s232 = sphi %s211, %s211
              $region35: #{gsu_layer.1} parent=31 // loop_header_branch
                %229 = sbr.rel (%p227) target = $region39
              $region36: #{gsu_layer.1} parent=31 // loop_body
                %v233 = vld [vmem:[%s231] sm:$0xff]
                %234 = vst [vmem:[%s232] sm:$0xff] %v233
                %v235 = vld [vmem:[%s231 + $0x8] sm:$0xff]
                %236 = vst [vmem:[%s232 + $0x8] sm:$0xff] %v235
                %v237 = vld [vmem:[%s231 + $0x20] sm:$0xff]
                %238 = vst [vmem:[%s232 + $0x10] sm:$0xff] %v237
                %v239 = vld [vmem:[%s231 + $0x28] sm:$0xff]
                %240 = vst [vmem:[%s232 + $0x18] sm:$0xff] %v239
                %v241 = vld [vmem:[%s231 + $0x40] sm:$0xff]
                %242 = vst [vmem:[%s232 + $0x20] sm:$0xff] %v241
                %v243 = vld [vmem:[%s231 + $0x48] sm:$0xff]
                %244 = vst [vmem:[%s232 + $0x28] sm:$0xff] %v243
                %v245 = vld [vmem:[%s231 + $0x60] sm:$0xff]
                %246 = vst [vmem:[%s232 + $0x30] sm:$0xff] %v245
                %v247 = vld [vmem:[%s231 + $0x68] sm:$0xff]
                %248 = vst [vmem:[%s232 + $0x38] sm:$0xff] %v247
                %v249 = vld [vmem:[%s231 + $0x80] sm:$0xff]
                %250 = vst [vmem:[%s232 + $0x40] sm:$0xff] %v249
                %v251 = vld [vmem:[%s231 + $0x88] sm:$0xff]
                %252 = vst [vmem:[%s232 + $0x48] sm:$0xff] %v251
                %v253 = vld [vmem:[%s231 + $0xa0] sm:$0xff]
                %254 = vst [vmem:[%s232 + $0x50] sm:$0xff] %v253
                %v255 = vld [vmem:[%s231 + $0xa8] sm:$0xff]
                %256 = vst [vmem:[%s232 + $0x58] sm:$0xff] %v255
                %v257 = vld [vmem:[%s231 + $0xc0] sm:$0xff]
                %258 = vst [vmem:[%s232 + $0x60] sm:$0xff] %v257
                %v259 = vld [vmem:[%s231 + $0xc8] sm:$0xff]
                %260 = vst [vmem:[%s232 + $0x68] sm:$0xff] %v259
                %v261 = vld [vmem:[%s231 + $0xe0] sm:$0xff]
                %262 = vst [vmem:[%s232 + $0x70] sm:$0xff] %v261
                %v263 = vld [vmem:[%s231 + $0xe8] sm:$0xff]
                %264 = vst [vmem:[%s232 + $0x78] sm:$0xff] %v263
                %v265 = vld [vmem:[%s231 + $0x100] sm:$0xff]
                %266 = vst [vmem:[%s232 + $0x80] sm:$0xff] %v265
                %v267 = vld [vmem:[%s231 + $0x108] sm:$0xff]
                %268 = vst [vmem:[%s232 + $0x88] sm:$0xff] %v267
                %v269 = vld [vmem:[%s231 + $0x120] sm:$0xff]
                %270 = vst [vmem:[%s232 + $0x90] sm:$0xff] %v269
                %v271 = vld [vmem:[%s231 + $0x128] sm:$0xff]
                %272 = vst [vmem:[%s232 + $0x98] sm:$0xff] %v271
                %v273 = vld [vmem:[%s231 + $0x140] sm:$0xff]
                %274 = vst [vmem:[%s232 + $0xa0] sm:$0xff] %v273
                %v275 = vld [vmem:[%s231 + $0x148] sm:$0xff]
                %276 = vst [vmem:[%s232 + $0xa8] sm:$0xff] %v275
                %v277 = vld [vmem:[%s231 + $0x160] sm:$0xff]
                %278 = vst [vmem:[%s232 + $0xb0] sm:$0xff] %v277
                %v279 = vld [vmem:[%s231 + $0x168] sm:$0xff]
                %280 = vst [vmem:[%s232 + $0xb8] sm:$0xff] %v279
                %v281 = vld [vmem:[%s231 + $0x180] sm:$0xff]
                %282 = vst [vmem:[%s232 + $0xc0] sm:$0xff] %v281
                %v283 = vld [vmem:[%s231 + $0x188] sm:$0xff]
                %284 = vst [vmem:[%s232 + $0xc8] sm:$0xff] %v283
                %v285 = vld [vmem:[%s231 + $0x1a0] sm:$0xff]
                %286 = vst [vmem:[%s232 + $0xd0] sm:$0xff] %v285
                %v287 = vld [vmem:[%s231 + $0x1a8] sm:$0xff]
                %288 = vst [vmem:[%s232 + $0xd8] sm:$0xff] %v287
                %v289 = vld [vmem:[%s231 + $0x1c0] sm:$0xff]
                %290 = vst [vmem:[%s232 + $0xe0] sm:$0xff] %v289
                %v291 = vld [vmem:[%s231 + $0x1c8] sm:$0xff]
                %292 = vst [vmem:[%s232 + $0xe8] sm:$0xff] %v291
                %v293 = vld [vmem:[%s231 + $0x1e0] sm:$0xff]
                %294 = vst [vmem:[%s232 + $0xf0] sm:$0xff] %v293
                %v295 = vld [vmem:[%s231 + $0x1e8] sm:$0xff]
                %296 = vst [vmem:[%s232 + $0xf8] sm:$0xff] %v295
              $region37: #{gsu_layer.1} parent=31 // loop_footer
                %s230 = sadd.s32 1, %s226
              $region38: #{gsu_layer.1} parent=31 // loop_footer_branch
                %225 = sbr.rel target = $region34
              $region39: #{gsu_layer.1} parent=31 // loop_exit
                _
            $region32: #{gsu_layer.1} parent=23 // pred_fallthru
              _
          $region24: #{gsu_layer.1} parent=19 // pred_fallthru
            _
          %373 = vnop
        $region20: #{gsu_layer.1} parent=15 // pred_fallthru
          _
        // Predicated region
        $region55: #{gsu_layer.1} parent=15 // pred_check
          %p374 = pneg %p74
        $region56: #{gsu_layer.1} parent=15 // pred_check_branch
          %376 = sbr.rel (%p374) target = $region58
        $region57: #{gsu_layer.1} parent=15 // pred_region
          %s377 = smul.u32 2, %s21
          %p378 = scmp.lt.s32.totalorder %s377, 3
          %s379 = scalar_select %p378, %s377, 3
          %s380 = smul.addr %s379, 4
          %s381 = scalar_lea.vmem %s3, %s380
          %s382 = smul.u32 2, %s21
        $region58: #{gsu_layer.1} parent=15 // pred_fallthru
          _
        // Predicated region
        $region59: #{gsu_layer.1} parent=15 // pred_check
          %p383 = pneg %p100
        $region60: #{gsu_layer.1} parent=15 // pred_check_branch
          %385 = sbr.rel (%p383) target = $region62
        $region61: #{gsu_layer.1} parent=15 // pred_region
          %s386 = smul.u32 2, %s21
          %p387 = scmp.lt.s32.totalorder %s386, 3
          %s388 = scalar_select %p387, %s386, 3
          %s389 = smul.addr %s388, 8
          %s390 = scalar_lea.vmem %s4, %s389
          %s391 = smul.u32 2, %s21
        $region62: #{gsu_layer.1} parent=15 // pred_fallthru
          _
      $region16: #{gsu_layer.1} parent=5 // pred_fallthru
        _
      %p392 = scmp.le.s32.totalorder 1, %s14
      %p393 = scmp.lt.s32.totalorder %s14, 5
      %p394 = pnand %p392, %p393
      %p395 = pneg %p394
      // Predicated region
      $region63: #{gsu_layer.1} parent=5 // pred_check
        _
      $region64: #{gsu_layer.1} parent=5 // pred_check_branch
        %397 = sbr.rel (%p394) target = $region66
      $region65: #{gsu_layer.1} parent=5 // pred_region
        %s398 = ssub.s32 %s14, 1
        %s399 = sand.u32 %s41, 1
        %s400 = sand.u32 %s41, 1
        %s401 = smul.addr %s400, 256
        %s402 = scalar_lea.vmem [#allocation6], %s401
        // Predicated region
        $region67: #{gsu_layer.1} parent=65 // pred_check
          %p403 = pneg %p54
        $region68: #{gsu_layer.1} parent=65 // pred_check_branch
          %405 = sbr.rel (%p403) target = $region70
        $region69: #{gsu_layer.1} parent=65 // pred_region
          _
        $region70: #{gsu_layer.1} parent=65 // pred_fallthru
          _
        %s406 = sand.u32 %s41, 1
        %s407 = sand.u32 %s41, 1
        %s408 = smul.addr %s407, 256
        %s409 = scalar_lea.vmem [#allocation6], %s408
        %p410 = pneg %p54
        %p411 = pneg %p51
        %s412 = smul.u32 2, %s23
        %p413 = scmp.lt.s32.totalorder %s412, 3
        %s414 = scalar_select %p413, %s412, 3
        %s415 = smul.addr %s414, 4
        %s416 = scalar_lea.vmem %s3, %s415
        %p417 = pneg %p80
        %p418 = pneg %p77
        %s419 = smul.u32 2, %s23
        %p420 = scmp.lt.s32.totalorder %s419, 3
        %s421 = scalar_select %p420, %s419, 3
        %s422 = smul.addr %s421, 8
        %s423 = scalar_lea.vmem %s4, %s422
        %p424 = pneg %p106
        %p425 = pneg %p103
        %p426 = pneg %p134
        %p427 = pneg %p131
        %s428 = sand.u32 %s121, 1
        %s429 = sand.u32 %s121, 1
        %s430 = smul.addr %s429, 256
        %s431 = scalar_lea.vmem [#allocation7], %s430
        %p432 = pneg %p160
        %p433 = pneg %p157
        %s434 = smul.u32 2, %s23
        %p435 = scmp.lt.s32.totalorder %s434, 3
        %s436 = scalar_select %p435, %s434, 3
        %s437 = smul.addr %s436, 4
        %s438 = scalar_lea.vmem %s6, %s437
        %p439 = pneg %p186
        %p440 = pneg %p183
        %s441 = smul.u32 2, %s23
        %p442 = scmp.lt.s32.totalorder %s441, 3
        %s443 = scalar_select %p442, %s441, 3
        %s444 = smul.addr %s443, 8
        %s445 = scalar_lea.vmem %s7, %s444
        %s446 = smul.u32 16, %s24
        %s447 = smul.u32 2, %s23
        %s448 = smul.u32 2, %s23
        %p449 = scmp.lt.s32.totalorder %s448, 3
        %s450 = scalar_select %p449, %s448, 3
        %s451 = smul.addr %s450, 4
        %s452 = scalar_lea.vmem %s3, %s451
        %s453 = smul.u32 2, %s23
        %s454 = smul.u32 2, %s23
        %p455 = scmp.lt.s32.totalorder %s454, 3
        %s456 = scalar_select %p455, %s454, 3
        %s457 = smul.addr %s456, 8
        %s458 = scalar_lea.vmem %s4, %s457
        %s459 = smul.u32 2, %s23
        %s460 = smul.u32 16, %s24
        %s461 = smul.u32 2, %s23
        %s462 = smul.u32 2, %s23
        %p463 = scmp.lt.s32.totalorder %s462, 3
        %s464 = scalar_select %p463, %s462, 3
        %s465 = smul.addr %s464, 4
        %s466 = scalar_lea.vmem %s6, %s465
        %s467 = smul.u32 2, %s23
        %s468 = smul.u32 2, %s23
        %p469 = scmp.lt.s32.totalorder %s468, 3
        %s470 = scalar_select %p469, %s468, 3
        %s471 = smul.addr %s470, 8
        %s472 = scalar_lea.vmem %s7, %s471
        %s473 = smul.u32 2, %s23
        %p475 = scmp.eq.s32.totalorder %s24, 0
        // Predicated region
        $region71: #{gsu_layer.1} parent=65 // pred_check
          %p476 = pneg %p475
        $region72: #{gsu_layer.1} parent=65 // pred_check_branch
          %478 = sbr.rel (%p476) target = $region74
        $region73: #{gsu_layer.1} parent=65 // pred_region
          %p480 = scmp.lt.u32.totalorder 4, 8
          %p481 = pneg %p480
          // Predicated region
          $region75: #{gsu_layer.1} parent=73 // pred_check
            _
          $region76: #{gsu_layer.1} parent=73 // pred_check_branch
            %483 = sbr.rel (%p480) target = $region78
          $region77: #{gsu_layer.1} parent=73 // pred_region
            %s512 = sand.u32 4, 7
            %p513 = scmp.eq.s32.totalorder %s512, 0
            %p514 = pneg %p513
            // Predicated region
            $region90: #{gsu_layer.1} parent=77 // pred_check
              _
            $region91: #{gsu_layer.1} parent=77 // pred_check_branch
              %516 = sbr.rel (%p513) target = $region93
            $region92: #{gsu_layer.1} parent=77 // pred_region
              %s517 = sand.u32 4, 7
              %s518 = ssub.s32 4, %s517
              %s519 = scalar_lea.vmem %s1, %s518
              %s520 = ssub.s32 4, %s517
              %s521 = scalar_lea.vmem [#allocation2], %s520
              loop: start=0, step=1, limit=1
              $region94: #{gsu_layer.1} parent=92 // loop_pre_header
                _
              $region95: #{gsu_layer.1} parent=92 // loop_header
                %s523 = sphi 0, %s527
                %p524 = scmp.ge.s32.totalorder %s523, 1
                %s528 = sphi %s1, %s1
                %s529 = sphi [#allocation2], [#allocation2]
              $region96: #{gsu_layer.1} parent=92 // loop_header_branch
                %526 = sbr.rel (%p524) target = $region100
              $region97: #{gsu_layer.1} parent=92 // loop_body
                _
              $region98: #{gsu_layer.1} parent=92 // loop_footer
                %s527 = sadd.s32 1, %s523
              $region99: #{gsu_layer.1} parent=92 // loop_footer_branch
                %522 = sbr.rel target = $region95
              $region100: #{gsu_layer.1} parent=92 // loop_exit
                _
              %s530 = sshllo.u32 0, %s517
              loop: start=0, step=1, limit=1
              $region101: #{gsu_layer.1} parent=92 // loop_pre_header
                _
              $region102: #{gsu_layer.1} parent=92 // loop_header
                %s532 = sphi 0, %s536
                %p533 = scmp.ge.s32.totalorder %s532, 1
                %s537 = sphi %s519, %s519
                %s538 = sphi %s521, %s521
              $region103: #{gsu_layer.1} parent=92 // loop_header_branch
                %535 = sbr.rel (%p533) target = $region107
              $region104: #{gsu_layer.1} parent=92 // loop_body
                %v539 = vld [vmem:[%s537] sm:%s530]
                %540 = vst [vmem:[%s538] sm:%s530] %v539
                %v541 = vld [vmem:[%s537 + $0x8] sm:%s530]
                %542 = vst [vmem:[%s538 + $0x4] sm:%s530] %v541
                %v543 = vld [vmem:[%s537 + $0x4] sm:%s530]
                %544 = vst [vmem:[%s538 + $0x8] sm:%s530] %v543
                %v545 = vld [vmem:[%s537 + $0xc] sm:%s530]
                %546 = vst [vmem:[%s538 + $0xc] sm:%s530] %v545
                %v547 = vld [vmem:[%s537 + $0x10] sm:%s530]
                %548 = vst [vmem:[%s538 + $0x10] sm:%s530] %v547
                %v549 = vld [vmem:[%s537 + $0x18] sm:%s530]
                %550 = vst [vmem:[%s538 + $0x14] sm:%s530] %v549
                %v551 = vld [vmem:[%s537 + $0x14] sm:%s530]
                %552 = vst [vmem:[%s538 + $0x18] sm:%s530] %v551
                %v553 = vld [vmem:[%s537 + $0x1c] sm:%s530]
                %554 = vst [vmem:[%s538 + $0x1c] sm:%s530] %v553
              $region105: #{gsu_layer.1} parent=92 // loop_footer
                %s536 = sadd.s32 1, %s532
              $region106: #{gsu_layer.1} parent=92 // loop_footer_branch
                %531 = sbr.rel target = $region102
              $region107: #{gsu_layer.1} parent=92 // loop_exit
                _
            $region93: #{gsu_layer.1} parent=77 // pred_fallthru
              _
          $region78: #{gsu_layer.1} parent=73 // pred_fallthru
            _
          // Predicated region
          $region79: #{gsu_layer.1} parent=73 // pred_check
            %p484 = pneg %p480
          $region80: #{gsu_layer.1} parent=73 // pred_check_branch
            %486 = sbr.rel (%p484) target = $region82
          $region81: #{gsu_layer.1} parent=73 // pred_region
            %s487 = sshllo.u32 0, 4
            loop: start=0, step=1, limit=1
            $region83: #{gsu_layer.1} parent=81 // loop_pre_header
              _
            $region84: #{gsu_layer.1} parent=81 // loop_header
              %s489 = sphi 0, %s493
              %p490 = scmp.ge.s32.totalorder %s489, 1
              %s494 = sphi %s1, %s1
              %s495 = sphi [#allocation2], [#allocation2]
            $region85: #{gsu_layer.1} parent=81 // loop_header_branch
              %492 = sbr.rel (%p490) target = $region89
            $region86: #{gsu_layer.1} parent=81 // loop_body
              %v496 = vld [vmem:[%s494] sm:%s487]
              %497 = vst [vmem:[%s495] sm:%s487] %v496
              %v498 = vld [vmem:[%s494 + $0x8] sm:%s487]
              %499 = vst [vmem:[%s495 + $0x4] sm:%s487] %v498
              %v500 = vld [vmem:[%s494 + $0x4] sm:%s487]
              %501 = vst [vmem:[%s495 + $0x8] sm:%s487] %v500
              %v502 = vld [vmem:[%s494 + $0xc] sm:%s487]
              %503 = vst [vmem:[%s495 + $0xc] sm:%s487] %v502
              %v504 = vld [vmem:[%s494 + $0x10] sm:%s487]
              %505 = vst [vmem:[%s495 + $0x10] sm:%s487] %v504
              %v506 = vld [vmem:[%s494 + $0x18] sm:%s487]
              %507 = vst [vmem:[%s495 + $0x14] sm:%s487] %v506
              %v508 = vld [vmem:[%s494 + $0x14] sm:%s487]
              %509 = vst [vmem:[%s495 + $0x18] sm:%s487] %v508
              %v510 = vld [vmem:[%s494 + $0x1c] sm:%s487]
              %511 = vst [vmem:[%s495 + $0x1c] sm:%s487] %v510
            $region87: #{gsu_layer.1} parent=81 // loop_footer
              %s493 = sadd.s32 1, %s489
            $region88: #{gsu_layer.1} parent=81 // loop_footer_branch
              %488 = sbr.rel target = $region84
            $region89: #{gsu_layer.1} parent=81 // loop_exit
              _
          $region82: #{gsu_layer.1} parent=73 // pred_fallthru
            _
          // Predicated region
          $region108: #{gsu_layer.1} parent=73 // pred_check
            _
          $region109: #{gsu_layer.1} parent=73 // pred_check_branch
            %557 = sbr.rel (0) target = $region111
          $region110: #{gsu_layer.1} parent=73 // pred_region
            %558 = vsyncadd [#allocation5], 512
          $region111: #{gsu_layer.1} parent=73 // pred_fallthru
            _
          %s559 = scalar_lea.sflag [#allocation5], 1
          %p561 = scmp.lt.u32.totalorder 4, 8
          %p562 = pneg %p561
          // Predicated region
          $region112: #{gsu_layer.1} parent=73 // pred_check
            _
          $region113: #{gsu_layer.1} parent=73 // pred_check_branch
            %564 = sbr.rel (%p561) target = $region115
          $region114: #{gsu_layer.1} parent=73 // pred_region
            %s641 = sand.u32 4, 7
            %p642 = scmp.eq.s32.totalorder %s641, 0
            %p643 = pneg %p642
            // Predicated region
            $region127: #{gsu_layer.1} parent=114 // pred_check
              _
            $region128: #{gsu_layer.1} parent=114 // pred_check_branch
              %645 = sbr.rel (%p642) target = $region130
            $region129: #{gsu_layer.1} parent=114 // pred_region
              %s646 = sand.u32 4, 7
              %s647 = ssub.s32 4, %s646
              %s648 = scalar_lea.vmem %s2, %s647
              %s649 = ssub.s32 4, %s646
              %s650 = scalar_lea.vmem [#allocation3], %s649
              loop: start=0, step=1, limit=1
              $region131: #{gsu_layer.1} parent=129 // loop_pre_header
                _
              $region132: #{gsu_layer.1} parent=129 // loop_header
                %s652 = sphi 0, %s656
                %p653 = scmp.ge.s32.totalorder %s652, 1
                %s657 = sphi %s2, %s2
                %s658 = sphi [#allocation3], [#allocation3]
              $region133: #{gsu_layer.1} parent=129 // loop_header_branch
                %655 = sbr.rel (%p653) target = $region137
              $region134: #{gsu_layer.1} parent=129 // loop_body
                _
              $region135: #{gsu_layer.1} parent=129 // loop_footer
                %s656 = sadd.s32 1, %s652
              $region136: #{gsu_layer.1} parent=129 // loop_footer_branch
                %651 = sbr.rel target = $region132
              $region137: #{gsu_layer.1} parent=129 // loop_exit
                _
              %s659 = sshllo.u32 0, %s646
              loop: start=0, step=1, limit=1
              $region138: #{gsu_layer.1} parent=129 // loop_pre_header
                _
              $region139: #{gsu_layer.1} parent=129 // loop_header
                %s661 = sphi 0, %s665
                %p662 = scmp.ge.s32.totalorder %s661, 1
                %s666 = sphi %s648, %s648
                %s667 = sphi %s650, %s650
              $region140: #{gsu_layer.1} parent=129 // loop_header_branch
                %664 = sbr.rel (%p662) target = $region144
              $region141: #{gsu_layer.1} parent=129 // loop_body
                %v668 = vld [vmem:[%s666] sm:%s659]
                %669 = vst [vmem:[%s667] sm:%s659] %v668
                %v670 = vld [vmem:[%s666 + $0x8] sm:%s659]
                %671 = vst [vmem:[%s667 + $0x4] sm:%s659] %v670
                %v672 = vld [vmem:[%s666 + $0x4] sm:%s659]
                %673 = vst [vmem:[%s667 + $0x8] sm:%s659] %v672
                %v674 = vld [vmem:[%s666 + $0xc] sm:%s659]
                %675 = vst [vmem:[%s667 + $0xc] sm:%s659] %v674
                %v676 = vld [vmem:[%s666 + $0x10] sm:%s659]
                %677 = vst [vmem:[%s667 + $0x10] sm:%s659] %v676
                %v678 = vld [vmem:[%s666 + $0x18] sm:%s659]
                %679 = vst [vmem:[%s667 + $0x14] sm:%s659] %v678
                %v680 = vld [vmem:[%s666 + $0x14] sm:%s659]
                %681 = vst [vmem:[%s667 + $0x18] sm:%s659] %v680
                %v682 = vld [vmem:[%s666 + $0x1c] sm:%s659]
                %683 = vst [vmem:[%s667 + $0x1c] sm:%s659] %v682
                %v684 = vld [vmem:[%s666 + $0x20] sm:%s659]
                %685 = vst [vmem:[%s667 + $0x20] sm:%s659] %v684
                %v686 = vld [vmem:[%s666 + $0x28] sm:%s659]
                %687 = vst [vmem:[%s667 + $0x24] sm:%s659] %v686
                %v688 = vld [vmem:[%s666 + $0x24] sm:%s659]
                %689 = vst [vmem:[%s667 + $0x28] sm:%s659] %v688
                %v690 = vld [vmem:[%s666 + $0x2c] sm:%s659]
                %691 = vst [vmem:[%s667 + $0x2c] sm:%s659] %v690
                %v692 = vld [vmem:[%s666 + $0x30] sm:%s659]
                %693 = vst [vmem:[%s667 + $0x30] sm:%s659] %v692
                %v694 = vld [vmem:[%s666 + $0x38] sm:%s659]
                %695 = vst [vmem:[%s667 + $0x34] sm:%s659] %v694
                %v696 = vld [vmem:[%s666 + $0x34] sm:%s659]
                %697 = vst [vmem:[%s667 + $0x38] sm:%s659] %v696
                %v698 = vld [vmem:[%s666 + $0x3c] sm:%s659]
                %699 = vst [vmem:[%s667 + $0x3c] sm:%s659] %v698
                %v700 = vld [vmem:[%s666 + $0x40] sm:%s659]
                %701 = vst [vmem:[%s667 + $0x40] sm:%s659] %v700
                %v702 = vld [vmem:[%s666 + $0x48] sm:%s659]
                %703 = vst [vmem:[%s667 + $0x44] sm:%s659] %v702
                %v704 = vld [vmem:[%s666 + $0x44] sm:%s659]
                %705 = vst [vmem:[%s667 + $0x48] sm:%s659] %v704
                %v706 = vld [vmem:[%s666 + $0x4c] sm:%s659]
                %707 = vst [vmem:[%s667 + $0x4c] sm:%s659] %v706
                %v708 = vld [vmem:[%s666 + $0x50] sm:%s659]
                %709 = vst [vmem:[%s667 + $0x50] sm:%s659] %v708
                %v710 = vld [vmem:[%s666 + $0x58] sm:%s659]
                %711 = vst [vmem:[%s667 + $0x54] sm:%s659] %v710
                %v712 = vld [vmem:[%s666 + $0x54] sm:%s659]
                %713 = vst [vmem:[%s667 + $0x58] sm:%s659] %v712
                %v714 = vld [vmem:[%s666 + $0x5c] sm:%s659]
                %715 = vst [vmem:[%s667 + $0x5c] sm:%s659] %v714
                %v716 = vld [vmem:[%s666 + $0x60] sm:%s659]
                %717 = vst [vmem:[%s667 + $0x60] sm:%s659] %v716
                %v718 = vld [vmem:[%s666 + $0x68] sm:%s659]
                %719 = vst [vmem:[%s667 + $0x64] sm:%s659] %v718
                %v720 = vld [vmem:[%s666 + $0x64] sm:%s659]
                %721 = vst [vmem:[%s667 + $0x68] sm:%s659] %v720
                %v722 = vld [vmem:[%s666 + $0x6c] sm:%s659]
                %723 = vst [vmem:[%s667 + $0x6c] sm:%s659] %v722
                %v724 = vld [vmem:[%s666 + $0x70] sm:%s659]
                %725 = vst [vmem:[%s667 + $0x70] sm:%s659] %v724
                %v726 = vld [vmem:[%s666 + $0x78] sm:%s659]
                %727 = vst [vmem:[%s667 + $0x74] sm:%s659] %v726
                %v728 = vld [vmem:[%s666 + $0x74] sm:%s659]
                %729 = vst [vmem:[%s667 + $0x78] sm:%s659] %v728
                %v730 = vld [vmem:[%s666 + $0x7c] sm:%s659]
                %731 = vst [vmem:[%s667 + $0x7c] sm:%s659] %v730
              $region142: #{gsu_layer.1} parent=129 // loop_footer
                %s665 = sadd.s32 1, %s661
              $region143: #{gsu_layer.1} parent=129 // loop_footer_branch
                %660 = sbr.rel target = $region139
              $region144: #{gsu_layer.1} parent=129 // loop_exit
                _
            $region130: #{gsu_layer.1} parent=114 // pred_fallthru
              _
          $region115: #{gsu_layer.1} parent=73 // pred_fallthru
            _
          // Predicated region
          $region116: #{gsu_layer.1} parent=73 // pred_check
            %p565 = pneg %p561
          $region117: #{gsu_layer.1} parent=73 // pred_check_branch
            %567 = sbr.rel (%p565) target = $region119
          $region118: #{gsu_layer.1} parent=73 // pred_region
            %s568 = sshllo.u32 0, 4
            loop: start=0, step=1, limit=1
            $region120: #{gsu_layer.1} parent=118 // loop_pre_header
              _
            $region121: #{gsu_layer.1} parent=118 // loop_header
              %s570 = sphi 0, %s574
              %p571 = scmp.ge.s32.totalorder %s570, 1
              %s575 = sphi %s2, %s2
              %s576 = sphi [#allocation3], [#allocation3]
            $region122: #{gsu_layer.1} parent=118 // loop_header_branch
              %573 = sbr.rel (%p571) target = $region126
            $region123: #{gsu_layer.1} parent=118 // loop_body
              %v577 = vld [vmem:[%s575] sm:%s568]
              %578 = vst [vmem:[%s576] sm:%s568] %v577
              %v579 = vld [vmem:[%s575 + $0x8] sm:%s568]
              %580 = vst [vmem:[%s576 + $0x4] sm:%s568] %v579
              %v581 = vld [vmem:[%s575 + $0x4] sm:%s568]
              %582 = vst [vmem:[%s576 + $0x8] sm:%s568] %v581
              %v583 = vld [vmem:[%s575 + $0xc] sm:%s568]
              %584 = vst [vmem:[%s576 + $0xc] sm:%s568] %v583
              %v585 = vld [vmem:[%s575 + $0x10] sm:%s568]
              %586 = vst [vmem:[%s576 + $0x10] sm:%s568] %v585
              %v587 = vld [vmem:[%s575 + $0x18] sm:%s568]
              %588 = vst [vmem:[%s576 + $0x14] sm:%s568] %v587
              %v589 = vld [vmem:[%s575 + $0x14] sm:%s568]
              %590 = vst [vmem:[%s576 + $0x18] sm:%s568] %v589
              %v591 = vld [vmem:[%s575 + $0x1c] sm:%s568]
              %592 = vst [vmem:[%s576 + $0x1c] sm:%s568] %v591
              %v593 = vld [vmem:[%s575 + $0x20] sm:%s568]
              %594 = vst [vmem:[%s576 + $0x20] sm:%s568] %v593
              %v595 = vld [vmem:[%s575 + $0x28] sm:%s568]
              %596 = vst [vmem:[%s576 + $0x24] sm:%s568] %v595
              %v597 = vld [vmem:[%s575 + $0x24] sm:%s568]
              %598 = vst [vmem:[%s576 + $0x28] sm:%s568] %v597
              %v599 = vld [vmem:[%s575 + $0x2c] sm:%s568]
              %600 = vst [vmem:[%s576 + $0x2c] sm:%s568] %v599
              %v601 = vld [vmem:[%s575 + $0x30] sm:%s568]
              %602 = vst [vmem:[%s576 + $0x30] sm:%s568] %v601
              %v603 = vld [vmem:[%s575 + $0x38] sm:%s568]
              %604 = vst [vmem:[%s576 + $0x34] sm:%s568] %v603
              %v605 = vld [vmem:[%s575 + $0x34] sm:%s568]
              %606 = vst [vmem:[%s576 + $0x38] sm:%s568] %v605
              %v607 = vld [vmem:[%s575 + $0x3c] sm:%s568]
              %608 = vst [vmem:[%s576 + $0x3c] sm:%s568] %v607
              %v609 = vld [vmem:[%s575 + $0x40] sm:%s568]
              %610 = vst [vmem:[%s576 + $0x40] sm:%s568] %v609
              %v611 = vld [vmem:[%s575 + $0x48] sm:%s568]
              %612 = vst [vmem:[%s576 + $0x44] sm:%s568] %v611
              %v613 = vld [vmem:[%s575 + $0x44] sm:%s568]
              %614 = vst [vmem:[%s576 + $0x48] sm:%s568] %v613
              %v615 = vld [vmem:[%s575 + $0x4c] sm:%s568]
              %616 = vst [vmem:[%s576 + $0x4c] sm:%s568] %v615
              %v617 = vld [vmem:[%s575 + $0x50] sm:%s568]
              %618 = vst [vmem:[%s576 + $0x50] sm:%s568] %v617
              %v619 = vld [vmem:[%s575 + $0x58] sm:%s568]
              %620 = vst [vmem:[%s576 + $0x54] sm:%s568] %v619
              %v621 = vld [vmem:[%s575 + $0x54] sm:%s568]
              %622 = vst [vmem:[%s576 + $0x58] sm:%s568] %v621
              %v623 = vld [vmem:[%s575 + $0x5c] sm:%s568]
              %624 = vst [vmem:[%s576 + $0x5c] sm:%s568] %v623
              %v625 = vld [vmem:[%s575 + $0x60] sm:%s568]
              %626 = vst [vmem:[%s576 + $0x60] sm:%s568] %v625
              %v627 = vld [vmem:[%s575 + $0x68] sm:%s568]
              %628 = vst [vmem:[%s576 + $0x64] sm:%s568] %v627
              %v629 = vld [vmem:[%s575 + $0x64] sm:%s568]
              %630 = vst [vmem:[%s576 + $0x68] sm:%s568] %v629
              %v631 = vld [vmem:[%s575 + $0x6c] sm:%s568]
              %632 = vst [vmem:[%s576 + $0x6c] sm:%s568] %v631
              %v633 = vld [vmem:[%s575 + $0x70] sm:%s568]
              %634 = vst [vmem:[%s576 + $0x70] sm:%s568] %v633
              %v635 = vld [vmem:[%s575 + $0x78] sm:%s568]
              %636 = vst [vmem:[%s576 + $0x74] sm:%s568] %v635
              %v637 = vld [vmem:[%s575 + $0x74] sm:%s568]
              %638 = vst [vmem:[%s576 + $0x78] sm:%s568] %v637
              %v639 = vld [vmem:[%s575 + $0x7c] sm:%s568]
              %640 = vst [vmem:[%s576 + $0x7c] sm:%s568] %v639
            $region124: #{gsu_layer.1} parent=118 // loop_footer
              %s574 = sadd.s32 1, %s570
            $region125: #{gsu_layer.1} parent=118 // loop_footer_branch
              %569 = sbr.rel target = $region121
            $region126: #{gsu_layer.1} parent=118 // loop_exit
              _
          $region119: #{gsu_layer.1} parent=73 // pred_fallthru
            _
          // Predicated region
          $region145: #{gsu_layer.1} parent=73 // pred_check
            _
          $region146: #{gsu_layer.1} parent=73 // pred_check_branch
            %734 = sbr.rel (0) target = $region148
          $region147: #{gsu_layer.1} parent=73 // pred_region
            %735 = vsyncadd %s559, 2048
          $region148: #{gsu_layer.1} parent=73 // pred_fallthru
            _
          %s736 = smul.u32 4, 4
          %s737 = smul.u32 %s736, 2
          %s738 = sshll.u32 %s737, 4
          %739 = dma.done [#allocation5], %s738
          %s740 = smul.u32 4, 16
          %s741 = smul.u32 %s740, 2
          %s742 = sshll.u32 %s741, 4
          %743 = dma.done %s559, %s742
          %v744 = vld [vmem:[%s452] sm:$0xf]
          %v745 = vld [vmem:[%s452 + $0x4] sm:$0xf]
          %746 = vst [vmem:[%s466] sm:$0xf] %v744
          %747 = vst [vmem:[%s466 + $0x4] sm:$0xf] %v745
          %v748 = vld [vmem:[%s458] sm:$0xff]
          %v749 = vld [vmem:[%s458 + $0x8] sm:$0xff]
          %750 = vst [vmem:[%s472] sm:$0xff] %v748
          %751 = vst [vmem:[%s472 + $0x8] sm:$0xff] %v749
        $region74: #{gsu_layer.1} parent=65 // pred_fallthru
          _
        %v752 = vld [vmem:[%s402] sm:$0xff]
        %v753 = vld [vmem:[%s402 + $0x8] sm:$0xff]
        %v754 = vld [vmem:[%s402 + $0x10] sm:$0xff]
        %v755 = vld [vmem:[%s402 + $0x18] sm:$0xff]
        %v756 = vld [vmem:[%s402 + $0x20] sm:$0xff]
        %v757 = vld [vmem:[%s402 + $0x28] sm:$0xff]
        %v758 = vld [vmem:[%s402 + $0x30] sm:$0xff]
        %v759 = vld [vmem:[%s402 + $0x38] sm:$0xff]
        %v760 = vld [vmem:[%s402 + $0x40] sm:$0xff]
        %v761 = vld [vmem:[%s402 + $0x48] sm:$0xff]
        %v762 = vld [vmem:[%s402 + $0x50] sm:$0xff]
        %v763 = vld [vmem:[%s402 + $0x58] sm:$0xff]
        %v764 = vld [vmem:[%s402 + $0x60] sm:$0xff]
        %v765 = vld [vmem:[%s402 + $0x68] sm:$0xff]
        %v766 = vld [vmem:[%s402 + $0x70] sm:$0xff]
        %v767 = vld [vmem:[%s402 + $0x78] sm:$0xff]
        %v768 = vld [vmem:[%s402 + $0x80] sm:$0xff]
        %v769 = vld [vmem:[%s402 + $0x88] sm:$0xff]
        %v770 = vld [vmem:[%s402 + $0x90] sm:$0xff]
        %v771 = vld [vmem:[%s402 + $0x98] sm:$0xff]
        %v772 = vld [vmem:[%s402 + $0xa0] sm:$0xff]
        %v773 = vld [vmem:[%s402 + $0xa8] sm:$0xff]
        %v774 = vld [vmem:[%s402 + $0xb0] sm:$0xff]
        %v775 = vld [vmem:[%s402 + $0xb8] sm:$0xff]
        %v776 = vld [vmem:[%s402 + $0xc0] sm:$0xff]
        %v777 = vld [vmem:[%s402 + $0xc8] sm:$0xff]
        %v778 = vld [vmem:[%s402 + $0xd0] sm:$0xff]
        %v779 = vld [vmem:[%s402 + $0xd8] sm:$0xff]
        %v780 = vld [vmem:[%s402 + $0xe0] sm:$0xff]
        %v781 = vld [vmem:[%s402 + $0xe8] sm:$0xff]
        %v782 = vld [vmem:[%s402 + $0xf0] sm:$0xff]
        %v783 = vld [vmem:[%s402 + $0xf8] sm:$0xff]
        %v784 = vpack.c.bf16 %v753, %v752
        %v785 = vpack.c.bf16 %v755, %v754
        %v786 = vpack.c.bf16 %v757, %v756
        %v787 = vpack.c.bf16 %v759, %v758
        %v788 = vpack.c.bf16 %v761, %v760
        %v789 = vpack.c.bf16 %v763, %v762
        %v790 = vpack.c.bf16 %v765, %v764
        %v791 = vpack.c.bf16 %v767, %v766
        %v792 = vpack.c.bf16 %v769, %v768
        %v793 = vpack.c.bf16 %v771, %v770
        %v794 = vpack.c.bf16 %v773, %v772
        %v795 = vpack.c.bf16 %v775, %v774
        %v796 = vpack.c.bf16 %v777, %v776
        %v797 = vpack.c.bf16 %v779, %v778
        %v798 = vpack.c.bf16 %v781, %v780
        %v799 = vpack.c.bf16 %v783, %v782
        %v800 = vld [vmem:[#allocation2] sm:$0xff]
        %v801 = vld [vmem:[#allocation2 + $0x8] sm:$0xff]
        %v802 = vld [vmem:[#allocation2 + $0x10] sm:$0xff]
        %v803 = vld [vmem:[#allocation2 + $0x18] sm:$0xff]
        %vm804 = vcmask 261120
        %v806 = vsel %vm804, %v784, 0
        %v809 = vsel %vm804, %v785, 0
        %v812 = vsel %vm804, %v786, 0
        %v815 = vsel %vm804, %v787, 0
        %v818 = vsel %vm804, %v788, 0
        %v821 = vsel %vm804, %v789, 0
        %v824 = vsel %vm804, %v790, 0
        %v827 = vsel %vm804, %v791, 0
        %v830 = vsel %vm804, %v792, 0
        %v833 = vsel %vm804, %v793, 0
        %v836 = vsel %vm804, %v794, 0
        %v839 = vsel %vm804, %v795, 0
        %v842 = vsel %vm804, %v796, 0
        %v845 = vsel %vm804, %v797, 0
        %v848 = vsel %vm804, %v798, 0
        %v851 = vsel %vm804, %v799, 0
        %853 = vmatprep.subr.bf16.mxu0 %v801
        %854 = vmatpush1.bf16.msra.mxu0 %v800
        %855 = vmatprep.subr.bf16.mxu0 %v803
        %856 = vmatpush1.bf16.msra.mxu0 %v802
        %857 = vmatprep.subr.bf16.mxu0 0
        %858 = vmatpush1.bf16.msra.mxu0 0
        %859 = vmatprep.subr.bf16.mxu0 0
        %860 = vmatpush1.bf16.msra.mxu0 0
        %861 = vmatprep.subr.bf16.mxu0 0
        %862 = vmatpush1.bf16.msra.mxu0 0
        %863 = vmatprep.subr.bf16.mxu0 0
        %864 = vmatpush1.bf16.msra.mxu0 0
        %865 = vmatprep.subr.bf16.mxu0 0
        %866 = vmatpush1.bf16.msra.mxu0 0
        %867 = vmatprep.subr.bf16.mxu0 0
        %868 = vmatpush1.bf16.msra.mxu0 0
        %869 = vmatprep.subr.bf16.mxu0 0
        %870 = vmatpush1.bf16.msra.mxu0 0
        %871 = vmatprep.subr.bf16.mxu0 0
        %872 = vmatpush1.bf16.msra.mxu0 0
        %873 = vmatprep.subr.bf16.mxu0 0
        %874 = vmatpush1.bf16.msra.mxu0 0
        %875 = vmatprep.subr.bf16.mxu0 0
        %876 = vmatpush1.bf16.msra.mxu0 0
        %877 = vmatprep.subr.bf16.mxu0 0
        %878 = vmatpush1.bf16.msra.mxu0 0
        %879 = vmatprep.subr.bf16.mxu0 0
        %880 = vmatpush1.bf16.msra.mxu0 0
        %881 = vmatprep.subr.bf16.mxu0 0
        %882 = vmatpush1.bf16.msra.mxu0 0
        %883 = vmatprep.subr.bf16.mxu0 0
        %884 = vmatpush1.bf16.msra.mxu0 0
        %885 = vmatprep.mubr.bf16.mxu0 0
        %886 = vmatmul.mubr.bf16.gmra.mrb[0].mxu0 %v806
        %v887 = vpop.f32.mrb[0].mxu0
        %v888 = vadd.f32 0.0, %v887
        %v889 = vpop.f32.mrb[0].mxu0
        %v890 = vadd.f32 0.0, %v889
        %v891 = vpop.f32.mrb[0].mxu0
        %v892 = vadd.f32 0.0, %v891
        %v893 = vpop.f32.mrb[0].mxu0
        %v894 = vadd.f32 0.0, %v893
        %895 = vmatprep.mubr.bf16.mxu0 0
        %896 = vmatmul.mubr.bf16.gmra.mrb[0].mxu0 %v809
        %v897 = vpop.f32.mrb[0].mxu0
        %v898 = vadd.f32 0.0, %v897
        %v899 = vpop.f32.mrb[0].mxu0
        %v900 = vadd.f32 0.0, %v899
        %v901 = vpop.f32.mrb[0].mxu0
        %v902 = vadd.f32 0.0, %v901
        %v903 = vpop.f32.mrb[0].mxu0
        %v904 = vadd.f32 0.0, %v903
        %905 = vmatprep.mubr.bf16.mxu0 0
        %906 = vmatmul.mubr.bf16.gmra.mrb[0].mxu0 %v812
        %v907 = vpop.f32.mrb[0].mxu0
        %v908 = vadd.f32 0.0, %v907
        %v909 = vpop.f32.mrb[0].mxu0
        %v910 = vadd.f32 0.0, %v909
        %v911 = vpop.f32.mrb[0].mxu0
        %v912 = vadd.f32 0.0, %v911
        %v913 = vpop.f32.mrb[0].mxu0
        %v914 = vadd.f32 0.0, %v913
        %915 = vmatprep.mubr.bf16.mxu0 0
        %916 = vmatmul.mubr.bf16.gmra.mrb[0].mxu0 %v815
        %v917 = vpop.f32.mrb[0].mxu0
        %v918 = vadd.f32 0.0, %v917
        %v919 = vpop.f32.mrb[0].mxu0
        %v920 = vadd.f32 0.0, %v919
        %v921 = vpop.f32.mrb[0].mxu0
        %v922 = vadd.f32 0.0, %v921
        %v923 = vpop.f32.mrb[0].mxu0
        %v924 = vadd.f32 0.0, %v923
        %925 = vmatprep.mubr.bf16.mxu0 0
        %926 = vmatmul.mubr.bf16.gmra.mrb[0].mxu0 %v818
        %v927 = vpop.f32.mrb[0].mxu0
        %v928 = vadd.f32 0.0, %v927
        %v929 = vpop.f32.mrb[0].mxu0
        %v930 = vadd.f32 0.0, %v929
        %v931 = vpop.f32.mrb[0].mxu0
        %v932 = vadd.f32 0.0, %v931
        %v933 = vpop.f32.mrb[0].mxu0
        %v934 = vadd.f32 0.0, %v933
        %935 = vmatprep.mubr.bf16.mxu0 0
        %936 = vmatmul.mubr.bf16.gmra.mrb[0].mxu0 %v821
        %v937 = vpop.f32.mrb[0].mxu0
        %v938 = vadd.f32 0.0, %v937
        %v939 = vpop.f32.mrb[0].mxu0
        %v940 = vadd.f32 0.0, %v939
        %v941 = vpop.f32.mrb[0].mxu0
        %v942 = vadd.f32 0.0, %v941
        %v943 = vpop.f32.mrb[0].mxu0
        %v944 = vadd.f32 0.0, %v943
        %945 = vmatprep.mubr.bf16.mxu0 0
        %946 = vmatmul.mubr.bf16.gmra.mrb[0].mxu0 %v824
        %v947 = vpop.f32.mrb[0].mxu0
        %v948 = vadd.f32 0.0, %v947
        %v949 = vpop.f32.mrb[0].mxu0
        %v950 = vadd.f32 0.0, %v949
        %v951 = vpop.f32.mrb[0].mxu0
        %v952 = vadd.f32 0.0, %v951
        %v953 = vpop.f32.mrb[0].mxu0
        %v954 = vadd.f32 0.0, %v953
        %955 = vmatprep.mubr.bf16.mxu0 0
        %956 = vmatmul.mubr.bf16.gmra.mrb[0].mxu0 %v827
        %v957 = vpop.f32.mrb[0].mxu0
        %v958 = vadd.f32 0.0, %v957
        %v959 = vpop.f32.mrb[0].mxu0
        %v960 = vadd.f32 0.0, %v959
        %v961 = vpop.f32.mrb[0].mxu0
        %v962 = vadd.f32 0.0, %v961
        %v963 = vpop.f32.mrb[0].mxu0
        %v964 = vadd.f32 0.0, %v963
        %965 = vmatprep.mubr.bf16.mxu0 0
        %966 = vmatmul.mubr.bf16.gmra.mrb[0].mxu0 %v830
        %v967 = vpop.f32.mrb[0].mxu0
        %v968 = vadd.f32 0.0, %v967
        %v969 = vpop.f32.mrb[0].mxu0
        %v970 = vadd.f32 0.0, %v969
        %v971 = vpop.f32.mrb[0].mxu0
        %v972 = vadd.f32 0.0, %v971
        %v973 = vpop.f32.mrb[0].mxu0
        %v974 = vadd.f32 0.0, %v973
        %975 = vmatprep.mubr.bf16.mxu0 0
        %976 = vmatmul.mubr.bf16.gmra.mrb[0].mxu0 %v833
        %v977 = vpop.f32.mrb[0].mxu0
        %v978 = vadd.f32 0.0, %v977
        %v979 = vpop.f32.mrb[0].mxu0
        %v980 = vadd.f32 0.0, %v979
        %v981 = vpop.f32.mrb[0].mxu0
        %v982 = vadd.f32 0.0, %v981
        %v983 = vpop.f32.mrb[0].mxu0
        %v984 = vadd.f32 0.0, %v983
        %985 = vmatprep.mubr.bf16.mxu0 0
        %986 = vmatmul.mubr.bf16.gmra.mrb[0].mxu0 %v836
        %v987 = vpop.f32.mrb[0].mxu0
        %v988 = vadd.f32 0.0, %v987
        %v989 = vpop.f32.mrb[0].mxu0
        %v990 = vadd.f32 0.0, %v989
        %v991 = vpop.f32.mrb[0].mxu0
        %v992 = vadd.f32 0.0, %v991
        %v993 = vpop.f32.mrb[0].mxu0
        %v994 = vadd.f32 0.0, %v993
        %995 = vmatprep.mubr.bf16.mxu0 0
        %996 = vmatmul.mubr.bf16.gmra.mrb[0].mxu0 %v839
        %v997 = vpop.f32.mrb[0].mxu0
        %v998 = vadd.f32 0.0, %v997
        %v999 = vpop.f32.mrb[0].mxu0
        %v1000 = vadd.f32 0.0, %v999
        %v1001 = vpop.f32.mrb[0].mxu0
        %v1002 = vadd.f32 0.0, %v1001
        %v1003 = vpop.f32.mrb[0].mxu0
        %v1004 = vadd.f32 0.0, %v1003
        %1005 = vmatprep.mubr.bf16.mxu0 0
        %1006 = vmatmul.mubr.bf16.gmra.mrb[0].mxu0 %v842
        %v1007 = vpop.f32.mrb[0].mxu0
        %v1008 = vadd.f32 0.0, %v1007
        %v1009 = vpop.f32.mrb[0].mxu0
        %v1010 = vadd.f32 0.0, %v1009
        %v1011 = vpop.f32.mrb[0].mxu0
        %v1012 = vadd.f32 0.0, %v1011
        %v1013 = vpop.f32.mrb[0].mxu0
        %v1014 = vadd.f32 0.0, %v1013
        %1015 = vmatprep.mubr.bf16.mxu0 0
        %1016 = vmatmul.mubr.bf16.gmra.mrb[0].mxu0 %v845
        %v1017 = vpop.f32.mrb[0].mxu0
        %v1018 = vadd.f32 0.0, %v1017
        %v1019 = vpop.f32.mrb[0].mxu0
        %v1020 = vadd.f32 0.0, %v1019
        %v1021 = vpop.f32.mrb[0].mxu0
        %v1022 = vadd.f32 0.0, %v1021
        %v1023 = vpop.f32.mrb[0].mxu0
        %v1024 = vadd.f32 0.0, %v1023
        %1025 = vmatprep.mubr.bf16.mxu0 0
        %1026 = vmatmul.mubr.bf16.gmra.mrb[0].mxu0 %v848
        %v1027 = vpop.f32.mrb[0].mxu0
        %v1028 = vadd.f32 0.0, %v1027
        %v1029 = vpop.f32.mrb[0].mxu0
        %v1030 = vadd.f32 0.0, %v1029
        %v1031 = vpop.f32.mrb[0].mxu0
        %v1032 = vadd.f32 0.0, %v1031
        %v1033 = vpop.f32.mrb[0].mxu0
        %v1034 = vadd.f32 0.0, %v1033
        %1035 = vmatprep.mubr.bf16.mxu0 0
        %1036 = vmatmul.mubr.bf16.gmra.mrb[0].mxu0 %v851
        %v1037 = vpop.f32.mrb[0].mxu0
        %v1038 = vadd.f32 0.0, %v1037
        %v1039 = vpop.f32.mrb[0].mxu0
        %v1040 = vadd.f32 0.0, %v1039
        %v1041 = vpop.f32.mrb[0].mxu0
        %v1042 = vadd.f32 0.0, %v1041
        %v1043 = vpop.f32.mrb[0].mxu0
        %v1044 = vadd.f32 0.0, %v1043
        %1045 = vdwg.mxu0
        %1046 = vst [vmem:[#allocation4] sm:$0xff] %v888
        %1047 = vst [vmem:[#allocation4 + $0x8] sm:$0xff] %v890
        %1048 = vst [vmem:[#allocation4 + $0x10] sm:$0xff] %v892
        %1049 = vst [vmem:[#allocation4 + $0x18] sm:$0xff] %v894
        %1050 = vst [vmem:[#allocation4 + $0x20] sm:$0xff] %v898
        %1051 = vst [vmem:[#allocation4 + $0x28] sm:$0xff] %v900
        %1052 = vst [vmem:[#allocation4 + $0x30] sm:$0xff] %v902
        %1053 = vst [vmem:[#allocation4 + $0x38] sm:$0xff] %v904
        %1054 = vst [vmem:[#allocation4 + $0x40] sm:$0xff] %v908
        %1055 = vst [vmem:[#allocation4 + $0x48] sm:$0xff] %v910
        %1056 = vst [vmem:[#allocation4 + $0x50] sm:$0xff] %v912
        %1057 = vst [vmem:[#allocation4 + $0x58] sm:$0xff] %v914
        %1058 = vst [vmem:[#allocation4 + $0x60] sm:$0xff] %v918
        %1059 = vst [vmem:[#allocation4 + $0x68] sm:$0xff] %v920
        %1060 = vst [vmem:[#allocation4 + $0x70] sm:$0xff] %v922
        %1061 = vst [vmem:[#allocation4 + $0x78] sm:$0xff] %v924
        %1062 = vst [vmem:[#allocation4 + $0x80] sm:$0xff] %v928
        %1063 = vst [vmem:[#allocation4 + $0x88] sm:$0xff] %v930
        %1064 = vst [vmem:[#allocation4 + $0x90] sm:$0xff] %v932
        %1065 = vst [vmem:[#allocation4 + $0x98] sm:$0xff] %v934
        %1066 = vst [vmem:[#allocation4 + $0xa0] sm:$0xff] %v938
        %1067 = vst [vmem:[#allocation4 + $0xa8] sm:$0xff] %v940
        %1068 = vst [vmem:[#allocation4 + $0xb0] sm:$0xff] %v942
        %1069 = vst [vmem:[#allocation4 + $0xb8] sm:$0xff] %v944
        %1070 = vst [vmem:[#allocation4 + $0xc0] sm:$0xff] %v948
        %1071 = vst [vmem:[#allocation4 + $0xc8] sm:$0xff] %v950
        %1072 = vst [vmem:[#allocation4 + $0xd0] sm:$0xff] %v952
        %1073 = vst [vmem:[#allocation4 + $0xd8] sm:$0xff] %v954
        %1074 = vst [vmem:[#allocation4 + $0xe0] sm:$0xff] %v958
        %1075 = vst [vmem:[#allocation4 + $0xe8] sm:$0xff] %v960
        %1076 = vst [vmem:[#allocation4 + $0xf0] sm:$0xff] %v962
        %1077 = vst [vmem:[#allocation4 + $0xf8] sm:$0xff] %v964
        %1078 = vst [vmem:[#allocation4 + $0x100] sm:$0xff] %v968
        %1079 = vst [vmem:[#allocation4 + $0x108] sm:$0xff] %v970
        %1080 = vst [vmem:[#allocation4 + $0x110] sm:$0xff] %v972
        %1081 = vst [vmem:[#allocation4 + $0x118] sm:$0xff] %v974
        %1082 = vst [vmem:[#allocation4 + $0x120] sm:$0xff] %v978
        %1083 = vst [vmem:[#allocation4 + $0x128] sm:$0xff] %v980
        %1084 = vst [vmem:[#allocation4 + $0x130] sm:$0xff] %v982
        %1085 = vst [vmem:[#allocation4 + $0x138] sm:$0xff] %v984
        %1086 = vst [vmem:[#allocation4 + $0x140] sm:$0xff] %v988
        %1087 = vst [vmem:[#allocation4 + $0x148] sm:$0xff] %v990
        %1088 = vst [vmem:[#allocation4 + $0x150] sm:$0xff] %v992
        %1089 = vst [vmem:[#allocation4 + $0x158] sm:$0xff] %v994
        %1090 = vst [vmem:[#allocation4 + $0x160] sm:$0xff] %v998
        %1091 = vst [vmem:[#allocation4 + $0x168] sm:$0xff] %v1000
        %1092 = vst [vmem:[#allocation4 + $0x170] sm:$0xff] %v1002
        %1093 = vst [vmem:[#allocation4 + $0x178] sm:$0xff] %v1004
        %1094 = vst [vmem:[#allocation4 + $0x180] sm:$0xff] %v1008
        %1095 = vst [vmem:[#allocation4 + $0x188] sm:$0xff] %v1010
        %1096 = vst [vmem:[#allocation4 + $0x190] sm:$0xff] %v1012
        %1097 = vst [vmem:[#allocation4 + $0x198] sm:$0xff] %v1014
        %1098 = vst [vmem:[#allocation4 + $0x1a0] sm:$0xff] %v1018
        %1099 = vst [vmem:[#allocation4 + $0x1a8] sm:$0xff] %v1020
        %1100 = vst [vmem:[#allocation4 + $0x1b0] sm:$0xff] %v1022
        %1101 = vst [vmem:[#allocation4 + $0x1b8] sm:$0xff] %v1024
        %1102 = vst [vmem:[#allocation4 + $0x1c0] sm:$0xff] %v1028
        %1103 = vst [vmem:[#allocation4 + $0x1c8] sm:$0xff] %v1030
        %1104 = vst [vmem:[#allocation4 + $0x1d0] sm:$0xff] %v1032
        %1105 = vst [vmem:[#allocation4 + $0x1d8] sm:$0xff] %v1034
        %1106 = vst [vmem:[#allocation4 + $0x1e0] sm:$0xff] %v1038
        %1107 = vst [vmem:[#allocation4 + $0x1e8] sm:$0xff] %v1040
        %1108 = vst [vmem:[#allocation4 + $0x1f0] sm:$0xff] %v1042
        %1109 = vst [vmem:[#allocation4 + $0x1f8] sm:$0xff] %v1044
        %v1110 = vld [vmem:[#allocation3] sm:$0xff]
        %v1111 = vld [vmem:[#allocation3 + $0x8] sm:$0xff]
        %v1112 = vld [vmem:[#allocation3 + $0x10] sm:$0xff]
        %v1113 = vld [vmem:[#allocation3 + $0x18] sm:$0xff]
        %v1114 = vld [vmem:[#allocation3 + $0x20] sm:$0xff]
        %v1115 = vld [vmem:[#allocation3 + $0x28] sm:$0xff]
        %v1116 = vld [vmem:[#allocation3 + $0x30] sm:$0xff]
        %v1117 = vld [vmem:[#allocation3 + $0x38] sm:$0xff]
        %v1118 = vld [vmem:[#allocation3 + $0x40] sm:$0xff]
        %v1119 = vld [vmem:[#allocation3 + $0x48] sm:$0xff]
        %v1120 = vld [vmem:[#allocation3 + $0x50] sm:$0xff]
        %v1121 = vld [vmem:[#allocation3 + $0x58] sm:$0xff]
        %v1122 = vld [vmem:[#allocation3 + $0x60] sm:$0xff]
        %v1123 = vld [vmem:[#allocation3 + $0x68] sm:$0xff]
        %v1124 = vld [vmem:[#allocation3 + $0x70] sm:$0xff]
        %v1125 = vld [vmem:[#allocation3 + $0x78] sm:$0xff]
        %v1126 = vld [vmem:[%s466] sm:$0xf]
        %v1127 = vld [vmem:[%s466 + $0x4] sm:$0xf]
        %v1128 = vld [vmem:[%s472] sm:$0xff]
        %v1129 = vld [vmem:[%s472 + $0x8] sm:$0xff]
        %v1132 = vunpack.c.l.b16 %v1126
        %v1133 = vunpack.c.l.b16 %v1127
        %v1134 = vpack.c.b16 %v1133, %v1132
        %1136 = vmatprep.subr.bf16.mxu0 %v1111
        %1137 = vmatpush1.bf16.msra.mxu0 %v1110
        %1138 = vmatprep.subr.bf16.mxu0 %v1113
        %1139 = vmatpush1.bf16.msra.mxu0 %v1112
        %1140 = vmatprep.subr.bf16.mxu0 %v1115
        %1141 = vmatpush1.bf16.msra.mxu0 %v1114
        %1142 = vmatprep.subr.bf16.mxu0 %v1117
        %1143 = vmatpush1.bf16.msra.mxu0 %v1116
        %1144 = vmatprep.subr.bf16.mxu0 %v1119
        %1145 = vmatpush1.bf16.msra.mxu0 %v1118
        %1146 = vmatprep.subr.bf16.mxu0 %v1121
        %1147 = vmatpush1.bf16.msra.mxu0 %v1120
        %1148 = vmatprep.subr.bf16.mxu0 %v1123
        %1149 = vmatpush1.bf16.msra.mxu0 %v1122
        %1150 = vmatprep.subr.bf16.mxu0 %v1125
        %1151 = vmatpush1.bf16.msra.mxu0 %v1124
        %1152 = vmatprep.subr.bf16.mxu0 0
        %1153 = vmatpush1.bf16.msra.mxu0 0
        %1154 = vmatprep.subr.bf16.mxu0 0
        %1155 = vmatpush1.bf16.msra.mxu0 0
        %1156 = vmatprep.subr.bf16.mxu0 0
        %1157 = vmatpush1.bf16.msra.mxu0 0
        %1158 = vmatprep.subr.bf16.mxu0 0
        %1159 = vmatpush1.bf16.msra.mxu0 0
        %1160 = vmatprep.subr.bf16.mxu0 0
        %1161 = vmatpush1.bf16.msra.mxu0 0
        %1162 = vmatprep.subr.bf16.mxu0 0
        %1163 = vmatpush1.bf16.msra.mxu0 0
        %1164 = vmatprep.subr.bf16.mxu0 0
        %1165 = vmatpush1.bf16.msra.mxu0 0
        %1166 = vmatprep.subr.bf16.mxu0 0
        %1167 = vmatpush1.bf16.msra.mxu0 0
        %1168 = vmatprep.mubr.bf16.mxu0 0
        %1169 = vmatmul.mubr.bf16.gmra.mrb[0].mxu0 %v1134
        %v1170 = vpop.f32.mrb[0].mxu0
        %v1171 = vadd.f32 0.0, %v1170
        %v1172 = vpop.f32.mrb[0].mxu0
        %v1173 = vadd.f32 0.0, %v1172
        %v1174 = vpop.f32.mrb[0].mxu0
        %v1175 = vadd.f32 0.0, %v1174
        %v1176 = vpop.f32.mrb[0].mxu0
        %v1177 = vadd.f32 0.0, %v1176
        %1178 = vdwg.mxu0
        %s1179 = smul.u32 0, 2
        %s1180 = smul.addr %s1179, 8
        %s1181 = scalar_lea.vmem [#allocation4], %s1180
        %v1182 = vld [vmem:[%s1181] sm:$0xff]
        %v1183 = vld [vmem:[%s1181 + $0x8] sm:$0xff]
        %v1184 = vld [vmem:[%s1181 + $0x10] sm:$0xff]
        %v1185 = vld [vmem:[%s1181 + $0x18] sm:$0xff]
        %v1186 = vadd.f32 %v1182, %v1171
        %v1187 = vadd.f32 %v1183, %v1173
        %v1188 = vadd.f32 %v1184, %v1175
        %v1189 = vadd.f32 %v1185, %v1177
        %v1190 = vmul.f32 %v1186, 0.5
        %v1191 = vmul.f32 %v1188, 0.5
        %v1192 = vtanh.pop %v1190
        %v1193 = vtanh.pop %v1191
        %v1194 = vmul.f32 %v1192, 0.5
        %v1195 = vmul.f32 %v1193, 0.5
        %v1196 = vadd.f32 %v1194, 0.5
        %v1197 = vadd.f32 %v1195, 0.5
        %v1198 = vsub.f32 %v1128, %v1187
        %v1199 = vsub.f32 %v1129, %v1189
        %v1200 = vmul.f32 %v1196, %v1198
        %v1201 = vmul.f32 %v1197, %v1199
        %v1202 = vadd.f32 %v1187, %v1200
        %v1203 = vadd.f32 %v1189, %v1201
        %vm1204 = vcmp.gt.f32.partialorder %v1202, 1.0
        %vm1205 = vcmp.gt.f32.partialorder %v1203, 1.0
        %v1206 = vsel %vm1204, 1, 0
        %v1207 = vsel %vm1205, 1, 0
        %v1208 = vcvt.s32.f32 %v1206
        %v1209 = vcvt.s32.f32 %v1207
        %1210 = vst [vmem:[%s431] sm:$0xff] %v1208
        %1211 = vst [vmem:[%s431 + $0x8] sm:$0xff] %v1209
        %v1212 = vpack.c.bf16 %v1209, %v1208
        %1213 = vmatprep.subr.bf16.mxu0 %v1111
        %1214 = vmatpush1.bf16.msra.mxu0 %v1110
        %1215 = vmatprep.subr.bf16.mxu0 %v1113
        %1216 = vmatpush1.bf16.msra.mxu0 %v1112
        %1217 = vmatprep.subr.bf16.mxu0 %v1115
        %1218 = vmatpush1.bf16.msra.mxu0 %v1114
        %1219 = vmatprep.subr.bf16.mxu0 %v1117
        %1220 = vmatpush1.bf16.msra.mxu0 %v1116
        %1221 = vmatprep.subr.bf16.mxu0 %v1119
        %1222 = vmatpush1.bf16.msra.mxu0 %v1118
        %1223 = vmatprep.subr.bf16.mxu0 %v1121
        %1224 = vmatpush1.bf16.msra.mxu0 %v1120
        %1225 = vmatprep.subr.bf16.mxu0 %v1123
        %1226 = vmatpush1.bf16.msra.mxu0 %v1122
        %1227 = vmatprep.subr.bf16.mxu0 %v1125
        %1228 = vmatpush1.bf16.msra.mxu0 %v1124
        %1229 = vmatprep.subr.bf16.mxu0 0
        %1230 = vmatpush1.bf16.msra.mxu0 0
        %1231 = vmatprep.subr.bf16.mxu0 0
        %1232 = vmatpush1.bf16.msra.mxu0 0
        %1233 = vmatprep.subr.bf16.mxu0 0
        %1234 = vmatpush1.bf16.msra.mxu0 0
        %1235 = vmatprep.subr.bf16.mxu0 0
        %1236 = vmatpush1.bf16.msra.mxu0 0
        %1237 = vmatprep.subr.bf16.mxu0 0
        %1238 = vmatpush1.bf16.msra.mxu0 0
        %1239 = vmatprep.subr.bf16.mxu0 0
        %1240 = vmatpush1.bf16.msra.mxu0 0
        %1241 = vmatprep.subr.bf16.mxu0 0
        %1242 = vmatpush1.bf16.msra.mxu0 0
        %1243 = vmatprep.subr.bf16.mxu0 0
        %1244 = vmatpush1.bf16.msra.mxu0 0
        %1245 = vmatprep.mubr.bf16.mxu0 0
        %1246 = vmatmul.mubr.bf16.gmra.mrb[0].mxu0 %v1212
        %v1247 = vpop.f32.mrb[0].mxu0
        %v1248 = vadd.f32 0.0, %v1247
        %v1249 = vpop.f32.mrb[0].mxu0
        %v1250 = vadd.f32 0.0, %v1249
        %v1251 = vpop.f32.mrb[0].mxu0
        %v1252 = vadd.f32 0.0, %v1251
        %v1253 = vpop.f32.mrb[0].mxu0
        %v1254 = vadd.f32 0.0, %v1253
        %1255 = vdwg.mxu0
        %s1256 = smul.u32 2, 2
        %s1257 = smul.addr %s1256, 8
        %s1258 = scalar_lea.vmem [#allocation4], %s1257
        %v1259 = vld [vmem:[%s1258] sm:$0xff]
        %v1260 = vld [vmem:[%s1258 + $0x8] sm:$0xff]
        %v1261 = vld [vmem:[%s1258 + $0x10] sm:$0xff]
        %v1262 = vld [vmem:[%s1258 + $0x18] sm:$0xff]
        %v1263 = vadd.f32 %v1259, %v1248
        %v1264 = vadd.f32 %v1260, %v1250
        %v1265 = vadd.f32 %v1261, %v1252
        %v1266 = vadd.f32 %v1262, %v1254
        %v1267 = vmul.f32 %v1263, 0.5
        %v1268 = vmul.f32 %v1265, 0.5
        %v1269 = vtanh.pop %v1267
        %v1270 = vtanh.pop %v1268
        %v1271 = vmul.f32 %v1269, 0.5
        %v1272 = vmul.f32 %v1270, 0.5
        %v1273 = vadd.f32 %v1271, 0.5
        %v1274 = vadd.f32 %v1272, 0.5
        %v1275 = vsub.f32 %v1202, %v1264
        %v1276 = vsub.f32 %v1203, %v1266
        %v1277 = vmul.f32 %v1273, %v1275
        %v1278 = vmul.f32 %v1274, %v1276
        %v1279 = vadd.f32 %v1264, %v1277
        %v1280 = vadd.f32 %v1266, %v1278
        %vm1281 = vcmp.gt.f32.partialorder %v1279, 1.0
        %vm1282 = vcmp.gt.f32.partialorder %v1280, 1.0
        %v1283 = vsel %vm1281, 1, 0
        %v1284 = vsel %vm1282, 1, 0
        %v1285 = vcvt.s32.f32 %v1283
        %v1286 = vcvt.s32.f32 %v1284
        %s1287 = scalar_lea.vmem %s431, 16 [#allocation7]
        %1288 = vst [vmem:[%s1287] sm:$0xff] %v1285
        %1289 = vst [vmem:[%s1287 + $0x8] sm:$0xff] %v1286
        %v1290 = vpack.c.bf16 %v1286, %v1285
        %1291 = vmatprep.subr.bf16.mxu0 %v1111
        %1292 = vmatpush1.bf16.msra.mxu0 %v1110
        %1293 = vmatprep.subr.bf16.mxu0 %v1113
        %1294 = vmatpush1.bf16.msra.mxu0 %v1112
        %1295 = vmatprep.subr.bf16.mxu0 %v1115
        %1296 = vmatpush1.bf16.msra.mxu0 %v1114
        %1297 = vmatprep.subr.bf16.mxu0 %v1117
        %1298 = vmatpush1.bf16.msra.mxu0 %v1116
        %1299 = vmatprep.subr.bf16.mxu0 %v1119
        %1300 = vmatpush1.bf16.msra.mxu0 %v1118
        %1301 = vmatprep.subr.bf16.mxu0 %v1121
        %1302 = vmatpush1.bf16.msra.mxu0 %v1120
        %1303 = vmatprep.subr.bf16.mxu0 %v1123
        %1304 = vmatpush1.bf16.msra.mxu0 %v1122
        %1305 = vmatprep.subr.bf16.mxu0 %v1125
        %1306 = vmatpush1.bf16.msra.mxu0 %v1124
        %1307 = vmatprep.subr.bf16.mxu0 0
        %1308 = vmatpush1.bf16.msra.mxu0 0
        %1309 = vmatprep.subr.bf16.mxu0 0
        %1310 = vmatpush1.bf16.msra.mxu0 0
        %1311 = vmatprep.subr.bf16.mxu0 0
        %1312 = vmatpush1.bf16.msra.mxu0 0
        %1313 = vmatprep.subr.bf16.mxu0 0
        %1314 = vmatpush1.bf16.msra.mxu0 0
        %1315 = vmatprep.subr.bf16.mxu0 0
        %1316 = vmatpush1.bf16.msra.mxu0 0
        %1317 = vmatprep.subr.bf16.mxu0 0
        %1318 = vmatpush1.bf16.msra.mxu0 0
        %1319 = vmatprep.subr.bf16.mxu0 0
        %1320 = vmatpush1.bf16.msra.mxu0 0
        %1321 = vmatprep.subr.bf16.mxu0 0
        %1322 = vmatpush1.bf16.msra.mxu0 0
        %1323 = vmatprep.mubr.bf16.mxu0 0
        %1324 = vmatmul.mubr.bf16.gmra.mrb[0].mxu0 %v1290
        %v1325 = vpop.f32.mrb[0].mxu0
        %v1326 = vadd.f32 0.0, %v1325
        %v1327 = vpop.f32.mrb[0].mxu0
        %v1328 = vadd.f32 0.0, %v1327
        %v1329 = vpop.f32.mrb[0].mxu0
        %v1330 = vadd.f32 0.0, %v1329
        %v1331 = vpop.f32.mrb[0].mxu0
        %v1332 = vadd.f32 0.0, %v1331
        %1333 = vdwg.mxu0
        %s1334 = smul.u32 4, 2
        %s1335 = smul.addr %s1334, 8
        %s1336 = scalar_lea.vmem [#allocation4], %s1335
        %v1337 = vld [vmem:[%s1336] sm:$0xff]
        %v1338 = vld [vmem:[%s1336 + $0x8] sm:$0xff]
        %v1339 = vld [vmem:[%s1336 + $0x10] sm:$0xff]
        %v1340 = vld [vmem:[%s1336 + $0x18] sm:$0xff]
        %v1341 = vadd.f32 %v1337, %v1326
        %v1342 = vadd.f32 %v1338, %v1328
        %v1343 = vadd.f32 %v1339, %v1330
        %v1344 = vadd.f32 %v1340, %v1332
        %v1345 = vmul.f32 %v1341, 0.5
        %v1346 = vmul.f32 %v1343, 0.5
        %v1347 = vtanh.pop %v1345
        %v1348 = vtanh.pop %v1346
        %v1349 = vmul.f32 %v1347, 0.5
        %v1350 = vmul.f32 %v1348, 0.5
        %v1351 = vadd.f32 %v1349, 0.5
        %v1352 = vadd.f32 %v1350, 0.5
        %v1353 = vsub.f32 %v1279, %v1342
        %v1354 = vsub.f32 %v1280, %v1344
        %v1355 = vmul.f32 %v1351, %v1353
        %v1356 = vmul.f32 %v1352, %v1354
        %v1357 = vadd.f32 %v1342, %v1355
        %v1358 = vadd.f32 %v1344, %v1356
        %vm1359 = vcmp.gt.f32.partialorder %v1357, 1.0
        %vm1360 = vcmp.gt.f32.partialorder %v1358, 1.0
        %v1361 = vsel %vm1359, 1, 0
        %v1362 = vsel %vm1360, 1, 0
        %v1363 = vcvt.s32.f32 %v1361
        %v1364 = vcvt.s32.f32 %v1362
        %s1365 = scalar_lea.vmem %s431, 32 [#allocation7]
        %1366 = vst [vmem:[%s1365] sm:$0xff] %v1363
        %1367 = vst [vmem:[%s1365 + $0x8] sm:$0xff] %v1364
        %v1368 = vpack.c.bf16 %v1364, %v1363
        %1369 = vmatprep.subr.bf16.mxu0 %v1111
        %1370 = vmatpush1.bf16.msra.mxu0 %v1110
        %1371 = vmatprep.subr.bf16.mxu0 %v1113
        %1372 = vmatpush1.bf16.msra.mxu0 %v1112
        %1373 = vmatprep.subr.bf16.mxu0 %v1115
        %1374 = vmatpush1.bf16.msra.mxu0 %v1114
        %1375 = vmatprep.subr.bf16.mxu0 %v1117
        %1376 = vmatpush1.bf16.msra.mxu0 %v1116
        %1377 = vmatprep.subr.bf16.mxu0 %v1119
        %1378 = vmatpush1.bf16.msra.mxu0 %v1118
        %1379 = vmatprep.subr.bf16.mxu0 %v1121
        %1380 = vmatpush1.bf16.msra.mxu0 %v1120
        %1381 = vmatprep.subr.bf16.mxu0 %v1123
        %1382 = vmatpush1.bf16.msra.mxu0 %v1122
        %1383 = vmatprep.subr.bf16.mxu0 %v1125
        %1384 = vmatpush1.bf16.msra.mxu0 %v1124
        %1385 = vmatprep.subr.bf16.mxu0 0
        %1386 = vmatpush1.bf16.msra.mxu0 0
        %1387 = vmatprep.subr.bf16.mxu0 0
        %1388 = vmatpush1.bf16.msra.mxu0 0
        %1389 = vmatprep.subr.bf16.mxu0 0
        %1390 = vmatpush1.bf16.msra.mxu0 0
        %1391 = vmatprep.subr.bf16.mxu0 0
        %1392 = vmatpush1.bf16.msra.mxu0 0
        %1393 = vmatprep.subr.bf16.mxu0 0
        %1394 = vmatpush1.bf16.msra.mxu0 0
        %1395 = vmatprep.subr.bf16.mxu0 0
        %1396 = vmatpush1.bf16.msra.mxu0 0
        %1397 = vmatprep.subr.bf16.mxu0 0
        %1398 = vmatpush1.bf16.msra.mxu0 0
        %1399 = vmatprep.subr.bf16.mxu0 0
        %1400 = vmatpush1.bf16.msra.mxu0 0
        %1401 = vmatprep.mubr.bf16.mxu0 0
        %1402 = vmatmul.mubr.bf16.gmra.mrb[0].mxu0 %v1368
        %v1403 = vpop.f32.mrb[0].mxu0
        %v1404 = vadd.f32 0.0, %v1403
        %v1405 = vpop.f32.mrb[0].mxu0
        %v1406 = vadd.f32 0.0, %v1405
        %v1407 = vpop.f32.mrb[0].mxu0
        %v1408 = vadd.f32 0.0, %v1407
        %v1409 = vpop.f32.mrb[0].mxu0
        %v1410 = vadd.f32 0.0, %v1409
        %1411 = vdwg.mxu0
        %s1412 = smul.u32 6, 2
        %s1413 = smul.addr %s1412, 8
        %s1414 = scalar_lea.vmem [#allocation4], %s1413
        %v1415 = vld [vmem:[%s1414] sm:$0xff]
        %v1416 = vld [vmem:[%s1414 + $0x8] sm:$0xff]
        %v1417 = vld [vmem:[%s1414 + $0x10] sm:$0xff]
        %v1418 = vld [vmem:[%s1414 + $0x18] sm:$0xff]
        %v1419 = vadd.f32 %v1415, %v1404
        %v1420 = vadd.f32 %v1416, %v1406
        %v1421 = vadd.f32 %v1417, %v1408
        %v1422 = vadd.f32 %v1418, %v1410
        %v1423 = vmul.f32 %v1419, 0.5
        %v1424 = vmul.f32 %v1421, 0.5
        %v1425 = vtanh.pop %v1423
        %v1426 = vtanh.pop %v1424
        %v1427 = vmul.f32 %v1425, 0.5
        %v1428 = vmul.f32 %v1426, 0.5
        %v1429 = vadd.f32 %v1427, 0.5
        %v1430 = vadd.f32 %v1428, 0.5
        %v1431 = vsub.f32 %v1357, %v1420
        %v1432 = vsub.f32 %v1358, %v1422
        %v1433 = vmul.f32 %v1429, %v1431
        %v1434 = vmul.f32 %v1430, %v1432
        %v1435 = vadd.f32 %v1420, %v1433
        %v1436 = vadd.f32 %v1422, %v1434
        %vm1437 = vcmp.gt.f32.partialorder %v1435, 1.0
        %vm1438 = vcmp.gt.f32.partialorder %v1436, 1.0
        %v1439 = vsel %vm1437, 1, 0
        %v1440 = vsel %vm1438, 1, 0
        %v1441 = vcvt.s32.f32 %v1439
        %v1442 = vcvt.s32.f32 %v1440
        %s1443 = scalar_lea.vmem %s431, 48 [#allocation7]
        %1444 = vst [vmem:[%s1443] sm:$0xff] %v1441
        %1445 = vst [vmem:[%s1443 + $0x8] sm:$0xff] %v1442
        %v1446 = vpack.c.bf16 %v1442, %v1441
        %1447 = vmatprep.subr.bf16.mxu0 %v1111
        %1448 = vmatpush1.bf16.msra.mxu0 %v1110
        %1449 = vmatprep.subr.bf16.mxu0 %v1113
        %1450 = vmatpush1.bf16.msra.mxu0 %v1112
        %1451 = vmatprep.subr.bf16.mxu0 %v1115
        %1452 = vmatpush1.bf16.msra.mxu0 %v1114
        %1453 = vmatprep.subr.bf16.mxu0 %v1117
        %1454 = vmatpush1.bf16.msra.mxu0 %v1116
        %1455 = vmatprep.subr.bf16.mxu0 %v1119
        %1456 = vmatpush1.bf16.msra.mxu0 %v1118
        %1457 = vmatprep.subr.bf16.mxu0 %v1121
        %1458 = vmatpush1.bf16.msra.mxu0 %v1120
        %1459 = vmatprep.subr.bf16.mxu0 %v1123
        %1460 = vmatpush1.bf16.msra.mxu0 %v1122
        %1461 = vmatprep.subr.bf16.mxu0 %v1125
        %1462 = vmatpush1.bf16.msra.mxu0 %v1124
        %1463 = vmatprep.subr.bf16.mxu0 0
        %1464 = vmatpush1.bf16.msra.mxu0 0
        %1465 = vmatprep.subr.bf16.mxu0 0
        %1466 = vmatpush1.bf16.msra.mxu0 0
        %1467 = vmatprep.subr.bf16.mxu0 0
        %1468 = vmatpush1.bf16.msra.mxu0 0
        %1469 = vmatprep.subr.bf16.mxu0 0
        %1470 = vmatpush1.bf16.msra.mxu0 0
        %1471 = vmatprep.subr.bf16.mxu0 0
        %1472 = vmatpush1.bf16.msra.mxu0 0
        %1473 = vmatprep.subr.bf16.mxu0 0
        %1474 = vmatpush1.bf16.msra.mxu0 0
        %1475 = vmatprep.subr.bf16.mxu0 0
        %1476 = vmatpush1.bf16.msra.mxu0 0
        %1477 = vmatprep.subr.bf16.mxu0 0
        %1478 = vmatpush1.bf16.msra.mxu0 0
        %1479 = vmatprep.mubr.bf16.mxu0 0
        %1480 = vmatmul.mubr.bf16.gmra.mrb[0].mxu0 %v1446
        %v1481 = vpop.f32.mrb[0].mxu0
        %v1482 = vadd.f32 0.0, %v1481
        %v1483 = vpop.f32.mrb[0].mxu0
        %v1484 = vadd.f32 0.0, %v1483
        %v1485 = vpop.f32.mrb[0].mxu0
        %v1486 = vadd.f32 0.0, %v1485
        %v1487 = vpop.f32.mrb[0].mxu0
        %v1488 = vadd.f32 0.0, %v1487
        %1489 = vdwg.mxu0
        %s1490 = smul.u32 8, 2
        %s1491 = smul.addr %s1490, 8
        %s1492 = scalar_lea.vmem [#allocation4], %s1491
        %v1493 = vld [vmem:[%s1492] sm:$0xff]
        %v1494 = vld [vmem:[%s1492 + $0x8] sm:$0xff]
        %v1495 = vld [vmem:[%s1492 + $0x10] sm:$0xff]
        %v1496 = vld [vmem:[%s1492 + $0x18] sm:$0xff]
        %v1497 = vadd.f32 %v1493, %v1482
        %v1498 = vadd.f32 %v1494, %v1484
        %v1499 = vadd.f32 %v1495, %v1486
        %v1500 = vadd.f32 %v1496, %v1488
        %v1501 = vmul.f32 %v1497, 0.5
        %v1502 = vmul.f32 %v1499, 0.5
        %v1503 = vtanh.pop %v1501
        %v1504 = vtanh.pop %v1502
        %v1505 = vmul.f32 %v1503, 0.5
        %v1506 = vmul.f32 %v1504, 0.5
        %v1507 = vadd.f32 %v1505, 0.5
        %v1508 = vadd.f32 %v1506, 0.5
        %v1509 = vsub.f32 %v1435, %v1498
        %v1510 = vsub.f32 %v1436, %v1500
        %v1511 = vmul.f32 %v1507, %v1509
        %v1512 = vmul.f32 %v1508, %v1510
        %v1513 = vadd.f32 %v1498, %v1511
        %v1514 = vadd.f32 %v1500, %v1512
        %vm1515 = vcmp.gt.f32.partialorder %v1513, 1.0
        %vm1516 = vcmp.gt.f32.partialorder %v1514, 1.0
        %v1517 = vsel %vm1515, 1, 0
        %v1518 = vsel %vm1516, 1, 0
        %v1519 = vcvt.s32.f32 %v1517
        %v1520 = vcvt.s32.f32 %v1518
        %s1521 = scalar_lea.vmem %s431, 64 [#allocation7]
        %1522 = vst [vmem:[%s1521] sm:$0xff] %v1519
        %1523 = vst [vmem:[%s1521 + $0x8] sm:$0xff] %v1520
        %v1524 = vpack.c.bf16 %v1520, %v1519
        %1525 = vmatprep.subr.bf16.mxu0 %v1111
        %1526 = vmatpush1.bf16.msra.mxu0 %v1110
        %1527 = vmatprep.subr.bf16.mxu0 %v1113
        %1528 = vmatpush1.bf16.msra.mxu0 %v1112
        %1529 = vmatprep.subr.bf16.mxu0 %v1115
        %1530 = vmatpush1.bf16.msra.mxu0 %v1114
        %1531 = vmatprep.subr.bf16.mxu0 %v1117
        %1532 = vmatpush1.bf16.msra.mxu0 %v1116
        %1533 = vmatprep.subr.bf16.mxu0 %v1119
        %1534 = vmatpush1.bf16.msra.mxu0 %v1118
        %1535 = vmatprep.subr.bf16.mxu0 %v1121
        %1536 = vmatpush1.bf16.msra.mxu0 %v1120
        %1537 = vmatprep.subr.bf16.mxu0 %v1123
        %1538 = vmatpush1.bf16.msra.mxu0 %v1122
        %1539 = vmatprep.subr.bf16.mxu0 %v1125
        %1540 = vmatpush1.bf16.msra.mxu0 %v1124
        %1541 = vmatprep.subr.bf16.mxu0 0
        %1542 = vmatpush1.bf16.msra.mxu0 0
        %1543 = vmatprep.subr.bf16.mxu0 0
        %1544 = vmatpush1.bf16.msra.mxu0 0
        %1545 = vmatprep.subr.bf16.mxu0 0
        %1546 = vmatpush1.bf16.msra.mxu0 0
        %1547 = vmatprep.subr.bf16.mxu0 0
        %1548 = vmatpush1.bf16.msra.mxu0 0
        %1549 = vmatprep.subr.bf16.mxu0 0
        %1550 = vmatpush1.bf16.msra.mxu0 0
        %1551 = vmatprep.subr.bf16.mxu0 0
        %1552 = vmatpush1.bf16.msra.mxu0 0
        %1553 = vmatprep.subr.bf16.mxu0 0
        %1554 = vmatpush1.bf16.msra.mxu0 0
        %1555 = vmatprep.subr.bf16.mxu0 0
        %1556 = vmatpush1.bf16.msra.mxu0 0
        %1557 = vmatprep.mubr.bf16.mxu0 0
        %1558 = vmatmul.mubr.bf16.gmra.mrb[0].mxu0 %v1524
        %v1559 = vpop.f32.mrb[0].mxu0
        %v1560 = vadd.f32 0.0, %v1559
        %v1561 = vpop.f32.mrb[0].mxu0
        %v1562 = vadd.f32 0.0, %v1561
        %v1563 = vpop.f32.mrb[0].mxu0
        %v1564 = vadd.f32 0.0, %v1563
        %v1565 = vpop.f32.mrb[0].mxu0
        %v1566 = vadd.f32 0.0, %v1565
        %1567 = vdwg.mxu0
        %s1568 = smul.u32 10, 2
        %s1569 = smul.addr %s1568, 8
        %s1570 = scalar_lea.vmem [#allocation4], %s1569
        %v1571 = vld [vmem:[%s1570] sm:$0xff]
        %v1572 = vld [vmem:[%s1570 + $0x8] sm:$0xff]
        %v1573 = vld [vmem:[%s1570 + $0x10] sm:$0xff]
        %v1574 = vld [vmem:[%s1570 + $0x18] sm:$0xff]
        %v1575 = vadd.f32 %v1571, %v1560
        %v1576 = vadd.f32 %v1572, %v1562
        %v1577 = vadd.f32 %v1573, %v1564
        %v1578 = vadd.f32 %v1574, %v1566
        %v1579 = vmul.f32 %v1575, 0.5
        %v1580 = vmul.f32 %v1577, 0.5
        %v1581 = vtanh.pop %v1579
        %v1582 = vtanh.pop %v1580
        %v1583 = vmul.f32 %v1581, 0.5
        %v1584 = vmul.f32 %v1582, 0.5
        %v1585 = vadd.f32 %v1583, 0.5
        %v1586 = vadd.f32 %v1584, 0.5
        %v1587 = vsub.f32 %v1513, %v1576
        %v1588 = vsub.f32 %v1514, %v1578
        %v1589 = vmul.f32 %v1585, %v1587
        %v1590 = vmul.f32 %v1586, %v1588
        %v1591 = vadd.f32 %v1576, %v1589
        %v1592 = vadd.f32 %v1578, %v1590
        %vm1593 = vcmp.gt.f32.partialorder %v1591, 1.0
        %vm1594 = vcmp.gt.f32.partialorder %v1592, 1.0
        %v1595 = vsel %vm1593, 1, 0
        %v1596 = vsel %vm1594, 1, 0
        %v1597 = vcvt.s32.f32 %v1595
        %v1598 = vcvt.s32.f32 %v1596
        %s1599 = scalar_lea.vmem %s431, 80 [#allocation7]
        %1600 = vst [vmem:[%s1599] sm:$0xff] %v1597
        %1601 = vst [vmem:[%s1599 + $0x8] sm:$0xff] %v1598
        %v1602 = vpack.c.bf16 %v1598, %v1597
        %1603 = vmatprep.subr.bf16.mxu0 %v1111
        %1604 = vmatpush1.bf16.msra.mxu0 %v1110
        %1605 = vmatprep.subr.bf16.mxu0 %v1113
        %1606 = vmatpush1.bf16.msra.mxu0 %v1112
        %1607 = vmatprep.subr.bf16.mxu0 %v1115
        %1608 = vmatpush1.bf16.msra.mxu0 %v1114
        %1609 = vmatprep.subr.bf16.mxu0 %v1117
        %1610 = vmatpush1.bf16.msra.mxu0 %v1116
        %1611 = vmatprep.subr.bf16.mxu0 %v1119
        %1612 = vmatpush1.bf16.msra.mxu0 %v1118
        %1613 = vmatprep.subr.bf16.mxu0 %v1121
        %1614 = vmatpush1.bf16.msra.mxu0 %v1120
        %1615 = vmatprep.subr.bf16.mxu0 %v1123
        %1616 = vmatpush1.bf16.msra.mxu0 %v1122
        %1617 = vmatprep.subr.bf16.mxu0 %v1125
        %1618 = vmatpush1.bf16.msra.mxu0 %v1124
        %1619 = vmatprep.subr.bf16.mxu0 0
        %1620 = vmatpush1.bf16.msra.mxu0 0
        %1621 = vmatprep.subr.bf16.mxu0 0
        %1622 = vmatpush1.bf16.msra.mxu0 0
        %1623 = vmatprep.subr.bf16.mxu0 0
        %1624 = vmatpush1.bf16.msra.mxu0 0
        %1625 = vmatprep.subr.bf16.mxu0 0
        %1626 = vmatpush1.bf16.msra.mxu0 0
        %1627 = vmatprep.subr.bf16.mxu0 0
        %1628 = vmatpush1.bf16.msra.mxu0 0
        %1629 = vmatprep.subr.bf16.mxu0 0
        %1630 = vmatpush1.bf16.msra.mxu0 0
        %1631 = vmatprep.subr.bf16.mxu0 0
        %1632 = vmatpush1.bf16.msra.mxu0 0
        %1633 = vmatprep.subr.bf16.mxu0 0
        %1634 = vmatpush1.bf16.msra.mxu0 0
        %1635 = vmatprep.mubr.bf16.mxu0 0
        %1636 = vmatmul.mubr.bf16.gmra.mrb[0].mxu0 %v1602
        %v1637 = vpop.f32.mrb[0].mxu0
        %v1638 = vadd.f32 0.0, %v1637
        %v1639 = vpop.f32.mrb[0].mxu0
        %v1640 = vadd.f32 0.0, %v1639
        %v1641 = vpop.f32.mrb[0].mxu0
        %v1642 = vadd.f32 0.0, %v1641
        %v1643 = vpop.f32.mrb[0].mxu0
        %v1644 = vadd.f32 0.0, %v1643
        %1645 = vdwg.mxu0
        %s1646 = smul.u32 12, 2
        %s1647 = smul.addr %s1646, 8
        %s1648 = scalar_lea.vmem [#allocation4], %s1647
        %v1649 = vld [vmem:[%s1648] sm:$0xff]
        %v1650 = vld [vmem:[%s1648 + $0x8] sm:$0xff]
        %v1651 = vld [vmem:[%s1648 + $0x10] sm:$0xff]
        %v1652 = vld [vmem:[%s1648 + $0x18] sm:$0xff]
        %v1653 = vadd.f32 %v1649, %v1638
        %v1654 = vadd.f32 %v1650, %v1640
        %v1655 = vadd.f32 %v1651, %v1642
        %v1656 = vadd.f32 %v1652, %v1644
        %v1657 = vmul.f32 %v1653, 0.5
        %v1658 = vmul.f32 %v1655, 0.5
        %v1659 = vtanh.pop %v1657
        %v1660 = vtanh.pop %v1658
        %v1661 = vmul.f32 %v1659, 0.5
        %v1662 = vmul.f32 %v1660, 0.5
        %v1663 = vadd.f32 %v1661, 0.5
        %v1664 = vadd.f32 %v1662, 0.5
        %v1665 = vsub.f32 %v1591, %v1654
        %v1666 = vsub.f32 %v1592, %v1656
        %v1667 = vmul.f32 %v1663, %v1665
        %v1668 = vmul.f32 %v1664, %v1666
        %v1669 = vadd.f32 %v1654, %v1667
        %v1670 = vadd.f32 %v1656, %v1668
        %vm1671 = vcmp.gt.f32.partialorder %v1669, 1.0
        %vm1672 = vcmp.gt.f32.partialorder %v1670, 1.0
        %v1673 = vsel %vm1671, 1, 0
        %v1674 = vsel %vm1672, 1, 0
        %v1675 = vcvt.s32.f32 %v1673
        %v1676 = vcvt.s32.f32 %v1674
        %s1677 = scalar_lea.vmem %s431, 96 [#allocation7]
        %1678 = vst [vmem:[%s1677] sm:$0xff] %v1675
        %1679 = vst [vmem:[%s1677 + $0x8] sm:$0xff] %v1676
        %v1680 = vpack.c.bf16 %v1676, %v1675
        %1681 = vmatprep.subr.bf16.mxu0 %v1111
        %1682 = vmatpush1.bf16.msra.mxu0 %v1110
        %1683 = vmatprep.subr.bf16.mxu0 %v1113
        %1684 = vmatpush1.bf16.msra.mxu0 %v1112
        %1685 = vmatprep.subr.bf16.mxu0 %v1115
        %1686 = vmatpush1.bf16.msra.mxu0 %v1114
        %1687 = vmatprep.subr.bf16.mxu0 %v1117
        %1688 = vmatpush1.bf16.msra.mxu0 %v1116
        %1689 = vmatprep.subr.bf16.mxu0 %v1119
        %1690 = vmatpush1.bf16.msra.mxu0 %v1118
        %1691 = vmatprep.subr.bf16.mxu0 %v1121
        %1692 = vmatpush1.bf16.msra.mxu0 %v1120
        %1693 = vmatprep.subr.bf16.mxu0 %v1123
        %1694 = vmatpush1.bf16.msra.mxu0 %v1122
        %1695 = vmatprep.subr.bf16.mxu0 %v1125
        %1696 = vmatpush1.bf16.msra.mxu0 %v1124
        %1697 = vmatprep.subr.bf16.mxu0 0
        %1698 = vmatpush1.bf16.msra.mxu0 0
        %1699 = vmatprep.subr.bf16.mxu0 0
        %1700 = vmatpush1.bf16.msra.mxu0 0
        %1701 = vmatprep.subr.bf16.mxu0 0
        %1702 = vmatpush1.bf16.msra.mxu0 0
        %1703 = vmatprep.subr.bf16.mxu0 0
        %1704 = vmatpush1.bf16.msra.mxu0 0
        %1705 = vmatprep.subr.bf16.mxu0 0
        %1706 = vmatpush1.bf16.msra.mxu0 0
        %1707 = vmatprep.subr.bf16.mxu0 0
        %1708 = vmatpush1.bf16.msra.mxu0 0
        %1709 = vmatprep.subr.bf16.mxu0 0
        %1710 = vmatpush1.bf16.msra.mxu0 0
        %1711 = vmatprep.subr.bf16.mxu0 0
        %1712 = vmatpush1.bf16.msra.mxu0 0
        %1713 = vmatprep.mubr.bf16.mxu0 0
        %1714 = vmatmul.mubr.bf16.gmra.mrb[0].mxu0 %v1680
        %v1715 = vpop.f32.mrb[0].mxu0
        %v1716 = vadd.f32 0.0, %v1715
        %v1717 = vpop.f32.mrb[0].mxu0
        %v1718 = vadd.f32 0.0, %v1717
        %v1719 = vpop.f32.mrb[0].mxu0
        %v1720 = vadd.f32 0.0, %v1719
        %v1721 = vpop.f32.mrb[0].mxu0
        %v1722 = vadd.f32 0.0, %v1721
        %1723 = vdwg.mxu0
        %s1724 = smul.u32 14, 2
        %s1725 = smul.addr %s1724, 8
        %s1726 = scalar_lea.vmem [#allocation4], %s1725
        %v1727 = vld [vmem:[%s1726] sm:$0xff]
        %v1728 = vld [vmem:[%s1726 + $0x8] sm:$0xff]
        %v1729 = vld [vmem:[%s1726 + $0x10] sm:$0xff]
        %v1730 = vld [vmem:[%s1726 + $0x18] sm:$0xff]
        %v1731 = vadd.f32 %v1727, %v1716
        %v1732 = vadd.f32 %v1728, %v1718
        %v1733 = vadd.f32 %v1729, %v1720
        %v1734 = vadd.f32 %v1730, %v1722
        %v1735 = vmul.f32 %v1731, 0.5
        %v1736 = vmul.f32 %v1733, 0.5
        %v1737 = vtanh.pop %v1735
        %v1738 = vtanh.pop %v1736
        %v1739 = vmul.f32 %v1737, 0.5
        %v1740 = vmul.f32 %v1738, 0.5
        %v1741 = vadd.f32 %v1739, 0.5
        %v1742 = vadd.f32 %v1740, 0.5
        %v1743 = vsub.f32 %v1669, %v1732
        %v1744 = vsub.f32 %v1670, %v1734
        %v1745 = vmul.f32 %v1741, %v1743
        %v1746 = vmul.f32 %v1742, %v1744
        %v1747 = vadd.f32 %v1732, %v1745
        %v1748 = vadd.f32 %v1734, %v1746
        %vm1749 = vcmp.gt.f32.partialorder %v1747, 1.0
        %vm1750 = vcmp.gt.f32.partialorder %v1748, 1.0
        %v1751 = vsel %vm1749, 1, 0
        %v1752 = vsel %vm1750, 1, 0
        %v1753 = vcvt.s32.f32 %v1751
        %v1754 = vcvt.s32.f32 %v1752
        %s1755 = scalar_lea.vmem %s431, 112 [#allocation7]
        %1756 = vst [vmem:[%s1755] sm:$0xff] %v1753
        %1757 = vst [vmem:[%s1755 + $0x8] sm:$0xff] %v1754
        %v1758 = vpack.c.bf16 %v1754, %v1753
        %1759 = vmatprep.subr.bf16.mxu0 %v1111
        %1760 = vmatpush1.bf16.msra.mxu0 %v1110
        %1761 = vmatprep.subr.bf16.mxu0 %v1113
        %1762 = vmatpush1.bf16.msra.mxu0 %v1112
        %1763 = vmatprep.subr.bf16.mxu0 %v1115
        %1764 = vmatpush1.bf16.msra.mxu0 %v1114
        %1765 = vmatprep.subr.bf16.mxu0 %v1117
        %1766 = vmatpush1.bf16.msra.mxu0 %v1116
        %1767 = vmatprep.subr.bf16.mxu0 %v1119
        %1768 = vmatpush1.bf16.msra.mxu0 %v1118
        %1769 = vmatprep.subr.bf16.mxu0 %v1121
        %1770 = vmatpush1.bf16.msra.mxu0 %v1120
        %1771 = vmatprep.subr.bf16.mxu0 %v1123
        %1772 = vmatpush1.bf16.msra.mxu0 %v1122
        %1773 = vmatprep.subr.bf16.mxu0 %v1125
        %1774 = vmatpush1.bf16.msra.mxu0 %v1124
        %1775 = vmatprep.subr.bf16.mxu0 0
        %1776 = vmatpush1.bf16.msra.mxu0 0
        %1777 = vmatprep.subr.bf16.mxu0 0
        %1778 = vmatpush1.bf16.msra.mxu0 0
        %1779 = vmatprep.subr.bf16.mxu0 0
        %1780 = vmatpush1.bf16.msra.mxu0 0
        %1781 = vmatprep.subr.bf16.mxu0 0
        %1782 = vmatpush1.bf16.msra.mxu0 0
        %1783 = vmatprep.subr.bf16.mxu0 0
        %1784 = vmatpush1.bf16.msra.mxu0 0
        %1785 = vmatprep.subr.bf16.mxu0 0
        %1786 = vmatpush1.bf16.msra.mxu0 0
        %1787 = vmatprep.subr.bf16.mxu0 0
        %1788 = vmatpush1.bf16.msra.mxu0 0
        %1789 = vmatprep.subr.bf16.mxu0 0
        %1790 = vmatpush1.bf16.msra.mxu0 0
        %1791 = vmatprep.mubr.bf16.mxu0 0
        %1792 = vmatmul.mubr.bf16.gmra.mrb[0].mxu0 %v1758
        %v1793 = vpop.f32.mrb[0].mxu0
        %v1794 = vadd.f32 0.0, %v1793
        %v1795 = vpop.f32.mrb[0].mxu0
        %v1796 = vadd.f32 0.0, %v1795
        %v1797 = vpop.f32.mrb[0].mxu0
        %v1798 = vadd.f32 0.0, %v1797
        %v1799 = vpop.f32.mrb[0].mxu0
        %v1800 = vadd.f32 0.0, %v1799
        %1801 = vdwg.mxu0
        %s1802 = smul.u32 16, 2
        %s1803 = smul.addr %s1802, 8
        %s1804 = scalar_lea.vmem [#allocation4], %s1803
        %v1805 = vld [vmem:[%s1804] sm:$0xff]
        %v1806 = vld [vmem:[%s1804 + $0x8] sm:$0xff]
        %v1807 = vld [vmem:[%s1804 + $0x10] sm:$0xff]
        %v1808 = vld [vmem:[%s1804 + $0x18] sm:$0xff]
        %v1809 = vadd.f32 %v1805, %v1794
        %v1810 = vadd.f32 %v1806, %v1796
        %v1811 = vadd.f32 %v1807, %v1798
        %v1812 = vadd.f32 %v1808, %v1800
        %v1813 = vmul.f32 %v1809, 0.5
        %v1814 = vmul.f32 %v1811, 0.5
        %v1815 = vtanh.pop %v1813
        %v1816 = vtanh.pop %v1814
        %v1817 = vmul.f32 %v1815, 0.5
        %v1818 = vmul.f32 %v1816, 0.5
        %v1819 = vadd.f32 %v1817, 0.5
        %v1820 = vadd.f32 %v1818, 0.5
        %v1821 = vsub.f32 %v1747, %v1810
        %v1822 = vsub.f32 %v1748, %v1812
        %v1823 = vmul.f32 %v1819, %v1821
        %v1824 = vmul.f32 %v1820, %v1822
        %v1825 = vadd.f32 %v1810, %v1823
        %v1826 = vadd.f32 %v1812, %v1824
        %vm1827 = vcmp.gt.f32.partialorder %v1825, 1.0
        %vm1828 = vcmp.gt.f32.partialorder %v1826, 1.0
        %v1829 = vsel %vm1827, 1, 0
        %v1830 = vsel %vm1828, 1, 0
        %v1831 = vcvt.s32.f32 %v1829
        %v1832 = vcvt.s32.f32 %v1830
        %s1833 = scalar_lea.vmem %s431, 128 [#allocation7]
        %1834 = vst [vmem:[%s1833] sm:$0xff] %v1831
        %1835 = vst [vmem:[%s1833 + $0x8] sm:$0xff] %v1832
        %v1836 = vpack.c.bf16 %v1832, %v1831
        %1837 = vmatprep.subr.bf16.mxu0 %v1111
        %1838 = vmatpush1.bf16.msra.mxu0 %v1110
        %1839 = vmatprep.subr.bf16.mxu0 %v1113
        %1840 = vmatpush1.bf16.msra.mxu0 %v1112
        %1841 = vmatprep.subr.bf16.mxu0 %v1115
        %1842 = vmatpush1.bf16.msra.mxu0 %v1114
        %1843 = vmatprep.subr.bf16.mxu0 %v1117
        %1844 = vmatpush1.bf16.msra.mxu0 %v1116
        %1845 = vmatprep.subr.bf16.mxu0 %v1119
        %1846 = vmatpush1.bf16.msra.mxu0 %v1118
        %1847 = vmatprep.subr.bf16.mxu0 %v1121
        %1848 = vmatpush1.bf16.msra.mxu0 %v1120
        %1849 = vmatprep.subr.bf16.mxu0 %v1123
        %1850 = vmatpush1.bf16.msra.mxu0 %v1122
        %1851 = vmatprep.subr.bf16.mxu0 %v1125
        %1852 = vmatpush1.bf16.msra.mxu0 %v1124
        %1853 = vmatprep.subr.bf16.mxu0 0
        %1854 = vmatpush1.bf16.msra.mxu0 0
        %1855 = vmatprep.subr.bf16.mxu0 0
        %1856 = vmatpush1.bf16.msra.mxu0 0
        %1857 = vmatprep.subr.bf16.mxu0 0
        %1858 = vmatpush1.bf16.msra.mxu0 0
        %1859 = vmatprep.subr.bf16.mxu0 0
        %1860 = vmatpush1.bf16.msra.mxu0 0
        %1861 = vmatprep.subr.bf16.mxu0 0
        %1862 = vmatpush1.bf16.msra.mxu0 0
        %1863 = vmatprep.subr.bf16.mxu0 0
        %1864 = vmatpush1.bf16.msra.mxu0 0
        %1865 = vmatprep.subr.bf16.mxu0 0
        %1866 = vmatpush1.bf16.msra.mxu0 0
        %1867 = vmatprep.subr.bf16.mxu0 0
        %1868 = vmatpush1.bf16.msra.mxu0 0
        %1869 = vmatprep.mubr.bf16.mxu0 0
        %1870 = vmatmul.mubr.bf16.gmra.mrb[0].mxu0 %v1836
        %v1871 = vpop.f32.mrb[0].mxu0
        %v1872 = vadd.f32 0.0, %v1871
        %v1873 = vpop.f32.mrb[0].mxu0
        %v1874 = vadd.f32 0.0, %v1873
        %v1875 = vpop.f32.mrb[0].mxu0
        %v1876 = vadd.f32 0.0, %v1875
        %v1877 = vpop.f32.mrb[0].mxu0
        %v1878 = vadd.f32 0.0, %v1877
        %1879 = vdwg.mxu0
        %s1880 = smul.u32 18, 2
        %s1881 = smul.addr %s1880, 8
        %s1882 = scalar_lea.vmem [#allocation4], %s1881
        %v1883 = vld [vmem:[%s1882] sm:$0xff]
        %v1884 = vld [vmem:[%s1882 + $0x8] sm:$0xff]
        %v1885 = vld [vmem:[%s1882 + $0x10] sm:$0xff]
        %v1886 = vld [vmem:[%s1882 + $0x18] sm:$0xff]
        %v1887 = vadd.f32 %v1883, %v1872
        %v1888 = vadd.f32 %v1884, %v1874
        %v1889 = vadd.f32 %v1885, %v1876
        %v1890 = vadd.f32 %v1886, %v1878
        %v1891 = vmul.f32 %v1887, 0.5
        %v1892 = vmul.f32 %v1889, 0.5
        %v1893 = vtanh.pop %v1891
        %v1894 = vtanh.pop %v1892
        %v1895 = vmul.f32 %v1893, 0.5
        %v1896 = vmul.f32 %v1894, 0.5
        %v1897 = vadd.f32 %v1895, 0.5
        %v1898 = vadd.f32 %v1896, 0.5
        %v1899 = vsub.f32 %v1825, %v1888
        %v1900 = vsub.f32 %v1826, %v1890
        %v1901 = vmul.f32 %v1897, %v1899
        %v1902 = vmul.f32 %v1898, %v1900
        %v1903 = vadd.f32 %v1888, %v1901
        %v1904 = vadd.f32 %v1890, %v1902
        %vm1905 = vcmp.gt.f32.partialorder %v1903, 1.0
        %vm1906 = vcmp.gt.f32.partialorder %v1904, 1.0
        %v1907 = vsel %vm1905, 1, 0
        %v1908 = vsel %vm1906, 1, 0
        %v1909 = vcvt.s32.f32 %v1907
        %v1910 = vcvt.s32.f32 %v1908
        %s1911 = scalar_lea.vmem %s431, 144 [#allocation7]
        %1912 = vst [vmem:[%s1911] sm:$0xff] %v1909
        %1913 = vst [vmem:[%s1911 + $0x8] sm:$0xff] %v1910
        %v1914 = vpack.c.bf16 %v1910, %v1909
        %1915 = vmatprep.subr.bf16.mxu0 %v1111
        %1916 = vmatpush1.bf16.msra.mxu0 %v1110
        %1917 = vmatprep.subr.bf16.mxu0 %v1113
        %1918 = vmatpush1.bf16.msra.mxu0 %v1112
        %1919 = vmatprep.subr.bf16.mxu0 %v1115
        %1920 = vmatpush1.bf16.msra.mxu0 %v1114
        %1921 = vmatprep.subr.bf16.mxu0 %v1117
        %1922 = vmatpush1.bf16.msra.mxu0 %v1116
        %1923 = vmatprep.subr.bf16.mxu0 %v1119
        %1924 = vmatpush1.bf16.msra.mxu0 %v1118
        %1925 = vmatprep.subr.bf16.mxu0 %v1121
        %1926 = vmatpush1.bf16.msra.mxu0 %v1120
        %1927 = vmatprep.subr.bf16.mxu0 %v1123
        %1928 = vmatpush1.bf16.msra.mxu0 %v1122
        %1929 = vmatprep.subr.bf16.mxu0 %v1125
        %1930 = vmatpush1.bf16.msra.mxu0 %v1124
        %1931 = vmatprep.subr.bf16.mxu0 0
        %1932 = vmatpush1.bf16.msra.mxu0 0
        %1933 = vmatprep.subr.bf16.mxu0 0
        %1934 = vmatpush1.bf16.msra.mxu0 0
        %1935 = vmatprep.subr.bf16.mxu0 0
        %1936 = vmatpush1.bf16.msra.mxu0 0
        %1937 = vmatprep.subr.bf16.mxu0 0
        %1938 = vmatpush1.bf16.msra.mxu0 0
        %1939 = vmatprep.subr.bf16.mxu0 0
        %1940 = vmatpush1.bf16.msra.mxu0 0
        %1941 = vmatprep.subr.bf16.mxu0 0
        %1942 = vmatpush1.bf16.msra.mxu0 0
        %1943 = vmatprep.subr.bf16.mxu0 0
        %1944 = vmatpush1.bf16.msra.mxu0 0
        %1945 = vmatprep.subr.bf16.mxu0 0
        %1946 = vmatpush1.bf16.msra.mxu0 0
        %1947 = vmatprep.mubr.bf16.mxu0 0
        %1948 = vmatmul.mubr.bf16.gmra.mrb[0].mxu0 %v1914
        %v1949 = vpop.f32.mrb[0].mxu0
        %v1950 = vadd.f32 0.0, %v1949
        %v1951 = vpop.f32.mrb[0].mxu0
        %v1952 = vadd.f32 0.0, %v1951
        %v1953 = vpop.f32.mrb[0].mxu0
        %v1954 = vadd.f32 0.0, %v1953
        %v1955 = vpop.f32.mrb[0].mxu0
        %v1956 = vadd.f32 0.0, %v1955
        %1957 = vdwg.mxu0
        %s1958 = smul.u32 20, 2
        %s1959 = smul.addr %s1958, 8
        %s1960 = scalar_lea.vmem [#allocation4], %s1959
        %v1961 = vld [vmem:[%s1960] sm:$0xff]
        %v1962 = vld [vmem:[%s1960 + $0x8] sm:$0xff]
        %v1963 = vld [vmem:[%s1960 + $0x10] sm:$0xff]
        %v1964 = vld [vmem:[%s1960 + $0x18] sm:$0xff]
        %v1965 = vadd.f32 %v1961, %v1950
        %v1966 = vadd.f32 %v1962, %v1952
        %v1967 = vadd.f32 %v1963, %v1954
        %v1968 = vadd.f32 %v1964, %v1956
        %v1969 = vmul.f32 %v1965, 0.5
        %v1970 = vmul.f32 %v1967, 0.5
        %v1971 = vtanh.pop %v1969
        %v1972 = vtanh.pop %v1970
        %v1973 = vmul.f32 %v1971, 0.5
        %v1974 = vmul.f32 %v1972, 0.5
        %v1975 = vadd.f32 %v1973, 0.5
        %v1976 = vadd.f32 %v1974, 0.5
        %v1977 = vsub.f32 %v1903, %v1966
        %v1978 = vsub.f32 %v1904, %v1968
        %v1979 = vmul.f32 %v1975, %v1977
        %v1980 = vmul.f32 %v1976, %v1978
        %v1981 = vadd.f32 %v1966, %v1979
        %v1982 = vadd.f32 %v1968, %v1980
        %vm1983 = vcmp.gt.f32.partialorder %v1981, 1.0
        %vm1984 = vcmp.gt.f32.partialorder %v1982, 1.0
        %v1985 = vsel %vm1983, 1, 0
        %v1986 = vsel %vm1984, 1, 0
        %v1987 = vcvt.s32.f32 %v1985
        %v1988 = vcvt.s32.f32 %v1986
        %s1989 = scalar_lea.vmem %s431, 160 [#allocation7]
        %1990 = vst [vmem:[%s1989] sm:$0xff] %v1987
        %1991 = vst [vmem:[%s1989 + $0x8] sm:$0xff] %v1988
        %v1992 = vpack.c.bf16 %v1988, %v1987
        %1993 = vmatprep.subr.bf16.mxu0 %v1111
        %1994 = vmatpush1.bf16.msra.mxu0 %v1110
        %1995 = vmatprep.subr.bf16.mxu0 %v1113
        %1996 = vmatpush1.bf16.msra.mxu0 %v1112
        %1997 = vmatprep.subr.bf16.mxu0 %v1115
        %1998 = vmatpush1.bf16.msra.mxu0 %v1114
        %1999 = vmatprep.subr.bf16.mxu0 %v1117
        %2000 = vmatpush1.bf16.msra.mxu0 %v1116
        %2001 = vmatprep.subr.bf16.mxu0 %v1119
        %2002 = vmatpush1.bf16.msra.mxu0 %v1118
        %2003 = vmatprep.subr.bf16.mxu0 %v1121
        %2004 = vmatpush1.bf16.msra.mxu0 %v1120
        %2005 = vmatprep.subr.bf16.mxu0 %v1123
        %2006 = vmatpush1.bf16.msra.mxu0 %v1122
        %2007 = vmatprep.subr.bf16.mxu0 %v1125
        %2008 = vmatpush1.bf16.msra.mxu0 %v1124
        %2009 = vmatprep.subr.bf16.mxu0 0
        %2010 = vmatpush1.bf16.msra.mxu0 0
        %2011 = vmatprep.subr.bf16.mxu0 0
        %2012 = vmatpush1.bf16.msra.mxu0 0
        %2013 = vmatprep.subr.bf16.mxu0 0
        %2014 = vmatpush1.bf16.msra.mxu0 0
        %2015 = vmatprep.subr.bf16.mxu0 0
        %2016 = vmatpush1.bf16.msra.mxu0 0
        %2017 = vmatprep.subr.bf16.mxu0 0
        %2018 = vmatpush1.bf16.msra.mxu0 0
        %2019 = vmatprep.subr.bf16.mxu0 0
        %2020 = vmatpush1.bf16.msra.mxu0 0
        %2021 = vmatprep.subr.bf16.mxu0 0
        %2022 = vmatpush1.bf16.msra.mxu0 0
        %2023 = vmatprep.subr.bf16.mxu0 0
        %2024 = vmatpush1.bf16.msra.mxu0 0
        %2025 = vmatprep.mubr.bf16.mxu0 0
        %2026 = vmatmul.mubr.bf16.gmra.mrb[0].mxu0 %v1992
        %v2027 = vpop.f32.mrb[0].mxu0
        %v2028 = vadd.f32 0.0, %v2027
        %v2029 = vpop.f32.mrb[0].mxu0
        %v2030 = vadd.f32 0.0, %v2029
        %v2031 = vpop.f32.mrb[0].mxu0
        %v2032 = vadd.f32 0.0, %v2031
        %v2033 = vpop.f32.mrb[0].mxu0
        %v2034 = vadd.f32 0.0, %v2033
        %2035 = vdwg.mxu0
        %s2036 = smul.u32 22, 2
        %s2037 = smul.addr %s2036, 8
        %s2038 = scalar_lea.vmem [#allocation4], %s2037
        %v2039 = vld [vmem:[%s2038] sm:$0xff]
        %v2040 = vld [vmem:[%s2038 + $0x8] sm:$0xff]
        %v2041 = vld [vmem:[%s2038 + $0x10] sm:$0xff]
        %v2042 = vld [vmem:[%s2038 + $0x18] sm:$0xff]
        %v2043 = vadd.f32 %v2039, %v2028
        %v2044 = vadd.f32 %v2040, %v2030
        %v2045 = vadd.f32 %v2041, %v2032
        %v2046 = vadd.f32 %v2042, %v2034
        %v2047 = vmul.f32 %v2043, 0.5
        %v2048 = vmul.f32 %v2045, 0.5
        %v2049 = vtanh.pop %v2047
        %v2050 = vtanh.pop %v2048
        %v2051 = vmul.f32 %v2049, 0.5
        %v2052 = vmul.f32 %v2050, 0.5
        %v2053 = vadd.f32 %v2051, 0.5
        %v2054 = vadd.f32 %v2052, 0.5
        %v2055 = vsub.f32 %v1981, %v2044
        %v2056 = vsub.f32 %v1982, %v2046
        %v2057 = vmul.f32 %v2053, %v2055
        %v2058 = vmul.f32 %v2054, %v2056
        %v2059 = vadd.f32 %v2044, %v2057
        %v2060 = vadd.f32 %v2046, %v2058
        %vm2061 = vcmp.gt.f32.partialorder %v2059, 1.0
        %vm2062 = vcmp.gt.f32.partialorder %v2060, 1.0
        %v2063 = vsel %vm2061, 1, 0
        %v2064 = vsel %vm2062, 1, 0
        %v2065 = vcvt.s32.f32 %v2063
        %v2066 = vcvt.s32.f32 %v2064
        %s2067 = scalar_lea.vmem %s431, 176 [#allocation7]
        %2068 = vst [vmem:[%s2067] sm:$0xff] %v2065
        %2069 = vst [vmem:[%s2067 + $0x8] sm:$0xff] %v2066
        %v2070 = vpack.c.bf16 %v2066, %v2065
        %2071 = vmatprep.subr.bf16.mxu0 %v1111
        %2072 = vmatpush1.bf16.msra.mxu0 %v1110
        %2073 = vmatprep.subr.bf16.mxu0 %v1113
        %2074 = vmatpush1.bf16.msra.mxu0 %v1112
        %2075 = vmatprep.subr.bf16.mxu0 %v1115
        %2076 = vmatpush1.bf16.msra.mxu0 %v1114
        %2077 = vmatprep.subr.bf16.mxu0 %v1117
        %2078 = vmatpush1.bf16.msra.mxu0 %v1116
        %2079 = vmatprep.subr.bf16.mxu0 %v1119
        %2080 = vmatpush1.bf16.msra.mxu0 %v1118
        %2081 = vmatprep.subr.bf16.mxu0 %v1121
        %2082 = vmatpush1.bf16.msra.mxu0 %v1120
        %2083 = vmatprep.subr.bf16.mxu0 %v1123
        %2084 = vmatpush1.bf16.msra.mxu0 %v1122
        %2085 = vmatprep.subr.bf16.mxu0 %v1125
        %2086 = vmatpush1.bf16.msra.mxu0 %v1124
        %2087 = vmatprep.subr.bf16.mxu0 0
        %2088 = vmatpush1.bf16.msra.mxu0 0
        %2089 = vmatprep.subr.bf16.mxu0 0
        %2090 = vmatpush1.bf16.msra.mxu0 0
        %2091 = vmatprep.subr.bf16.mxu0 0
        %2092 = vmatpush1.bf16.msra.mxu0 0
        %2093 = vmatprep.subr.bf16.mxu0 0
        %2094 = vmatpush1.bf16.msra.mxu0 0
        %2095 = vmatprep.subr.bf16.mxu0 0
        %2096 = vmatpush1.bf16.msra.mxu0 0
        %2097 = vmatprep.subr.bf16.mxu0 0
        %2098 = vmatpush1.bf16.msra.mxu0 0
        %2099 = vmatprep.subr.bf16.mxu0 0
        %2100 = vmatpush1.bf16.msra.mxu0 0
        %2101 = vmatprep.subr.bf16.mxu0 0
        %2102 = vmatpush1.bf16.msra.mxu0 0
        %2103 = vmatprep.mubr.bf16.mxu0 0
        %2104 = vmatmul.mubr.bf16.gmra.mrb[0].mxu0 %v2070
        %v2105 = vpop.f32.mrb[0].mxu0
        %v2106 = vadd.f32 0.0, %v2105
        %v2107 = vpop.f32.mrb[0].mxu0
        %v2108 = vadd.f32 0.0, %v2107
        %v2109 = vpop.f32.mrb[0].mxu0
        %v2110 = vadd.f32 0.0, %v2109
        %v2111 = vpop.f32.mrb[0].mxu0
        %v2112 = vadd.f32 0.0, %v2111
        %2113 = vdwg.mxu0
        %s2114 = smul.u32 24, 2
        %s2115 = smul.addr %s2114, 8
        %s2116 = scalar_lea.vmem [#allocation4], %s2115
        %v2117 = vld [vmem:[%s2116] sm:$0xff]
        %v2118 = vld [vmem:[%s2116 + $0x8] sm:$0xff]
        %v2119 = vld [vmem:[%s2116 + $0x10] sm:$0xff]
        %v2120 = vld [vmem:[%s2116 + $0x18] sm:$0xff]
        %v2121 = vadd.f32 %v2117, %v2106
        %v2122 = vadd.f32 %v2118, %v2108
        %v2123 = vadd.f32 %v2119, %v2110
        %v2124 = vadd.f32 %v2120, %v2112
        %v2125 = vmul.f32 %v2121, 0.5
        %v2126 = vmul.f32 %v2123, 0.5
        %v2127 = vtanh.pop %v2125
        %v2128 = vtanh.pop %v2126
        %v2129 = vmul.f32 %v2127, 0.5
        %v2130 = vmul.f32 %v2128, 0.5
        %v2131 = vadd.f32 %v2129, 0.5
        %v2132 = vadd.f32 %v2130, 0.5
        %v2133 = vsub.f32 %v2059, %v2122
        %v2134 = vsub.f32 %v2060, %v2124
        %v2135 = vmul.f32 %v2131, %v2133
        %v2136 = vmul.f32 %v2132, %v2134
        %v2137 = vadd.f32 %v2122, %v2135
        %v2138 = vadd.f32 %v2124, %v2136
        %vm2139 = vcmp.gt.f32.partialorder %v2137, 1.0
        %vm2140 = vcmp.gt.f32.partialorder %v2138, 1.0
        %v2141 = vsel %vm2139, 1, 0
        %v2142 = vsel %vm2140, 1, 0
        %v2143 = vcvt.s32.f32 %v2141
        %v2144 = vcvt.s32.f32 %v2142
        %s2145 = scalar_lea.vmem %s431, 192 [#allocation7]
        %2146 = vst [vmem:[%s2145] sm:$0xff] %v2143
        %2147 = vst [vmem:[%s2145 + $0x8] sm:$0xff] %v2144
        %v2148 = vpack.c.bf16 %v2144, %v2143
        %2149 = vmatprep.subr.bf16.mxu0 %v1111
        %2150 = vmatpush1.bf16.msra.mxu0 %v1110
        %2151 = vmatprep.subr.bf16.mxu0 %v1113
        %2152 = vmatpush1.bf16.msra.mxu0 %v1112
        %2153 = vmatprep.subr.bf16.mxu0 %v1115
        %2154 = vmatpush1.bf16.msra.mxu0 %v1114
        %2155 = vmatprep.subr.bf16.mxu0 %v1117
        %2156 = vmatpush1.bf16.msra.mxu0 %v1116
        %2157 = vmatprep.subr.bf16.mxu0 %v1119
        %2158 = vmatpush1.bf16.msra.mxu0 %v1118
        %2159 = vmatprep.subr.bf16.mxu0 %v1121
        %2160 = vmatpush1.bf16.msra.mxu0 %v1120
        %2161 = vmatprep.subr.bf16.mxu0 %v1123
        %2162 = vmatpush1.bf16.msra.mxu0 %v1122
        %2163 = vmatprep.subr.bf16.mxu0 %v1125
        %2164 = vmatpush1.bf16.msra.mxu0 %v1124
        %2165 = vmatprep.subr.bf16.mxu0 0
        %2166 = vmatpush1.bf16.msra.mxu0 0
        %2167 = vmatprep.subr.bf16.mxu0 0
        %2168 = vmatpush1.bf16.msra.mxu0 0
        %2169 = vmatprep.subr.bf16.mxu0 0
        %2170 = vmatpush1.bf16.msra.mxu0 0
        %2171 = vmatprep.subr.bf16.mxu0 0
        %2172 = vmatpush1.bf16.msra.mxu0 0
        %2173 = vmatprep.subr.bf16.mxu0 0
        %2174 = vmatpush1.bf16.msra.mxu0 0
        %2175 = vmatprep.subr.bf16.mxu0 0
        %2176 = vmatpush1.bf16.msra.mxu0 0
        %2177 = vmatprep.subr.bf16.mxu0 0
        %2178 = vmatpush1.bf16.msra.mxu0 0
        %2179 = vmatprep.subr.bf16.mxu0 0
        %2180 = vmatpush1.bf16.msra.mxu0 0
        %2181 = vmatprep.mubr.bf16.mxu0 0
        %2182 = vmatmul.mubr.bf16.gmra.mrb[0].mxu0 %v2148
        %v2183 = vpop.f32.mrb[0].mxu0
        %v2184 = vadd.f32 0.0, %v2183
        %v2185 = vpop.f32.mrb[0].mxu0
        %v2186 = vadd.f32 0.0, %v2185
        %v2187 = vpop.f32.mrb[0].mxu0
        %v2188 = vadd.f32 0.0, %v2187
        %v2189 = vpop.f32.mrb[0].mxu0
        %v2190 = vadd.f32 0.0, %v2189
        %2191 = vdwg.mxu0
        %s2192 = smul.u32 26, 2
        %s2193 = smul.addr %s2192, 8
        %s2194 = scalar_lea.vmem [#allocation4], %s2193
        %v2195 = vld [vmem:[%s2194] sm:$0xff]
        %v2196 = vld [vmem:[%s2194 + $0x8] sm:$0xff]
        %v2197 = vld [vmem:[%s2194 + $0x10] sm:$0xff]
        %v2198 = vld [vmem:[%s2194 + $0x18] sm:$0xff]
        %v2199 = vadd.f32 %v2195, %v2184
        %v2200 = vadd.f32 %v2196, %v2186
        %v2201 = vadd.f32 %v2197, %v2188
        %v2202 = vadd.f32 %v2198, %v2190
        %v2203 = vmul.f32 %v2199, 0.5
        %v2204 = vmul.f32 %v2201, 0.5
        %v2205 = vtanh.pop %v2203
        %v2206 = vtanh.pop %v2204
        %v2207 = vmul.f32 %v2205, 0.5
        %v2208 = vmul.f32 %v2206, 0.5
        %v2209 = vadd.f32 %v2207, 0.5
        %v2210 = vadd.f32 %v2208, 0.5
        %v2211 = vsub.f32 %v2137, %v2200
        %v2212 = vsub.f32 %v2138, %v2202
        %v2213 = vmul.f32 %v2209, %v2211
        %v2214 = vmul.f32 %v2210, %v2212
        %v2215 = vadd.f32 %v2200, %v2213
        %v2216 = vadd.f32 %v2202, %v2214
        %vm2217 = vcmp.gt.f32.partialorder %v2215, 1.0
        %vm2218 = vcmp.gt.f32.partialorder %v2216, 1.0
        %v2219 = vsel %vm2217, 1, 0
        %v2220 = vsel %vm2218, 1, 0
        %v2221 = vcvt.s32.f32 %v2219
        %v2222 = vcvt.s32.f32 %v2220
        %s2223 = scalar_lea.vmem %s431, 208 [#allocation7]
        %2224 = vst [vmem:[%s2223] sm:$0xff] %v2221
        %2225 = vst [vmem:[%s2223 + $0x8] sm:$0xff] %v2222
        %v2226 = vpack.c.bf16 %v2222, %v2221
        %2227 = vmatprep.subr.bf16.mxu0 %v1111
        %2228 = vmatpush1.bf16.msra.mxu0 %v1110
        %2229 = vmatprep.subr.bf16.mxu0 %v1113
        %2230 = vmatpush1.bf16.msra.mxu0 %v1112
        %2231 = vmatprep.subr.bf16.mxu0 %v1115
        %2232 = vmatpush1.bf16.msra.mxu0 %v1114
        %2233 = vmatprep.subr.bf16.mxu0 %v1117
        %2234 = vmatpush1.bf16.msra.mxu0 %v1116
        %2235 = vmatprep.subr.bf16.mxu0 %v1119
        %2236 = vmatpush1.bf16.msra.mxu0 %v1118
        %2237 = vmatprep.subr.bf16.mxu0 %v1121
        %2238 = vmatpush1.bf16.msra.mxu0 %v1120
        %2239 = vmatprep.subr.bf16.mxu0 %v1123
        %2240 = vmatpush1.bf16.msra.mxu0 %v1122
        %2241 = vmatprep.subr.bf16.mxu0 %v1125
        %2242 = vmatpush1.bf16.msra.mxu0 %v1124
        %2243 = vmatprep.subr.bf16.mxu0 0
        %2244 = vmatpush1.bf16.msra.mxu0 0
        %2245 = vmatprep.subr.bf16.mxu0 0
        %2246 = vmatpush1.bf16.msra.mxu0 0
        %2247 = vmatprep.subr.bf16.mxu0 0
        %2248 = vmatpush1.bf16.msra.mxu0 0
        %2249 = vmatprep.subr.bf16.mxu0 0
        %2250 = vmatpush1.bf16.msra.mxu0 0
        %2251 = vmatprep.subr.bf16.mxu0 0
        %2252 = vmatpush1.bf16.msra.mxu0 0
        %2253 = vmatprep.subr.bf16.mxu0 0
        %2254 = vmatpush1.bf16.msra.mxu0 0
        %2255 = vmatprep.subr.bf16.mxu0 0
        %2256 = vmatpush1.bf16.msra.mxu0 0
        %2257 = vmatprep.subr.bf16.mxu0 0
        %2258 = vmatpush1.bf16.msra.mxu0 0
        %2259 = vmatprep.mubr.bf16.mxu0 0
        %2260 = vmatmul.mubr.bf16.gmra.mrb[0].mxu0 %v2226
        %v2261 = vpop.f32.mrb[0].mxu0
        %v2262 = vadd.f32 0.0, %v2261
        %v2263 = vpop.f32.mrb[0].mxu0
        %v2264 = vadd.f32 0.0, %v2263
        %v2265 = vpop.f32.mrb[0].mxu0
        %v2266 = vadd.f32 0.0, %v2265
        %v2267 = vpop.f32.mrb[0].mxu0
        %v2268 = vadd.f32 0.0, %v2267
        %2269 = vdwg.mxu0
        %s2270 = smul.u32 28, 2
        %s2271 = smul.addr %s2270, 8
        %s2272 = scalar_lea.vmem [#allocation4], %s2271
        %v2273 = vld [vmem:[%s2272] sm:$0xff]
        %v2274 = vld [vmem:[%s2272 + $0x8] sm:$0xff]
        %v2275 = vld [vmem:[%s2272 + $0x10] sm:$0xff]
        %v2276 = vld [vmem:[%s2272 + $0x18] sm:$0xff]
        %v2277 = vadd.f32 %v2273, %v2262
        %v2278 = vadd.f32 %v2274, %v2264
        %v2279 = vadd.f32 %v2275, %v2266
        %v2280 = vadd.f32 %v2276, %v2268
        %v2281 = vmul.f32 %v2277, 0.5
        %v2282 = vmul.f32 %v2279, 0.5
        %v2283 = vtanh.pop %v2281
        %v2284 = vtanh.pop %v2282
        %v2285 = vmul.f32 %v2283, 0.5
        %v2286 = vmul.f32 %v2284, 0.5
        %v2287 = vadd.f32 %v2285, 0.5
        %v2288 = vadd.f32 %v2286, 0.5
        %v2289 = vsub.f32 %v2215, %v2278
        %v2290 = vsub.f32 %v2216, %v2280
        %v2291 = vmul.f32 %v2287, %v2289
        %v2292 = vmul.f32 %v2288, %v2290
        %v2293 = vadd.f32 %v2278, %v2291
        %v2294 = vadd.f32 %v2280, %v2292
        %vm2295 = vcmp.gt.f32.partialorder %v2293, 1.0
        %vm2296 = vcmp.gt.f32.partialorder %v2294, 1.0
        %v2297 = vsel %vm2295, 1, 0
        %v2298 = vsel %vm2296, 1, 0
        %v2299 = vcvt.s32.f32 %v2297
        %v2300 = vcvt.s32.f32 %v2298
        %s2301 = scalar_lea.vmem %s431, 224 [#allocation7]
        %2302 = vst [vmem:[%s2301] sm:$0xff] %v2299
        %2303 = vst [vmem:[%s2301 + $0x8] sm:$0xff] %v2300
        %v2304 = vpack.c.bf16 %v2300, %v2299
        %2305 = vmatprep.subr.bf16.mxu0 %v1111
        %2306 = vmatpush1.bf16.msra.mxu0 %v1110
        %2307 = vmatprep.subr.bf16.mxu0 %v1113
        %2308 = vmatpush1.bf16.msra.mxu0 %v1112
        %2309 = vmatprep.subr.bf16.mxu0 %v1115
        %2310 = vmatpush1.bf16.msra.mxu0 %v1114
        %2311 = vmatprep.subr.bf16.mxu0 %v1117
        %2312 = vmatpush1.bf16.msra.mxu0 %v1116
        %2313 = vmatprep.subr.bf16.mxu0 %v1119
        %2314 = vmatpush1.bf16.msra.mxu0 %v1118
        %2315 = vmatprep.subr.bf16.mxu0 %v1121
        %2316 = vmatpush1.bf16.msra.mxu0 %v1120
        %2317 = vmatprep.subr.bf16.mxu0 %v1123
        %2318 = vmatpush1.bf16.msra.mxu0 %v1122
        %2319 = vmatprep.subr.bf16.mxu0 %v1125
        %2320 = vmatpush1.bf16.msra.mxu0 %v1124
        %2321 = vmatprep.subr.bf16.mxu0 0
        %2322 = vmatpush1.bf16.msra.mxu0 0
        %2323 = vmatprep.subr.bf16.mxu0 0
        %2324 = vmatpush1.bf16.msra.mxu0 0
        %2325 = vmatprep.subr.bf16.mxu0 0
        %2326 = vmatpush1.bf16.msra.mxu0 0
        %2327 = vmatprep.subr.bf16.mxu0 0
        %2328 = vmatpush1.bf16.msra.mxu0 0
        %2329 = vmatprep.subr.bf16.mxu0 0
        %2330 = vmatpush1.bf16.msra.mxu0 0
        %2331 = vmatprep.subr.bf16.mxu0 0
        %2332 = vmatpush1.bf16.msra.mxu0 0
        %2333 = vmatprep.subr.bf16.mxu0 0
        %2334 = vmatpush1.bf16.msra.mxu0 0
        %2335 = vmatprep.subr.bf16.mxu0 0
        %2336 = vmatpush1.bf16.msra.mxu0 0
        %2337 = vmatprep.mubr.bf16.mxu0 0
        %2338 = vmatmul.mubr.bf16.gmra.mrb[0].mxu0 %v2304
        %v2339 = vpop.f32.mrb[0].mxu0
        %v2340 = vadd.f32 0.0, %v2339
        %v2341 = vpop.f32.mrb[0].mxu0
        %v2342 = vadd.f32 0.0, %v2341
        %v2343 = vpop.f32.mrb[0].mxu0
        %v2344 = vadd.f32 0.0, %v2343
        %v2345 = vpop.f32.mrb[0].mxu0
        %v2346 = vadd.f32 0.0, %v2345
        %2347 = vdwg.mxu0
        %s2348 = smul.u32 30, 2
        %s2349 = smul.addr %s2348, 8
        %s2350 = scalar_lea.vmem [#allocation4], %s2349
        %v2351 = vld [vmem:[%s2350] sm:$0xff]
        %v2352 = vld [vmem:[%s2350 + $0x8] sm:$0xff]
        %v2353 = vld [vmem:[%s2350 + $0x10] sm:$0xff]
        %v2354 = vld [vmem:[%s2350 + $0x18] sm:$0xff]
        %v2355 = vadd.f32 %v2351, %v2340
        %v2356 = vadd.f32 %v2352, %v2342
        %v2357 = vadd.f32 %v2353, %v2344
        %v2358 = vadd.f32 %v2354, %v2346
        %v2359 = vmul.f32 %v2355, 0.5
        %v2360 = vmul.f32 %v2357, 0.5
        %v2361 = vtanh.pop %v2359
        %v2362 = vtanh.pop %v2360
        %v2363 = vmul.f32 %v2361, 0.5
        %v2364 = vmul.f32 %v2362, 0.5
        %v2365 = vadd.f32 %v2363, 0.5
        %v2366 = vadd.f32 %v2364, 0.5
        %v2367 = vsub.f32 %v2293, %v2356
        %v2368 = vsub.f32 %v2294, %v2358
        %v2369 = vmul.f32 %v2365, %v2367
        %v2370 = vmul.f32 %v2366, %v2368
        %v2371 = vadd.f32 %v2356, %v2369
        %v2372 = vadd.f32 %v2358, %v2370
        %vm2373 = vcmp.gt.f32.partialorder %v2371, 1.0
        %vm2374 = vcmp.gt.f32.partialorder %v2372, 1.0
        %v2375 = vsel %vm2373, 1, 0
        %v2376 = vsel %vm2374, 1, 0
        %v2377 = vcvt.s32.f32 %v2375
        %v2378 = vcvt.s32.f32 %v2376
        %s2379 = scalar_lea.vmem %s431, 240 [#allocation7]
        %2380 = vst [vmem:[%s2379] sm:$0xff] %v2377
        %2381 = vst [vmem:[%s2379 + $0x8] sm:$0xff] %v2378
        %v2382 = vpack.c.bf16 %v2378, %v2377
        %v2384 = vunpack.c.l.b16 %v2382
        %v2385 = vunpack.c.h.b16 %v2382
        %v2386 = vpack.c.b16 %v2384, %v2384
        %v2387 = vpack.c.b16 %v2385, %v2385
        %2390 = vst [vmem:[%s466] sm:$0xf] %v2386
        %2391 = vst [vmem:[%s466 + $0x4] sm:$0xf] %v2387
        %2392 = vst [vmem:[%s472] sm:$0xff] %v2371
        %2393 = vst [vmem:[%s472 + $0x8] sm:$0xff] %v2372
        %s2394 = sand.u32 %s121, 1
        %s2395 = sand.u32 %s121, 1
        %s2396 = smul.addr %s2395, 256
        %s2397 = scalar_lea.vmem [#allocation7], %s2396
        %s2398 = smul.u32 2, %s23
        %p2399 = scmp.lt.s32.totalorder %s2398, 3
        %s2400 = scalar_select %p2399, %s2398, 3
        %s2401 = smul.addr %s2400, 4
        %s2402 = scalar_lea.vmem %s6, %s2401
        %s2403 = smul.u32 2, %s23
        %p2404 = scmp.lt.s32.totalorder %s2403, 3
        %s2405 = scalar_select %p2404, %s2403, 3
        %s2406 = smul.addr %s2405, 8
        %s2407 = scalar_lea.vmem %s7, %s2406
        // Predicated region
        $region149: #{gsu_layer.1} parent=65 // pred_check
          %p2408 = pneg %p131
        $region150: #{gsu_layer.1} parent=65 // pred_check_branch
          %2410 = sbr.rel (%p2408) target = $region152
        $region151: #{gsu_layer.1} parent=65 // pred_region
          %s2411 = smul.u32 16, %s24
          %s2412 = smul.u32 2, %s23
          %s2413 = smul.addr %s2411, 4
          %s2414 = sadd.s32 %s2412, %s2413
          %s2415 = smul.addr %s2414, 8
          %s2416 = scalar_lea.vmem %s5, %s2415
          // Predicated region
          $region153: #{gsu_layer.1} parent=151 // pred_check
            _
          $region154: #{gsu_layer.1} parent=151 // pred_check_branch
            %2418 = sbr.rel (0) target = $region156
          $region155: #{gsu_layer.1} parent=151 // pred_region
            // Predicated region
            $region157: #{gsu_layer.1} parent=155 // pred_check
              _
            $region158: #{gsu_layer.1} parent=155 // pred_check_branch
              %2420 = sbr.rel (0) target = $region160
            $region159: #{gsu_layer.1} parent=155 // pred_region
              // Predicated region
              $region172: #{gsu_layer.1} parent=159 // pred_check
                _
              $region173: #{gsu_layer.1} parent=159 // pred_check_branch
                %2497 = sbr.rel (0) target = $region175
              $region174: #{gsu_layer.1} parent=159 // pred_region
                loop: start=0, step=1, limit=1
                $region176: #{gsu_layer.1} parent=174 // loop_pre_header
                  _
                $region177: #{gsu_layer.1} parent=174 // loop_header
                  %s2499 = sphi 0, %s2503
                  %p2500 = scmp.ge.s32.totalorder %s2499, 1
                  %s2504 = sphi %s2397, %s2397
                  %s2505 = sphi %s2416, %s2416
                $region178: #{gsu_layer.1} parent=174 // loop_header_branch
                  %2502 = sbr.rel (%p2500) target = $region182
                $region179: #{gsu_layer.1} parent=174 // loop_body
                  %v2506 = vld [vmem:[%s2504] sm:$0xff]
                  %2507 = vst [vmem:[%s2505] sm:$0xff] %v2506
                  %v2508 = vld [vmem:[%s2504 + $0x8] sm:$0xff]
                  %2509 = vst [vmem:[%s2505 + $0x8] sm:$0xff] %v2508
                  %v2510 = vld [vmem:[%s2504 + $0x10] sm:$0xff]
                  %2511 = vst [vmem:[%s2505 + $0x20] sm:$0xff] %v2510
                  %v2512 = vld [vmem:[%s2504 + $0x18] sm:$0xff]
                  %2513 = vst [vmem:[%s2505 + $0x28] sm:$0xff] %v2512
                  %v2514 = vld [vmem:[%s2504 + $0x20] sm:$0xff]
                  %2515 = vst [vmem:[%s2505 + $0x40] sm:$0xff] %v2514
                  %v2516 = vld [vmem:[%s2504 + $0x28] sm:$0xff]
                  %2517 = vst [vmem:[%s2505 + $0x48] sm:$0xff] %v2516
                  %v2518 = vld [vmem:[%s2504 + $0x30] sm:$0xff]
                  %2519 = vst [vmem:[%s2505 + $0x60] sm:$0xff] %v2518
                  %v2520 = vld [vmem:[%s2504 + $0x38] sm:$0xff]
                  %2521 = vst [vmem:[%s2505 + $0x68] sm:$0xff] %v2520
                  %v2522 = vld [vmem:[%s2504 + $0x40] sm:$0xff]
                  %2523 = vst [vmem:[%s2505 + $0x80] sm:$0xff] %v2522
                  %v2524 = vld [vmem:[%s2504 + $0x48] sm:$0xff]
                  %2525 = vst [vmem:[%s2505 + $0x88] sm:$0xff] %v2524
                  %v2526 = vld [vmem:[%s2504 + $0x50] sm:$0xff]
                  %2527 = vst [vmem:[%s2505 + $0xa0] sm:$0xff] %v2526
                  %v2528 = vld [vmem:[%s2504 + $0x58] sm:$0xff]
                  %2529 = vst [vmem:[%s2505 + $0xa8] sm:$0xff] %v2528
                  %v2530 = vld [vmem:[%s2504 + $0x60] sm:$0xff]
                  %2531 = vst [vmem:[%s2505 + $0xc0] sm:$0xff] %v2530
                  %v2532 = vld [vmem:[%s2504 + $0x68] sm:$0xff]
                  %2533 = vst [vmem:[%s2505 + $0xc8] sm:$0xff] %v2532
                  %v2534 = vld [vmem:[%s2504 + $0x70] sm:$0xff]
                  %2535 = vst [vmem:[%s2505 + $0xe0] sm:$0xff] %v2534
                  %v2536 = vld [vmem:[%s2504 + $0x78] sm:$0xff]
                  %2537 = vst [vmem:[%s2505 + $0xe8] sm:$0xff] %v2536
                  %v2538 = vld [vmem:[%s2504 + $0x80] sm:$0xff]
                  %2539 = vst [vmem:[%s2505 + $0x100] sm:$0xff] %v2538
                  %v2540 = vld [vmem:[%s2504 + $0x88] sm:$0xff]
                  %2541 = vst [vmem:[%s2505 + $0x108] sm:$0xff] %v2540
                  %v2542 = vld [vmem:[%s2504 + $0x90] sm:$0xff]
                  %2543 = vst [vmem:[%s2505 + $0x120] sm:$0xff] %v2542
                  %v2544 = vld [vmem:[%s2504 + $0x98] sm:$0xff]
                  %2545 = vst [vmem:[%s2505 + $0x128] sm:$0xff] %v2544
                  %v2546 = vld [vmem:[%s2504 + $0xa0] sm:$0xff]
                  %2547 = vst [vmem:[%s2505 + $0x140] sm:$0xff] %v2546
                  %v2548 = vld [vmem:[%s2504 + $0xa8] sm:$0xff]
                  %2549 = vst [vmem:[%s2505 + $0x148] sm:$0xff] %v2548
                  %v2550 = vld [vmem:[%s2504 + $0xb0] sm:$0xff]
                  %2551 = vst [vmem:[%s2505 + $0x160] sm:$0xff] %v2550
                  %v2552 = vld [vmem:[%s2504 + $0xb8] sm:$0xff]
                  %2553 = vst [vmem:[%s2505 + $0x168] sm:$0xff] %v2552
                  %v2554 = vld [vmem:[%s2504 + $0xc0] sm:$0xff]
                  %2555 = vst [vmem:[%s2505 + $0x180] sm:$0xff] %v2554
                  %v2556 = vld [vmem:[%s2504 + $0xc8] sm:$0xff]
                  %2557 = vst [vmem:[%s2505 + $0x188] sm:$0xff] %v2556
                  %v2558 = vld [vmem:[%s2504 + $0xd0] sm:$0xff]
                  %2559 = vst [vmem:[%s2505 + $0x1a0] sm:$0xff] %v2558
                  %v2560 = vld [vmem:[%s2504 + $0xd8] sm:$0xff]
                  %2561 = vst [vmem:[%s2505 + $0x1a8] sm:$0xff] %v2560
                  %v2562 = vld [vmem:[%s2504 + $0xe0] sm:$0xff]
                  %2563 = vst [vmem:[%s2505 + $0x1c0] sm:$0xff] %v2562
                  %v2564 = vld [vmem:[%s2504 + $0xe8] sm:$0xff]
                  %2565 = vst [vmem:[%s2505 + $0x1c8] sm:$0xff] %v2564
                  %v2566 = vld [vmem:[%s2504 + $0xf0] sm:$0xff]
                  %2567 = vst [vmem:[%s2505 + $0x1e0] sm:$0xff] %v2566
                  %v2568 = vld [vmem:[%s2504 + $0xf8] sm:$0xff]
                  %2569 = vst [vmem:[%s2505 + $0x1e8] sm:$0xff] %v2568
                $region180: #{gsu_layer.1} parent=174 // loop_footer
                  %s2503 = sadd.s32 1, %s2499
                $region181: #{gsu_layer.1} parent=174 // loop_footer_branch
                  %2498 = sbr.rel target = $region177
                $region182: #{gsu_layer.1} parent=174 // loop_exit
                  _
              $region175: #{gsu_layer.1} parent=159 // pred_fallthru
                _
              // Predicated region
              $region183: #{gsu_layer.1} parent=159 // pred_check
                _
              $region184: #{gsu_layer.1} parent=159 // pred_check_branch
                %2571 = sbr.rel target = $region186
              $region185: #{gsu_layer.1} parent=159 // pred_region
                _
              $region186: #{gsu_layer.1} parent=159 // pred_fallthru
                _
            $region160: #{gsu_layer.1} parent=155 // pred_fallthru
              _
            // Predicated region
            $region161: #{gsu_layer.1} parent=155 // pred_check
              _
            $region162: #{gsu_layer.1} parent=155 // pred_check_branch
              %2422 = sbr.rel target = $region164
            $region163: #{gsu_layer.1} parent=155 // pred_region
              loop: start=0, step=1, limit=1
              $region165: #{gsu_layer.1} parent=163 // loop_pre_header
                _
              $region166: #{gsu_layer.1} parent=163 // loop_header
                %s2425 = sphi 0, %s2429
                %p2426 = scmp.ge.s32.totalorder %s2425, 1
                %s2430 = sphi %s2397, %s2397
                %s2431 = sphi %s2416, %s2416
              $region167: #{gsu_layer.1} parent=163 // loop_header_branch
                %2428 = sbr.rel (%p2426) target = $region171
              $region168: #{gsu_layer.1} parent=163 // loop_body
                %v2432 = vld [vmem:[%s2430] sm:$0xff]
                %2433 = vst [vmem:[%s2431] sm:$0xff] %v2432
                %v2434 = vld [vmem:[%s2430 + $0x8] sm:$0xff]
                %2435 = vst [vmem:[%s2431 + $0x8] sm:$0xff] %v2434
                %v2436 = vld [vmem:[%s2430 + $0x10] sm:$0xff]
                %2437 = vst [vmem:[%s2431 + $0x20] sm:$0xff] %v2436
                %v2438 = vld [vmem:[%s2430 + $0x18] sm:$0xff]
                %2439 = vst [vmem:[%s2431 + $0x28] sm:$0xff] %v2438
                %v2440 = vld [vmem:[%s2430 + $0x20] sm:$0xff]
                %2441 = vst [vmem:[%s2431 + $0x40] sm:$0xff] %v2440
                %v2442 = vld [vmem:[%s2430 + $0x28] sm:$0xff]
                %2443 = vst [vmem:[%s2431 + $0x48] sm:$0xff] %v2442
                %v2444 = vld [vmem:[%s2430 + $0x30] sm:$0xff]
                %2445 = vst [vmem:[%s2431 + $0x60] sm:$0xff] %v2444
                %v2446 = vld [vmem:[%s2430 + $0x38] sm:$0xff]
                %2447 = vst [vmem:[%s2431 + $0x68] sm:$0xff] %v2446
                %v2448 = vld [vmem:[%s2430 + $0x40] sm:$0xff]
                %2449 = vst [vmem:[%s2431 + $0x80] sm:$0xff] %v2448
                %v2450 = vld [vmem:[%s2430 + $0x48] sm:$0xff]
                %2451 = vst [vmem:[%s2431 + $0x88] sm:$0xff] %v2450
                %v2452 = vld [vmem:[%s2430 + $0x50] sm:$0xff]
                %2453 = vst [vmem:[%s2431 + $0xa0] sm:$0xff] %v2452
                %v2454 = vld [vmem:[%s2430 + $0x58] sm:$0xff]
                %2455 = vst [vmem:[%s2431 + $0xa8] sm:$0xff] %v2454
                %v2456 = vld [vmem:[%s2430 + $0x60] sm:$0xff]
                %2457 = vst [vmem:[%s2431 + $0xc0] sm:$0xff] %v2456
                %v2458 = vld [vmem:[%s2430 + $0x68] sm:$0xff]
                %2459 = vst [vmem:[%s2431 + $0xc8] sm:$0xff] %v2458
                %v2460 = vld [vmem:[%s2430 + $0x70] sm:$0xff]
                %2461 = vst [vmem:[%s2431 + $0xe0] sm:$0xff] %v2460
                %v2462 = vld [vmem:[%s2430 + $0x78] sm:$0xff]
                %2463 = vst [vmem:[%s2431 + $0xe8] sm:$0xff] %v2462
                %v2464 = vld [vmem:[%s2430 + $0x80] sm:$0xff]
                %2465 = vst [vmem:[%s2431 + $0x100] sm:$0xff] %v2464
                %v2466 = vld [vmem:[%s2430 + $0x88] sm:$0xff]
                %2467 = vst [vmem:[%s2431 + $0x108] sm:$0xff] %v2466
                %v2468 = vld [vmem:[%s2430 + $0x90] sm:$0xff]
                %2469 = vst [vmem:[%s2431 + $0x120] sm:$0xff] %v2468
                %v2470 = vld [vmem:[%s2430 + $0x98] sm:$0xff]
                %2471 = vst [vmem:[%s2431 + $0x128] sm:$0xff] %v2470
                %v2472 = vld [vmem:[%s2430 + $0xa0] sm:$0xff]
                %2473 = vst [vmem:[%s2431 + $0x140] sm:$0xff] %v2472
                %v2474 = vld [vmem:[%s2430 + $0xa8] sm:$0xff]
                %2475 = vst [vmem:[%s2431 + $0x148] sm:$0xff] %v2474
                %v2476 = vld [vmem:[%s2430 + $0xb0] sm:$0xff]
                %2477 = vst [vmem:[%s2431 + $0x160] sm:$0xff] %v2476
                %v2478 = vld [vmem:[%s2430 + $0xb8] sm:$0xff]
                %2479 = vst [vmem:[%s2431 + $0x168] sm:$0xff] %v2478
                %v2480 = vld [vmem:[%s2430 + $0xc0] sm:$0xff]
                %2481 = vst [vmem:[%s2431 + $0x180] sm:$0xff] %v2480
                %v2482 = vld [vmem:[%s2430 + $0xc8] sm:$0xff]
                %2483 = vst [vmem:[%s2431 + $0x188] sm:$0xff] %v2482
                %v2484 = vld [vmem:[%s2430 + $0xd0] sm:$0xff]
                %2485 = vst [vmem:[%s2431 + $0x1a0] sm:$0xff] %v2484
                %v2486 = vld [vmem:[%s2430 + $0xd8] sm:$0xff]
                %2487 = vst [vmem:[%s2431 + $0x1a8] sm:$0xff] %v2486
                %v2488 = vld [vmem:[%s2430 + $0xe0] sm:$0xff]
                %2489 = vst [vmem:[%s2431 + $0x1c0] sm:$0xff] %v2488
                %v2490 = vld [vmem:[%s2430 + $0xe8] sm:$0xff]
                %2491 = vst [vmem:[%s2431 + $0x1c8] sm:$0xff] %v2490
                %v2492 = vld [vmem:[%s2430 + $0xf0] sm:$0xff]
                %2493 = vst [vmem:[%s2431 + $0x1e0] sm:$0xff] %v2492
                %v2494 = vld [vmem:[%s2430 + $0xf8] sm:$0xff]
                %2495 = vst [vmem:[%s2431 + $0x1e8] sm:$0xff] %v2494
              $region169: #{gsu_layer.1} parent=163 // loop_footer
                %s2429 = sadd.s32 1, %s2425
              $region170: #{gsu_layer.1} parent=163 // loop_footer_branch
                %2424 = sbr.rel target = $region166
              $region171: #{gsu_layer.1} parent=163 // loop_exit
                _
            $region164: #{gsu_layer.1} parent=155 // pred_fallthru
              _
          $region156: #{gsu_layer.1} parent=151 // pred_fallthru
            _
          %2572 = vnop
        $region152: #{gsu_layer.1} parent=65 // pred_fallthru
          _
        // Predicated region
        $region187: #{gsu_layer.1} parent=65 // pred_check
          %p2573 = pneg %p157
        $region188: #{gsu_layer.1} parent=65 // pred_check_branch
          %2575 = sbr.rel (%p2573) target = $region190
        $region189: #{gsu_layer.1} parent=65 // pred_region
          %s2576 = smul.u32 2, %s23
        $region190: #{gsu_layer.1} parent=65 // pred_fallthru
          _
        // Predicated region
        $region191: #{gsu_layer.1} parent=65 // pred_check
          %p2577 = pneg %p183
        $region192: #{gsu_layer.1} parent=65 // pred_check_branch
          %2579 = sbr.rel (%p2577) target = $region194
        $region193: #{gsu_layer.1} parent=65 // pred_region
          %s2580 = smul.u32 2, %s23
        $region194: #{gsu_layer.1} parent=65 // pred_fallthru
          _
      $region66: #{gsu_layer.1} parent=5 // pred_fallthru
        _
      %p2581 = scmp.le.s32.totalorder 2, %s14
      // Predicated region
      $region195: #{gsu_layer.1} parent=5 // pred_check
        %p2582 = pneg %p2581
      $region196: #{gsu_layer.1} parent=5 // pred_check_branch
        %2584 = sbr.rel (%p2582) target = $region198
      $region197: #{gsu_layer.1} parent=5 // pred_region
        %s2585 = ssub.s32 %s14, 2
        // Predicated region
        $region199: #{gsu_layer.1} parent=197 // pred_check
          %p2586 = pneg %p137
        $region200: #{gsu_layer.1} parent=197 // pred_check_branch
          %2588 = sbr.rel (%p2586) target = $region202
        $region201: #{gsu_layer.1} parent=197 // pred_region
          %s2589 = sand.u32 %s122, 1
          %s2590 = sand.u32 %s122, 1
          %s2591 = smul.addr %s2590, 256
          %s2592 = scalar_lea.vmem [#allocation7], %s2591
        $region202: #{gsu_layer.1} parent=197 // pred_fallthru
          _
        // Predicated region
        $region203: #{gsu_layer.1} parent=197 // pred_check
          %p2593 = pneg %p163
        $region204: #{gsu_layer.1} parent=197 // pred_check_branch
          %2595 = sbr.rel (%p2593) target = $region206
        $region205: #{gsu_layer.1} parent=197 // pred_region
          %s2596 = smul.u32 2, %s25
          %p2597 = scmp.lt.s32.totalorder %s2596, 3
          %s2598 = scalar_select %p2597, %s2596, 3
          %s2599 = smul.addr %s2598, 4
          %s2600 = scalar_lea.vmem %s6, %s2599
        $region206: #{gsu_layer.1} parent=197 // pred_fallthru
          _
        // Predicated region
        $region207: #{gsu_layer.1} parent=197 // pred_check
          %p2601 = pneg %p189
        $region208: #{gsu_layer.1} parent=197 // pred_check_branch
          %2603 = sbr.rel (%p2601) target = $region210
        $region209: #{gsu_layer.1} parent=197 // pred_region
          %s2604 = smul.u32 2, %s25
          %p2605 = scmp.lt.s32.totalorder %s2604, 3
          %s2606 = scalar_select %p2605, %s2604, 3
          %s2607 = smul.addr %s2606, 8
          %s2608 = scalar_lea.vmem %s7, %s2607
        $region210: #{gsu_layer.1} parent=197 // pred_fallthru
          _
      $region198: #{gsu_layer.1} parent=5 // pred_fallthru
        _
    $region6: #{gsu_layer.1} parent=1 // loop_footer
      %s18 = sadd.s32 1, %s14
    $region7: #{gsu_layer.1} parent=1 // loop_footer_branch
      %13 = sbr.rel target = $region3
    $region8: #{gsu_layer.1} parent=1 // loop_exit
      _
  %2609 = vsyncmov [#allocation5]
  %s2610 = vpop.sfrf %2609
  %p2611 = scmp.eq.s32.totalorder %s2610, 0
  %p2612 = pneg %p2611
  %2614 = shalt.err (%p2612)
  %s2615 = scalar_lea.sflag [#allocation5], 1
  %2616 = vsyncmov %s2615
  %s2617 = vpop.sfrf %2616
  %p2618 = scmp.eq.s32.totalorder %s2617, 0
  %p2619 = pneg %p2618
  %2621 = shalt.err (%p2619)

</llo_original>
